<compile_context>
chip_gen: v7x
topology: tpu7x:2x2x1
jax: 0.10.0
libtpu: 0.0.40
codegen_flags: <defaults>
</compile_context>

<pallas_src>
import jax
import jax.numpy as jnp
from jax.experimental import pallas as pl
from jax.experimental.pallas import tpu as pltpu


def add_relu_matmul_kernel(x1_ref, x2_ref, w_ref, o_ref):
    # x1/x2: (C_in, M) f32 resident activations; w: (tn, C_in) bf16 weight tile.
    # One full-K matmul per grid step -> write the (tn, M) output tile directly
    # (no accumulator scratch, no k-loop init/finalize branches).
    a = jnp.maximum(x1_ref[...] + x2_ref[...], 0.0)      # fused add + ReLU (f32)
    a_bf16 = a.astype(jnp.bfloat16)                       # bf16 MXU operand
    o_ref[...] = jnp.dot(
        w_ref[...], a_bf16, preferred_element_type=jnp.float32
    ).astype(o_ref.dtype)


def fused_add_relu_conv1x1(x318, x320, weight, *, tn=512):
    """x318, x320: (N, C_in, H, W) float32; weight: (C_out, C_in, 1, 1) float32."""
    N, C_in, H, W = x318.shape
    C_out = weight.shape[0]
    M = N * H * W
    tn = min(tn, C_out)
    assert C_out % tn == 0, "C_out must be divisible by the output-channel tile"

    # (N, C, H, W) -> (C, N*H*W). For N == 1 this is a pure relabeling
    # (no HBM data movement).
    x1 = jnp.transpose(x318, (1, 0, 2, 3)).reshape(C_in, M)
    x2 = jnp.transpose(x320, (1, 0, 2, 3)).reshape(C_in, M)

    # 1x1 conv == matmul with weight (C_out, C_in).  bf16 cast = one-time
    # weight prep; the matmul still accumulates in f32.
    w = weight.reshape(C_out, C_in).astype(jnp.bfloat16)

    grid = (C_out // tn,)  # 1-D grid over C_out tiles (reduction collapsed)

    def make_call(dim_sem):
        return pl.pallas_call(
            add_relu_matmul_kernel,
            out_shape=jax.ShapeDtypeStruct((C_out, M), jnp.float32),
            grid_spec=pltpu.PrefetchScalarGridSpec(
                num_scalar_prefetch=0,
                grid=grid,
                in_specs=[
                    # Activations: constant block index -> DMAed once, resident.
                    pl.BlockSpec((C_in, M), lambda j: (0, 0)),
                    pl.BlockSpec((C_in, M), lambda j: (0, 0)),
                    # Weight: full-K (C_in) bf16 tiles streamed over C_out.
                    pl.BlockSpec((tn, C_in), lambda j: (j, 0)),
                ],
                out_specs=pl.BlockSpec((tn, M), lambda j: (j, 0)),
            ),
            compiler_params=pltpu.CompilerParams(
                dimension_semantics=(dim_sem,),
                vmem_limit_bytes=32 * 1024 * 1024,
            ),
        )

    # Prefer CORE_PARALLEL so the C_out tiles (and the dominant weight HBM
    # stream) actually split across TensorCores on multi-core chips (v7x).
    # "parallel" is the safe fallback on single-core chips / older versions.
    candidates = []
    core_parallel = getattr(pltpu, "CORE_PARALLEL", None)
    if core_parallel is not None:
        candidates.append(core_parallel)
    candidates.append("parallel")

    out = None
    last_err = None
    for sem in candidates:
        try:
            out = make_call(sem)(x1, x2, w)
            break
        except Exception as e:  # lowering/compile fallback only
            last_err = e
    if out is None:
        raise last_err

    # (C_out, N*H*W) -> (N, C_out, H, W); again a relabeling for N == 1.
    return jnp.transpose(out.reshape(C_out, N, H, W), (1, 0, 2, 3))


if __name__ == "__main__":
    # Shapes implied by the module: inputs (1, 2048, 7, 7), conv 2048 -> 2048, 1x1.
    N, C, H, W = 1, 2048, 7, 7

    key = jax.random.PRNGKey(0)
    k1, k2, k3 = jax.random.split(key, 3)
    x318 = jax.random.normal(k1, (N, C, H, W), dtype=jnp.float32)
    x320 = jax.random.normal(k2, (N, C, H, W), dtype=jnp.float32)
    # Deterministic weight init (kaiming-uniform-like scale for a 1x1 conv).
    bound = 1.0 / (C ** 0.5)
    weight = jax.random.uniform(k3, (C, C, 1, 1), dtype=jnp.float32,
                                minval=-bound, maxval=bound)

    out = fused_add_relu_conv1x1(x318, x320, weight)
    out = jax.block_until_ready(out)

    # Deliberate validation of the bf16-operand / f32-accumulate kernel against
    # the f32 reference (expected max |err| ~5e-3 at these magnitudes).
    a = jnp.maximum(x318 + x320, 0.0)
    ref = jnp.einsum("nchw,oc->nohw", a, weight.reshape(C, C))
    assert out.shape == (N, C, H, W)
    assert out.dtype == jnp.float32
    max_err = jnp.max(jnp.abs(out - ref))
    assert jnp.allclose(out, ref, atol=2e-2, rtol=2e-2), f"max abs err {max_err}"

    print("KERNEL_OK")
</pallas_src>

<mosaic_0001>
module attributes {stable_mosaic.version = 11 : i64} {
  func.func @add_relu_matmul_kernel(%arg0: i32, %arg1: memref<2048x49xf32, #tpu.memory_space<vmem>>, %arg2: memref<2048x49xf32, #tpu.memory_space<vmem>>, %arg3: memref<512x2048xbf16, #tpu.memory_space<vmem>>, %arg4: memref<512x49xf32, #tpu.memory_space<vmem>>) attributes {dimension_semantics = [#tpu.dimension_semantics<core_parallel>], iteration_bounds = array<i64: 4>, scalar_prefetch = 0 : i64, scratch_operands = 0 : i64, tpu.core_type = #tpu.core_type<tc>, window_params = [{pipeline_mode = #tpu.pipeline_mode<synchronous>, transform_indices = @transform_0, window_bounds = array<i64: 2048, 49>}, {pipeline_mode = #tpu.pipeline_mode<synchronous>, transform_indices = @transform_1, window_bounds = array<i64: 2048, 49>}, {transform_indices = @transform_2, window_bounds = array<i64: 512, 2048>}, {transform_indices = @transform_3, window_bounds = array<i64: 512, 49>}]} {
    %c0 = arith.constant 0 : index
    %c0_0 = arith.constant 0 : index
    %0 = vector.load %arg1[%c0, %c0_0] : memref<2048x49xf32, #tpu.memory_space<vmem>>, vector<2048x49xf32>
    %c0_1 = arith.constant 0 : index
    %c0_2 = arith.constant 0 : index
    %1 = vector.load %arg2[%c0_1, %c0_2] : memref<2048x49xf32, #tpu.memory_space<vmem>>, vector<2048x49xf32>
    %2 = arith.addf %0, %1 : vector<2048x49xf32>
    %cst = arith.constant 0.000000e+00 : f32
    %3 = vector.broadcast %cst : f32 to vector<2048x49xf32>
    %4 = arith.maximumf %2, %3 : vector<2048x49xf32>
    %5 = arith.truncf %4 : vector<2048x49xf32> to vector<2048x49xbf16>
    %c0_3 = arith.constant 0 : index
    %c0_4 = arith.constant 0 : index
    %6 = vector.load %arg3[%c0_3, %c0_4] : memref<512x2048xbf16, #tpu.memory_space<vmem>>, vector<512x2048xbf16>
    %cst_5 = arith.constant dense<0.000000e+00> : vector<512x49xf32>
    %7 = tpu.matmul %6, %5, %cst_5 {dimension_numbers = #tpu.dot_dimension_numbers<[1], [0], [0], [1], [0, 0, 1, 1], [], []>} : vector<512x2048xbf16>, vector<2048x49xbf16>, vector<512x49xf32> -> vector<512x49xf32>
    %c0_6 = arith.constant 0 : index
    %c0_7 = arith.constant 0 : index
    %8 = vector.load %arg4[%c0_6, %c0_7] : memref<512x49xf32, #tpu.memory_space<vmem>>, vector<512x49xf32>
    tpu.vector_store %arg4[%c0_6, %c0_7], %7 {strides = array<i32>} : memref<512x49xf32, #tpu.memory_space<vmem>>, vector<512x49xf32>,
    return
  }
  func.func @transform_0(%arg0: i32) -> (i32, i32) {
    %c0_i32 = arith.constant 0 : i32
    %c0_i32_0 = arith.constant 0 : i32
    %c0_i32_1 = arith.constant 0 : i32
    return %c0_i32, %c0_i32_0 : i32, i32
  }
  func.func @transform_1(%arg0: i32) -> (i32, i32) {
    %c0_i32 = arith.constant 0 : i32
    %c0_i32_0 = arith.constant 0 : i32
    %c0_i32_1 = arith.constant 0 : i32
    return %c0_i32, %c0_i32_0 : i32, i32
  }
  func.func @transform_2(%arg0: i32) -> (i32, i32) {
    %c0_i32 = arith.constant 0 : i32
    %c0_i32_0 = arith.constant 0 : i32
    return %arg0, %c0_i32 : i32, i32
  }
  func.func @transform_3(%arg0: i32) -> (i32, i32) {
    %c0_i32 = arith.constant 0 : i32
    %c0_i32_0 = arith.constant 0 : i32
    return %arg0, %c0_i32 : i32, i32
  }
}

module attributes {stable_mosaic.version = 11 : i64} {
  func.func @add_relu_matmul_kernel(%arg0: i32, %arg1: memref<2048x49xf32, #tpu.memory_space<vmem>>, %arg2: memref<2048x49xf32, #tpu.memory_space<vmem>>, %arg3: memref<512x2048xbf16, #tpu.memory_space<vmem>>, %arg4: memref<512x49xf32, #tpu.memory_space<vmem>>) attributes {dimension_semantics = [#tpu.dimension_semantics<parallel>], iteration_bounds = array<i64: 4>, scalar_prefetch = 0 : i64, scratch_operands = 0 : i64, tpu.core_type = #tpu.core_type<tc>, window_params = [{pipeline_mode = #tpu.pipeline_mode<synchronous>, transform_indices = @transform_0, window_bounds = array<i64: 2048, 49>}, {pipeline_mode = #tpu.pipeline_mode<synchronous>, transform_indices = @transform_1, window_bounds = array<i64: 2048, 49>}, {transform_indices = @transform_2, window_bounds = array<i64: 512, 2048>}, {transform_indices = @transform_3, window_bounds = array<i64: 512, 49>}]} {
    %c0 = arith.constant 0 : index
    %c0_0 = arith.constant 0 : index
    %0 = vector.load %arg1[%c0, %c0_0] : memref<2048x49xf32, #tpu.memory_space<vmem>>, vector<2048x49xf32>
    %c0_1 = arith.constant 0 : index
    %c0_2 = arith.constant 0 : index
    %1 = vector.load %arg2[%c0_1, %c0_2] : memref<2048x49xf32, #tpu.memory_space<vmem>>, vector<2048x49xf32>
    %2 = arith.addf %0, %1 : vector<2048x49xf32>
    %cst = arith.constant 0.000000e+00 : f32
    %3 = vector.broadcast %cst : f32 to vector<2048x49xf32>
    %4 = arith.maximumf %2, %3 : vector<2048x49xf32>
    %5 = arith.truncf %4 : vector<2048x49xf32> to vector<2048x49xbf16>
    %c0_3 = arith.constant 0 : index
    %c0_4 = arith.constant 0 : index
    %6 = vector.load %arg3[%c0_3, %c0_4] : memref<512x2048xbf16, #tpu.memory_space<vmem>>, vector<512x2048xbf16>
    %cst_5 = arith.constant dense<0.000000e+00> : vector<512x49xf32>
    %7 = tpu.matmul %6, %5, %cst_5 {dimension_numbers = #tpu.dot_dimension_numbers<[1], [0], [0], [1], [0, 0, 1, 1], [], []>} : vector<512x2048xbf16>, vector<2048x49xbf16>, vector<512x49xf32> -> vector<512x49xf32>
    %c0_6 = arith.constant 0 : index
    %c0_7 = arith.constant 0 : index
    %8 = vector.load %arg4[%c0_6, %c0_7] : memref<512x49xf32, #tpu.memory_space<vmem>>, vector<512x49xf32>
    tpu.vector_store %arg4[%c0_6, %c0_7], %7 {strides = array<i32>} : memref<512x49xf32, #tpu.memory_space<vmem>>, vector<512x49xf32>,
    return
  }
  func.func @transform_0(%arg0: i32) -> (i32, i32) {
    %c0_i32 = arith.constant 0 : i32
    %c0_i32_0 = arith.constant 0 : i32
    %c0_i32_1 = arith.constant 0 : i32
    return %c0_i32, %c0_i32_0 : i32, i32
  }
  func.func @transform_1(%arg0: i32) -> (i32, i32) {
    %c0_i32 = arith.constant 0 : i32
    %c0_i32_0 = arith.constant 0 : i32
    %c0_i32_1 = arith.constant 0 : i32
    return %c0_i32, %c0_i32_0 : i32, i32
  }
  func.func @transform_2(%arg0: i32) -> (i32, i32) {
    %c0_i32 = arith.constant 0 : i32
    %c0_i32_0 = arith.constant 0 : i32
    return %arg0, %c0_i32 : i32, i32
  }
  func.func @transform_3(%arg0: i32) -> (i32, i32) {
    %c0_i32 = arith.constant 0 : i32
    %c0_i32_0 = arith.constant 0 : i32
    return %arg0, %c0_i32 : i32, i32
  }
}

</mosaic_0001>

<llo_original>
// kernel: tpu_custom_call.1
$region0: #{tpu_custom_call.1}
  #allocation0 [shape = 'u32[]', space=smem, size = 0x4, offset = 0x4, fixed_abs, tag = 'smem constant byte address 0x4 - core index']
  #allocation1 [shape = 'u32[144,128]{1,0:T(1,128)}', space=vmem, size = 0x12000, scoped, tag = 'internal scratch']
  %s0 = inlined_call_operand.vmem [shape: f32[2048,49], index: 0, kind: input, shape index: {}]
  %s1 = inlined_call_operand.vmem [shape: f32[2048,49], index: 1, kind: input, shape index: {}]
  %s2 = inlined_call_operand.hbm [shape: bf16[2048,2048], index: 2, kind: input, shape index: {}]
  %s3 = inlined_call_operand.vmem [shape: f32[2048,49], index: 3, kind: output, shape index: {}]
  %s4 = sld [smem:[#allocation0]]
  $region49: #{tpu_custom_call.1} parent=0
    _
  %s6 = ssub.s32 1, %s4
  %s7 = scalar_select 0, %s6, %s4
  $region1: #{tpu_custom_call.1} parent=0
    #allocation2 [shape = 'u8[4194304]{0}', space=vmem, size = 0x400000, scoped, tag = 'input window, operand 2']
    #allocation3 [shape = 's32[2]{0}', space=sflag, size = 0x8, scoped, tag = 'scoped memory for tpu_custom_call.1']
    %8 = vsyncpa [#allocation3], 0
    %s9 = scalar_lea.sflag [#allocation3], 1
    %10 = vsyncpa %s9, 0
    loop: start=0, step=1, limit=6
    $region2: #{tpu_custom_call.1} parent=1 // loop_pre_header
      _
    $region3: #{tpu_custom_call.1} parent=1 // loop_header
      %s12 = sphi 0, %s16
      %p13 = scmp.ge.s32.totalorder %s12, 6
      %s20 = sphi 0, %s20
      %s22 = sphi 0, %s20
      %s23 = sphi 0, %s22
      %s37 = sphi 0, %s23
      %s41 = sphi 0, %s41
      %s43 = sphi 0, %s41
      %s44 = sphi 0, %s43
      %s58 = sphi 0, %s44
      %s64 = sphi 0, %s66
      %s67 = sphi 0, %s64
      %s68 = sphi 0, %s67
      %s84 = sphi 0, %s68
      %s90 = sphi 0, %s92
      %s93 = sphi 0, %s90
      %s94 = sphi 0, %s93
      %s110 = sphi 0, %s94
    $region4: #{tpu_custom_call.1} parent=1 // loop_header_branch
      %15 = sbr.rel (%p13) target = $region8
    $region5: #{tpu_custom_call.1} parent=1 // loop_body
      %s17 = ssub.s32 %s12, 1
      %s18 = ssub.s32 %s12, 2
      %s19 = sadd.s32 %s12, 1
      %s21 = sadd.s32 %s20, 1
      %p24 = scmp.eq.s32.totalorder %s12, 3
      %p25 = scmp.ne.s32.totalorder %s20, %s22
      %p26 = scmp.eq.s32.totalorder %s12, 0
      %p27 = por %p25, %p26
      %p28 = scmp.ne.s32.totalorder %s20, %s22
      %p29 = scmp.eq.s32.totalorder %s17, 3
      %p30 = por %p28, %p29
      %p31 = scmp.ne.s32.totalorder %s22, %s23
      %p32 = scmp.eq.s32.totalorder %s17, 0
      %p33 = por %p31, %p32
      %p34 = scmp.ne.s32.totalorder %s22, %s23
      %p35 = scmp.eq.s32.totalorder %s18, 3
      %p36 = por %p34, %p35
      %p38 = scmp.ne.s32.totalorder %s23, %s37
      %p39 = scmp.eq.s32.totalorder %s18, 0
      %p40 = por %p38, %p39
      %s42 = sadd.s32 %s41, 1
      %p45 = scmp.eq.s32.totalorder %s12, 3
      %p46 = scmp.ne.s32.totalorder %s41, %s43
      %p47 = scmp.eq.s32.totalorder %s12, 0
      %p48 = por %p46, %p47
      %p49 = scmp.ne.s32.totalorder %s41, %s43
      %p50 = scmp.eq.s32.totalorder %s17, 3
      %p51 = por %p49, %p50
      %p52 = scmp.ne.s32.totalorder %s43, %s44
      %p53 = scmp.eq.s32.totalorder %s17, 0
      %p54 = por %p52, %p53
      %p55 = scmp.ne.s32.totalorder %s43, %s44
      %p56 = scmp.eq.s32.totalorder %s18, 3
      %p57 = por %p55, %p56
      %p59 = scmp.ne.s32.totalorder %s44, %s58
      %p60 = scmp.eq.s32.totalorder %s18, 0
      %p61 = por %p59, %p60
      %s62 = ssub.s32 %s12, %s19
      %p63 = scmp.eq.s32.totalorder %s62, 0
      %s65 = sadd.s32 %s64, 1
      %s66 = scalar_select %p63, %s64, %s65
      %p69 = pneg %p63
      %p70 = scmp.eq.s32.totalorder %s12, 3
      %p71 = por %p69, %p70
      %p72 = scmp.ne.s32.totalorder %s64, %s67
      %p73 = scmp.eq.s32.totalorder %s12, 0
      %p74 = por %p72, %p73
      %p75 = scmp.ne.s32.totalorder %s64, %s67
      %p76 = scmp.eq.s32.totalorder %s17, 3
      %p77 = por %p75, %p76
      %p78 = scmp.ne.s32.totalorder %s67, %s68
      %p79 = scmp.eq.s32.totalorder %s17, 0
      %p80 = por %p78, %p79
      %p81 = scmp.ne.s32.totalorder %s67, %s68
      %p82 = scmp.eq.s32.totalorder %s18, 3
      %p83 = por %p81, %p82
      %p85 = scmp.ne.s32.totalorder %s68, %s84
      %p86 = scmp.eq.s32.totalorder %s18, 0
      %p87 = por %p85, %p86
      %s88 = ssub.s32 %s12, %s19
      %p89 = scmp.eq.s32.totalorder %s88, 0
      %s91 = sadd.s32 %s90, 1
      %s92 = scalar_select %p89, %s90, %s91
      %p95 = pneg %p89
      %p96 = scmp.eq.s32.totalorder %s12, 3
      %p97 = por %p95, %p96
      %p98 = scmp.ne.s32.totalorder %s90, %s93
      %p99 = scmp.eq.s32.totalorder %s12, 0
      %p100 = por %p98, %p99
      %p101 = scmp.ne.s32.totalorder %s90, %s93
      %p102 = scmp.eq.s32.totalorder %s17, 3
      %p103 = por %p101, %p102
      %p104 = scmp.ne.s32.totalorder %s93, %s94
      %p105 = scmp.eq.s32.totalorder %s17, 0
      %p106 = por %p104, %p105
      %p107 = scmp.ne.s32.totalorder %s93, %s94
      %p108 = scmp.eq.s32.totalorder %s18, 3
      %p109 = por %p107, %p108
      %p111 = scmp.ne.s32.totalorder %s94, %s110
      %p112 = scmp.eq.s32.totalorder %s18, 0
      %p113 = por %p111, %p112
      %p114 = scmp.le.s32.totalorder 1, %s12
      %p115 = scmp.lt.s32.totalorder %s12, 5
      %p116 = pnand %p114, %p115
      %p117 = pneg %p116
      // Predicated region
      $region9: #{tpu_custom_call.1} parent=5 // pred_check
        _
      $region10: #{tpu_custom_call.1} parent=5 // pred_check_branch
        %119 = sbr.rel (%p116) target = $region12
      $region11: #{tpu_custom_call.1} parent=5 // pred_region
        %s120 = ssub.s32 %s12, 1
        // Predicated region
        $region13: #{tpu_custom_call.1} parent=11 // pred_check
          %p121 = pneg %p33
        $region14: #{tpu_custom_call.1} parent=11 // pred_check_branch
          %123 = sbr.rel (%p121) target = $region16
        $region15: #{tpu_custom_call.1} parent=11 // pred_region
          _
        $region16: #{tpu_custom_call.1} parent=11 // pred_fallthru
          _
        // Predicated region
        $region17: #{tpu_custom_call.1} parent=11 // pred_check
          %p124 = pneg %p54
        $region18: #{tpu_custom_call.1} parent=11 // pred_check_branch
          %126 = sbr.rel (%p124) target = $region20
        $region19: #{tpu_custom_call.1} parent=11 // pred_region
          _
        $region20: #{tpu_custom_call.1} parent=11 // pred_fallthru
          _
      $region12: #{tpu_custom_call.1} parent=5 // pred_fallthru
        _
      %p127 = scmp.lt.s32.totalorder %s12, 4
      // Predicated region
      $region21: #{tpu_custom_call.1} parent=5 // pred_check
        %p128 = pneg %p127
      $region22: #{tpu_custom_call.1} parent=5 // pred_check_branch
        %130 = sbr.rel (%p128) target = $region24
      $region23: #{tpu_custom_call.1} parent=5 // pred_region
        // Predicated region
        $region25: #{tpu_custom_call.1} parent=23 // pred_check
          %p131 = pneg %p74
        $region26: #{tpu_custom_call.1} parent=23 // pred_check_branch
          %133 = sbr.rel (%p131) target = $region28
        $region27: #{tpu_custom_call.1} parent=23 // pred_region
          %s134 = sand.u32 %s64, 1
          %s135 = scalar_lea.sflag [#allocation3], %s134
          %s136 = sand.u32 %s64, 1
          %s137 = smul.addr %s136, 4096
          %s138 = scalar_lea.vmem [#allocation2], %s137
          %s139 = smul.u32 64, %s12
          %s141 = ssub.s32 65536, 65536
          %142 = vsyncadd %s135, %s141
          %s143 = smul.addr %s139, 16
          %s144 = smul.addr %s143, 64
          %s145 = scalar_lea.hbm %s2, %s144
          %s146 = sshll.u32 %s138, 4
          %s147 = int_to_ptr.vmem [resolvable:$true] %s146
          %152 = dma.hbm_to_vmem [thread:$0]  %s145, 65536, %s147, %s135, 1024, 1024, 64
        $region28: #{tpu_custom_call.1} parent=23 // pred_fallthru
          _
      $region24: #{tpu_custom_call.1} parent=5 // pred_fallthru
        _
      %p153 = scmp.le.s32.totalorder 1, %s12
      %p154 = scmp.lt.s32.totalorder %s12, 5
      %p155 = pnand %p153, %p154
      %p156 = pneg %p155
      // Predicated region
      $region29: #{tpu_custom_call.1} parent=5 // pred_check
        _
      $region30: #{tpu_custom_call.1} parent=5 // pred_check_branch
        %158 = sbr.rel (%p155) target = $region32
      $region31: #{tpu_custom_call.1} parent=5 // pred_region
        %s159 = ssub.s32 %s12, 1
        %s160 = sand.u32 %s67, 1
        %s161 = scalar_lea.sflag [#allocation3], %s160
        %s162 = sand.u32 %s67, 1
        %s163 = smul.addr %s162, 4096
        %s164 = scalar_lea.vmem [#allocation2], %s163
        // Predicated region
        $region33: #{tpu_custom_call.1} parent=31 // pred_check
          %p165 = pneg %p80
        $region34: #{tpu_custom_call.1} parent=31 // pred_check_branch
          %167 = sbr.rel (%p165) target = $region36
        $region35: #{tpu_custom_call.1} parent=31 // pred_region
          %168 = dma.done %s161, 65536
        $region36: #{tpu_custom_call.1} parent=31 // pred_fallthru
          _
        %p169 = pneg %p33
        %p170 = pneg %p30
        %p171 = pneg %p54
        %p172 = pneg %p51
        %s173 = sand.u32 %s67, 1
        %s174 = scalar_lea.sflag [#allocation3], %s173
        %s175 = sand.u32 %s67, 1
        %s176 = smul.addr %s175, 4096
        %s177 = scalar_lea.vmem [#allocation2], %s176
        %p178 = pneg %p80
        %p179 = pneg %p77
        %p180 = pneg %p106
        %p181 = pneg %p103
        %s182 = smul.u32 64, %s17
        %p183 = scmp.lt.s32.totalorder %s182, 255
        %s184 = scalar_select %p183, %s182, 255
        %s185 = smul.addr %s184, 8
        %s186 = scalar_lea.vmem %s3, %s185
        %s187 = smul.u32 64, %s17
        %s188 = smul.u32 64, %s17
        %p189 = scmp.lt.s32.totalorder %s188, 255
        %s190 = scalar_select %p189, %s188, 255
        %s191 = smul.addr %s190, 8
        %s192 = scalar_lea.vmem %s3, %s191
        %s193 = smul.u32 64, %s17
        %v195 = vld [vmem:[%s0] sm:$0xff]
        %v196 = vld [vmem:[%s0 + $0x8] sm:$0xff]
        %v197 = vld [vmem:[%s0 + $0x10] sm:$0xff]
        %v198 = vld [vmem:[%s0 + $0x18] sm:$0xff]
        %v199 = vld [vmem:[%s0 + $0x20] sm:$0xff]
        %v200 = vld [vmem:[%s0 + $0x28] sm:$0xff]
        %v201 = vld [vmem:[%s0 + $0x30] sm:$0xff]
        %v202 = vld [vmem:[%s0 + $0x38] sm:$0xff]
        %v203 = vld [vmem:[%s0 + $0x40] sm:$0xff]
        %v204 = vld [vmem:[%s0 + $0x48] sm:$0xff]
        %v205 = vld [vmem:[%s0 + $0x50] sm:$0xff]
        %v206 = vld [vmem:[%s0 + $0x58] sm:$0xff]
        %v207 = vld [vmem:[%s0 + $0x60] sm:$0xff]
        %v208 = vld [vmem:[%s0 + $0x68] sm:$0xff]
        %v209 = vld [vmem:[%s0 + $0x70] sm:$0xff]
        %v210 = vld [vmem:[%s0 + $0x78] sm:$0xff]
        %v211 = vld [vmem:[%s0 + $0x80] sm:$0xff]
        %v212 = vld [vmem:[%s0 + $0x88] sm:$0xff]
        %v213 = vld [vmem:[%s0 + $0x90] sm:$0xff]
        %v214 = vld [vmem:[%s0 + $0x98] sm:$0xff]
        %v215 = vld [vmem:[%s0 + $0xa0] sm:$0xff]
        %v216 = vld [vmem:[%s0 + $0xa8] sm:$0xff]
        %v217 = vld [vmem:[%s0 + $0xb0] sm:$0xff]
        %v218 = vld [vmem:[%s0 + $0xb8] sm:$0xff]
        %v219 = vld [vmem:[%s0 + $0xc0] sm:$0xff]
        %v220 = vld [vmem:[%s0 + $0xc8] sm:$0xff]
        %v221 = vld [vmem:[%s0 + $0xd0] sm:$0xff]
        %v222 = vld [vmem:[%s0 + $0xd8] sm:$0xff]
        %v223 = vld [vmem:[%s0 + $0xe0] sm:$0xff]
        %v224 = vld [vmem:[%s0 + $0xe8] sm:$0xff]
        %v225 = vld [vmem:[%s0 + $0xf0] sm:$0xff]
        %v226 = vld [vmem:[%s0 + $0xf8] sm:$0xff]
        %v227 = vld [vmem:[%s0 + $0x100] sm:$0xff]
        %v228 = vld [vmem:[%s0 + $0x108] sm:$0xff]
        %v229 = vld [vmem:[%s0 + $0x110] sm:$0xff]
        %v230 = vld [vmem:[%s0 + $0x118] sm:$0xff]
        %v231 = vld [vmem:[%s0 + $0x120] sm:$0xff]
        %v232 = vld [vmem:[%s0 + $0x128] sm:$0xff]
        %v233 = vld [vmem:[%s0 + $0x130] sm:$0xff]
        %v234 = vld [vmem:[%s0 + $0x138] sm:$0xff]
        %v235 = vld [vmem:[%s0 + $0x140] sm:$0xff]
        %v236 = vld [vmem:[%s0 + $0x148] sm:$0xff]
        %v237 = vld [vmem:[%s0 + $0x150] sm:$0xff]
        %v238 = vld [vmem:[%s0 + $0x158] sm:$0xff]
        %v239 = vld [vmem:[%s0 + $0x160] sm:$0xff]
        %v240 = vld [vmem:[%s0 + $0x168] sm:$0xff]
        %v241 = vld [vmem:[%s0 + $0x170] sm:$0xff]
        %v242 = vld [vmem:[%s0 + $0x178] sm:$0xff]
        %v243 = vld [vmem:[%s0 + $0x180] sm:$0xff]
        %v244 = vld [vmem:[%s0 + $0x188] sm:$0xff]
        %v245 = vld [vmem:[%s0 + $0x190] sm:$0xff]
        %v246 = vld [vmem:[%s0 + $0x198] sm:$0xff]
        %v247 = vld [vmem:[%s0 + $0x1a0] sm:$0xff]
        %v248 = vld [vmem:[%s0 + $0x1a8] sm:$0xff]
        %v249 = vld [vmem:[%s0 + $0x1b0] sm:$0xff]
        %v250 = vld [vmem:[%s0 + $0x1b8] sm:$0xff]
        %v251 = vld [vmem:[%s0 + $0x1c0] sm:$0xff]
        %v252 = vld [vmem:[%s0 + $0x1c8] sm:$0xff]
        %v253 = vld [vmem:[%s0 + $0x1d0] sm:$0xff]
        %v254 = vld [vmem:[%s0 + $0x1d8] sm:$0xff]
        %v255 = vld [vmem:[%s0 + $0x1e0] sm:$0xff]
        %v256 = vld [vmem:[%s0 + $0x1e8] sm:$0xff]
        %v257 = vld [vmem:[%s0 + $0x1f0] sm:$0xff]
        %v258 = vld [vmem:[%s0 + $0x1f8] sm:$0xff]
        %v259 = vld [vmem:[%s0 + $0x200] sm:$0xff]
        %v260 = vld [vmem:[%s0 + $0x208] sm:$0xff]
        %v261 = vld [vmem:[%s0 + $0x210] sm:$0xff]
        %v262 = vld [vmem:[%s0 + $0x218] sm:$0xff]
        %v263 = vld [vmem:[%s0 + $0x220] sm:$0xff]
        %v264 = vld [vmem:[%s0 + $0x228] sm:$0xff]
        %v265 = vld [vmem:[%s0 + $0x230] sm:$0xff]
        %v266 = vld [vmem:[%s0 + $0x238] sm:$0xff]
        %v267 = vld [vmem:[%s0 + $0x240] sm:$0xff]
        %v268 = vld [vmem:[%s0 + $0x248] sm:$0xff]
        %v269 = vld [vmem:[%s0 + $0x250] sm:$0xff]
        %v270 = vld [vmem:[%s0 + $0x258] sm:$0xff]
        %v271 = vld [vmem:[%s0 + $0x260] sm:$0xff]
        %v272 = vld [vmem:[%s0 + $0x268] sm:$0xff]
        %v273 = vld [vmem:[%s0 + $0x270] sm:$0xff]
        %v274 = vld [vmem:[%s0 + $0x278] sm:$0xff]
        %v275 = vld [vmem:[%s0 + $0x280] sm:$0xff]
        %v276 = vld [vmem:[%s0 + $0x288] sm:$0xff]
        %v277 = vld [vmem:[%s0 + $0x290] sm:$0xff]
        %v278 = vld [vmem:[%s0 + $0x298] sm:$0xff]
        %v279 = vld [vmem:[%s0 + $0x2a0] sm:$0xff]
        %v280 = vld [vmem:[%s0 + $0x2a8] sm:$0xff]
        %v281 = vld [vmem:[%s0 + $0x2b0] sm:$0xff]
        %v282 = vld [vmem:[%s0 + $0x2b8] sm:$0xff]
        %v283 = vld [vmem:[%s0 + $0x2c0] sm:$0xff]
        %v284 = vld [vmem:[%s0 + $0x2c8] sm:$0xff]
        %v285 = vld [vmem:[%s0 + $0x2d0] sm:$0xff]
        %v286 = vld [vmem:[%s0 + $0x2d8] sm:$0xff]
        %v287 = vld [vmem:[%s0 + $0x2e0] sm:$0xff]
        %v288 = vld [vmem:[%s0 + $0x2e8] sm:$0xff]
        %v289 = vld [vmem:[%s0 + $0x2f0] sm:$0xff]
        %v290 = vld [vmem:[%s0 + $0x2f8] sm:$0xff]
        %v291 = vld [vmem:[%s0 + $0x300] sm:$0xff]
        %v292 = vld [vmem:[%s0 + $0x308] sm:$0xff]
        %v293 = vld [vmem:[%s0 + $0x310] sm:$0xff]
        %v294 = vld [vmem:[%s0 + $0x318] sm:$0xff]
        %v295 = vld [vmem:[%s0 + $0x320] sm:$0xff]
        %v296 = vld [vmem:[%s0 + $0x328] sm:$0xff]
        %v297 = vld [vmem:[%s0 + $0x330] sm:$0xff]
        %v298 = vld [vmem:[%s0 + $0x338] sm:$0xff]
        %v299 = vld [vmem:[%s0 + $0x340] sm:$0xff]
        %v300 = vld [vmem:[%s0 + $0x348] sm:$0xff]
        %v301 = vld [vmem:[%s0 + $0x350] sm:$0xff]
        %v302 = vld [vmem:[%s0 + $0x358] sm:$0xff]
        %v303 = vld [vmem:[%s0 + $0x360] sm:$0xff]
        %v304 = vld [vmem:[%s0 + $0x368] sm:$0xff]
        %v305 = vld [vmem:[%s0 + $0x370] sm:$0xff]
        %v306 = vld [vmem:[%s0 + $0x378] sm:$0xff]
        %v307 = vld [vmem:[%s0 + $0x380] sm:$0xff]
        %v308 = vld [vmem:[%s0 + $0x388] sm:$0xff]
        %v309 = vld [vmem:[%s0 + $0x390] sm:$0xff]
        %v310 = vld [vmem:[%s0 + $0x398] sm:$0xff]
        %v311 = vld [vmem:[%s0 + $0x3a0] sm:$0xff]
        %v312 = vld [vmem:[%s0 + $0x3a8] sm:$0xff]
        %v313 = vld [vmem:[%s0 + $0x3b0] sm:$0xff]
        %v314 = vld [vmem:[%s0 + $0x3b8] sm:$0xff]
        %v315 = vld [vmem:[%s0 + $0x3c0] sm:$0xff]
        %v316 = vld [vmem:[%s0 + $0x3c8] sm:$0xff]
        %v317 = vld [vmem:[%s0 + $0x3d0] sm:$0xff]
        %v318 = vld [vmem:[%s0 + $0x3d8] sm:$0xff]
        %v319 = vld [vmem:[%s0 + $0x3e0] sm:$0xff]
        %v320 = vld [vmem:[%s0 + $0x3e8] sm:$0xff]
        %v321 = vld [vmem:[%s0 + $0x3f0] sm:$0xff]
        %v322 = vld [vmem:[%s0 + $0x3f8] sm:$0xff]
        %v323 = vld [vmem:[%s0 + $0x400] sm:$0xff]
        %v324 = vld [vmem:[%s0 + $0x408] sm:$0xff]
        %v325 = vld [vmem:[%s0 + $0x410] sm:$0xff]
        %v326 = vld [vmem:[%s0 + $0x418] sm:$0xff]
        %v327 = vld [vmem:[%s0 + $0x420] sm:$0xff]
        %v328 = vld [vmem:[%s0 + $0x428] sm:$0xff]
        %v329 = vld [vmem:[%s0 + $0x430] sm:$0xff]
        %v330 = vld [vmem:[%s0 + $0x438] sm:$0xff]
        %v331 = vld [vmem:[%s0 + $0x440] sm:$0xff]
        %v332 = vld [vmem:[%s0 + $0x448] sm:$0xff]
        %v333 = vld [vmem:[%s0 + $0x450] sm:$0xff]
        %v334 = vld [vmem:[%s0 + $0x458] sm:$0xff]
        %v335 = vld [vmem:[%s0 + $0x460] sm:$0xff]
        %v336 = vld [vmem:[%s0 + $0x468] sm:$0xff]
        %v337 = vld [vmem:[%s0 + $0x470] sm:$0xff]
        %v338 = vld [vmem:[%s0 + $0x478] sm:$0xff]
        %v339 = vld [vmem:[%s0 + $0x480] sm:$0xff]
        %v340 = vld [vmem:[%s0 + $0x488] sm:$0xff]
        %v341 = vld [vmem:[%s0 + $0x490] sm:$0xff]
        %v342 = vld [vmem:[%s0 + $0x498] sm:$0xff]
        %v343 = vld [vmem:[%s0 + $0x4a0] sm:$0xff]
        %v344 = vld [vmem:[%s0 + $0x4a8] sm:$0xff]
        %v345 = vld [vmem:[%s0 + $0x4b0] sm:$0xff]
        %v346 = vld [vmem:[%s0 + $0x4b8] sm:$0xff]
        %v347 = vld [vmem:[%s0 + $0x4c0] sm:$0xff]
        %v348 = vld [vmem:[%s0 + $0x4c8] sm:$0xff]
        %v349 = vld [vmem:[%s0 + $0x4d0] sm:$0xff]
        %v350 = vld [vmem:[%s0 + $0x4d8] sm:$0xff]
        %v351 = vld [vmem:[%s0 + $0x4e0] sm:$0xff]
        %v352 = vld [vmem:[%s0 + $0x4e8] sm:$0xff]
        %v353 = vld [vmem:[%s0 + $0x4f0] sm:$0xff]
        %v354 = vld [vmem:[%s0 + $0x4f8] sm:$0xff]
        %v355 = vld [vmem:[%s0 + $0x500] sm:$0xff]
        %v356 = vld [vmem:[%s0 + $0x508] sm:$0xff]
        %v357 = vld [vmem:[%s0 + $0x510] sm:$0xff]
        %v358 = vld [vmem:[%s0 + $0x518] sm:$0xff]
        %v359 = vld [vmem:[%s0 + $0x520] sm:$0xff]
        %v360 = vld [vmem:[%s0 + $0x528] sm:$0xff]
        %v361 = vld [vmem:[%s0 + $0x530] sm:$0xff]
        %v362 = vld [vmem:[%s0 + $0x538] sm:$0xff]
        %v363 = vld [vmem:[%s0 + $0x540] sm:$0xff]
        %v364 = vld [vmem:[%s0 + $0x548] sm:$0xff]
        %v365 = vld [vmem:[%s0 + $0x550] sm:$0xff]
        %v366 = vld [vmem:[%s0 + $0x558] sm:$0xff]
        %v367 = vld [vmem:[%s0 + $0x560] sm:$0xff]
        %v368 = vld [vmem:[%s0 + $0x568] sm:$0xff]
        %v369 = vld [vmem:[%s0 + $0x570] sm:$0xff]
        %v370 = vld [vmem:[%s0 + $0x578] sm:$0xff]
        %v371 = vld [vmem:[%s0 + $0x580] sm:$0xff]
        %v372 = vld [vmem:[%s0 + $0x588] sm:$0xff]
        %v373 = vld [vmem:[%s0 + $0x590] sm:$0xff]
        %v374 = vld [vmem:[%s0 + $0x598] sm:$0xff]
        %v375 = vld [vmem:[%s0 + $0x5a0] sm:$0xff]
        %v376 = vld [vmem:[%s0 + $0x5a8] sm:$0xff]
        %v377 = vld [vmem:[%s0 + $0x5b0] sm:$0xff]
        %v378 = vld [vmem:[%s0 + $0x5b8] sm:$0xff]
        %v379 = vld [vmem:[%s0 + $0x5c0] sm:$0xff]
        %v380 = vld [vmem:[%s0 + $0x5c8] sm:$0xff]
        %v381 = vld [vmem:[%s0 + $0x5d0] sm:$0xff]
        %v382 = vld [vmem:[%s0 + $0x5d8] sm:$0xff]
        %v383 = vld [vmem:[%s0 + $0x5e0] sm:$0xff]
        %v384 = vld [vmem:[%s0 + $0x5e8] sm:$0xff]
        %v385 = vld [vmem:[%s0 + $0x5f0] sm:$0xff]
        %v386 = vld [vmem:[%s0 + $0x5f8] sm:$0xff]
        %v387 = vld [vmem:[%s0 + $0x600] sm:$0xff]
        %v388 = vld [vmem:[%s0 + $0x608] sm:$0xff]
        %v389 = vld [vmem:[%s0 + $0x610] sm:$0xff]
        %v390 = vld [vmem:[%s0 + $0x618] sm:$0xff]
        %v391 = vld [vmem:[%s0 + $0x620] sm:$0xff]
        %v392 = vld [vmem:[%s0 + $0x628] sm:$0xff]
        %v393 = vld [vmem:[%s0 + $0x630] sm:$0xff]
        %v394 = vld [vmem:[%s0 + $0x638] sm:$0xff]
        %v395 = vld [vmem:[%s0 + $0x640] sm:$0xff]
        %v396 = vld [vmem:[%s0 + $0x648] sm:$0xff]
        %v397 = vld [vmem:[%s0 + $0x650] sm:$0xff]
        %v398 = vld [vmem:[%s0 + $0x658] sm:$0xff]
        %v399 = vld [vmem:[%s0 + $0x660] sm:$0xff]
        %v400 = vld [vmem:[%s0 + $0x668] sm:$0xff]
        %v401 = vld [vmem:[%s0 + $0x670] sm:$0xff]
        %v402 = vld [vmem:[%s0 + $0x678] sm:$0xff]
        %v403 = vld [vmem:[%s0 + $0x680] sm:$0xff]
        %v404 = vld [vmem:[%s0 + $0x688] sm:$0xff]
        %v405 = vld [vmem:[%s0 + $0x690] sm:$0xff]
        %v406 = vld [vmem:[%s0 + $0x698] sm:$0xff]
        %v407 = vld [vmem:[%s0 + $0x6a0] sm:$0xff]
        %v408 = vld [vmem:[%s0 + $0x6a8] sm:$0xff]
        %v409 = vld [vmem:[%s0 + $0x6b0] sm:$0xff]
        %v410 = vld [vmem:[%s0 + $0x6b8] sm:$0xff]
        %v411 = vld [vmem:[%s0 + $0x6c0] sm:$0xff]
        %v412 = vld [vmem:[%s0 + $0x6c8] sm:$0xff]
        %v413 = vld [vmem:[%s0 + $0x6d0] sm:$0xff]
        %v414 = vld [vmem:[%s0 + $0x6d8] sm:$0xff]
        %v415 = vld [vmem:[%s0 + $0x6e0] sm:$0xff]
        %v416 = vld [vmem:[%s0 + $0x6e8] sm:$0xff]
        %v417 = vld [vmem:[%s0 + $0x6f0] sm:$0xff]
        %v418 = vld [vmem:[%s0 + $0x6f8] sm:$0xff]
        %v419 = vld [vmem:[%s0 + $0x700] sm:$0xff]
        %v420 = vld [vmem:[%s0 + $0x708] sm:$0xff]
        %v421 = vld [vmem:[%s0 + $0x710] sm:$0xff]
        %v422 = vld [vmem:[%s0 + $0x718] sm:$0xff]
        %v423 = vld [vmem:[%s0 + $0x720] sm:$0xff]
        %v424 = vld [vmem:[%s0 + $0x728] sm:$0xff]
        %v425 = vld [vmem:[%s0 + $0x730] sm:$0xff]
        %v426 = vld [vmem:[%s0 + $0x738] sm:$0xff]
        %v427 = vld [vmem:[%s0 + $0x740] sm:$0xff]
        %v428 = vld [vmem:[%s0 + $0x748] sm:$0xff]
        %v429 = vld [vmem:[%s0 + $0x750] sm:$0xff]
        %v430 = vld [vmem:[%s0 + $0x758] sm:$0xff]
        %v431 = vld [vmem:[%s0 + $0x760] sm:$0xff]
        %v432 = vld [vmem:[%s0 + $0x768] sm:$0xff]
        %v433 = vld [vmem:[%s0 + $0x770] sm:$0xff]
        %v434 = vld [vmem:[%s0 + $0x778] sm:$0xff]
        %v435 = vld [vmem:[%s0 + $0x780] sm:$0xff]
        %v436 = vld [vmem:[%s0 + $0x788] sm:$0xff]
        %v437 = vld [vmem:[%s0 + $0x790] sm:$0xff]
        %v438 = vld [vmem:[%s0 + $0x798] sm:$0xff]
        %v439 = vld [vmem:[%s0 + $0x7a0] sm:$0xff]
        %v440 = vld [vmem:[%s0 + $0x7a8] sm:$0xff]
        %v441 = vld [vmem:[%s0 + $0x7b0] sm:$0xff]
        %v442 = vld [vmem:[%s0 + $0x7b8] sm:$0xff]
        %v443 = vld [vmem:[%s0 + $0x7c0] sm:$0xff]
        %v444 = vld [vmem:[%s0 + $0x7c8] sm:$0xff]
        %v445 = vld [vmem:[%s0 + $0x7d0] sm:$0xff]
        %v446 = vld [vmem:[%s0 + $0x7d8] sm:$0xff]
        %v447 = vld [vmem:[%s0 + $0x7e0] sm:$0xff]
        %v448 = vld [vmem:[%s0 + $0x7e8] sm:$0xff]
        %v449 = vld [vmem:[%s0 + $0x7f0] sm:$0xff]
        %v450 = vld [vmem:[%s0 + $0x7f8] sm:$0xff]
        %v451 = vld [vmem:[%s1] sm:$0xff]
        %v452 = vld [vmem:[%s1 + $0x8] sm:$0xff]
        %v453 = vld [vmem:[%s1 + $0x10] sm:$0xff]
        %v454 = vld [vmem:[%s1 + $0x18] sm:$0xff]
        %v455 = vld [vmem:[%s1 + $0x20] sm:$0xff]
        %v456 = vld [vmem:[%s1 + $0x28] sm:$0xff]
        %v457 = vld [vmem:[%s1 + $0x30] sm:$0xff]
        %v458 = vld [vmem:[%s1 + $0x38] sm:$0xff]
        %v459 = vld [vmem:[%s1 + $0x40] sm:$0xff]
        %v460 = vld [vmem:[%s1 + $0x48] sm:$0xff]
        %v461 = vld [vmem:[%s1 + $0x50] sm:$0xff]
        %v462 = vld [vmem:[%s1 + $0x58] sm:$0xff]
        %v463 = vld [vmem:[%s1 + $0x60] sm:$0xff]
        %v464 = vld [vmem:[%s1 + $0x68] sm:$0xff]
        %v465 = vld [vmem:[%s1 + $0x70] sm:$0xff]
        %v466 = vld [vmem:[%s1 + $0x78] sm:$0xff]
        %v467 = vld [vmem:[%s1 + $0x80] sm:$0xff]
        %v468 = vld [vmem:[%s1 + $0x88] sm:$0xff]
        %v469 = vld [vmem:[%s1 + $0x90] sm:$0xff]
        %v470 = vld [vmem:[%s1 + $0x98] sm:$0xff]
        %v471 = vld [vmem:[%s1 + $0xa0] sm:$0xff]
        %v472 = vld [vmem:[%s1 + $0xa8] sm:$0xff]
        %v473 = vld [vmem:[%s1 + $0xb0] sm:$0xff]
        %v474 = vld [vmem:[%s1 + $0xb8] sm:$0xff]
        %v475 = vld [vmem:[%s1 + $0xc0] sm:$0xff]
        %v476 = vld [vmem:[%s1 + $0xc8] sm:$0xff]
        %v477 = vld [vmem:[%s1 + $0xd0] sm:$0xff]
        %v478 = vld [vmem:[%s1 + $0xd8] sm:$0xff]
        %v479 = vld [vmem:[%s1 + $0xe0] sm:$0xff]
        %v480 = vld [vmem:[%s1 + $0xe8] sm:$0xff]
        %v481 = vld [vmem:[%s1 + $0xf0] sm:$0xff]
        %v482 = vld [vmem:[%s1 + $0xf8] sm:$0xff]
        %v483 = vld [vmem:[%s1 + $0x100] sm:$0xff]
        %v484 = vld [vmem:[%s1 + $0x108] sm:$0xff]
        %v485 = vld [vmem:[%s1 + $0x110] sm:$0xff]
        %v486 = vld [vmem:[%s1 + $0x118] sm:$0xff]
        %v487 = vld [vmem:[%s1 + $0x120] sm:$0xff]
        %v488 = vld [vmem:[%s1 + $0x128] sm:$0xff]
        %v489 = vld [vmem:[%s1 + $0x130] sm:$0xff]
        %v490 = vld [vmem:[%s1 + $0x138] sm:$0xff]
        %v491 = vld [vmem:[%s1 + $0x140] sm:$0xff]
        %v492 = vld [vmem:[%s1 + $0x148] sm:$0xff]
        %v493 = vld [vmem:[%s1 + $0x150] sm:$0xff]
        %v494 = vld [vmem:[%s1 + $0x158] sm:$0xff]
        %v495 = vld [vmem:[%s1 + $0x160] sm:$0xff]
        %v496 = vld [vmem:[%s1 + $0x168] sm:$0xff]
        %v497 = vld [vmem:[%s1 + $0x170] sm:$0xff]
        %v498 = vld [vmem:[%s1 + $0x178] sm:$0xff]
        %v499 = vld [vmem:[%s1 + $0x180] sm:$0xff]
        %v500 = vld [vmem:[%s1 + $0x188] sm:$0xff]
        %v501 = vld [vmem:[%s1 + $0x190] sm:$0xff]
        %v502 = vld [vmem:[%s1 + $0x198] sm:$0xff]
        %v503 = vld [vmem:[%s1 + $0x1a0] sm:$0xff]
        %v504 = vld [vmem:[%s1 + $0x1a8] sm:$0xff]
        %v505 = vld [vmem:[%s1 + $0x1b0] sm:$0xff]
        %v506 = vld [vmem:[%s1 + $0x1b8] sm:$0xff]
        %v507 = vld [vmem:[%s1 + $0x1c0] sm:$0xff]
        %v508 = vld [vmem:[%s1 + $0x1c8] sm:$0xff]
        %v509 = vld [vmem:[%s1 + $0x1d0] sm:$0xff]
        %v510 = vld [vmem:[%s1 + $0x1d8] sm:$0xff]
        %v511 = vld [vmem:[%s1 + $0x1e0] sm:$0xff]
        %v512 = vld [vmem:[%s1 + $0x1e8] sm:$0xff]
        %v513 = vld [vmem:[%s1 + $0x1f0] sm:$0xff]
        %v514 = vld [vmem:[%s1 + $0x1f8] sm:$0xff]
        %v515 = vld [vmem:[%s1 + $0x200] sm:$0xff]
        %v516 = vld [vmem:[%s1 + $0x208] sm:$0xff]
        %v517 = vld [vmem:[%s1 + $0x210] sm:$0xff]
        %v518 = vld [vmem:[%s1 + $0x218] sm:$0xff]
        %v519 = vld [vmem:[%s1 + $0x220] sm:$0xff]
        %v520 = vld [vmem:[%s1 + $0x228] sm:$0xff]
        %v521 = vld [vmem:[%s1 + $0x230] sm:$0xff]
        %v522 = vld [vmem:[%s1 + $0x238] sm:$0xff]
        %v523 = vld [vmem:[%s1 + $0x240] sm:$0xff]
        %v524 = vld [vmem:[%s1 + $0x248] sm:$0xff]
        %v525 = vld [vmem:[%s1 + $0x250] sm:$0xff]
        %v526 = vld [vmem:[%s1 + $0x258] sm:$0xff]
        %v527 = vld [vmem:[%s1 + $0x260] sm:$0xff]
        %v528 = vld [vmem:[%s1 + $0x268] sm:$0xff]
        %v529 = vld [vmem:[%s1 + $0x270] sm:$0xff]
        %v530 = vld [vmem:[%s1 + $0x278] sm:$0xff]
        %v531 = vld [vmem:[%s1 + $0x280] sm:$0xff]
        %v532 = vld [vmem:[%s1 + $0x288] sm:$0xff]
        %v533 = vld [vmem:[%s1 + $0x290] sm:$0xff]
        %v534 = vld [vmem:[%s1 + $0x298] sm:$0xff]
        %v535 = vld [vmem:[%s1 + $0x2a0] sm:$0xff]
        %v536 = vld [vmem:[%s1 + $0x2a8] sm:$0xff]
        %v537 = vld [vmem:[%s1 + $0x2b0] sm:$0xff]
        %v538 = vld [vmem:[%s1 + $0x2b8] sm:$0xff]
        %v539 = vld [vmem:[%s1 + $0x2c0] sm:$0xff]
        %v540 = vld [vmem:[%s1 + $0x2c8] sm:$0xff]
        %v541 = vld [vmem:[%s1 + $0x2d0] sm:$0xff]
        %v542 = vld [vmem:[%s1 + $0x2d8] sm:$0xff]
        %v543 = vld [vmem:[%s1 + $0x2e0] sm:$0xff]
        %v544 = vld [vmem:[%s1 + $0x2e8] sm:$0xff]
        %v545 = vld [vmem:[%s1 + $0x2f0] sm:$0xff]
        %v546 = vld [vmem:[%s1 + $0x2f8] sm:$0xff]
        %v547 = vld [vmem:[%s1 + $0x300] sm:$0xff]
        %v548 = vld [vmem:[%s1 + $0x308] sm:$0xff]
        %v549 = vld [vmem:[%s1 + $0x310] sm:$0xff]
        %v550 = vld [vmem:[%s1 + $0x318] sm:$0xff]
        %v551 = vld [vmem:[%s1 + $0x320] sm:$0xff]
        %v552 = vld [vmem:[%s1 + $0x328] sm:$0xff]
        %v553 = vld [vmem:[%s1 + $0x330] sm:$0xff]
        %v554 = vld [vmem:[%s1 + $0x338] sm:$0xff]
        %v555 = vld [vmem:[%s1 + $0x340] sm:$0xff]
        %v556 = vld [vmem:[%s1 + $0x348] sm:$0xff]
        %v557 = vld [vmem:[%s1 + $0x350] sm:$0xff]
        %v558 = vld [vmem:[%s1 + $0x358] sm:$0xff]
        %v559 = vld [vmem:[%s1 + $0x360] sm:$0xff]
        %v560 = vld [vmem:[%s1 + $0x368] sm:$0xff]
        %v561 = vld [vmem:[%s1 + $0x370] sm:$0xff]
        %v562 = vld [vmem:[%s1 + $0x378] sm:$0xff]
        %v563 = vld [vmem:[%s1 + $0x380] sm:$0xff]
        %v564 = vld [vmem:[%s1 + $0x388] sm:$0xff]
        %v565 = vld [vmem:[%s1 + $0x390] sm:$0xff]
        %v566 = vld [vmem:[%s1 + $0x398] sm:$0xff]
        %v567 = vld [vmem:[%s1 + $0x3a0] sm:$0xff]
        %v568 = vld [vmem:[%s1 + $0x3a8] sm:$0xff]
        %v569 = vld [vmem:[%s1 + $0x3b0] sm:$0xff]
        %v570 = vld [vmem:[%s1 + $0x3b8] sm:$0xff]
        %v571 = vld [vmem:[%s1 + $0x3c0] sm:$0xff]
        %v572 = vld [vmem:[%s1 + $0x3c8] sm:$0xff]
        %v573 = vld [vmem:[%s1 + $0x3d0] sm:$0xff]
        %v574 = vld [vmem:[%s1 + $0x3d8] sm:$0xff]
        %v575 = vld [vmem:[%s1 + $0x3e0] sm:$0xff]
        %v576 = vld [vmem:[%s1 + $0x3e8] sm:$0xff]
        %v577 = vld [vmem:[%s1 + $0x3f0] sm:$0xff]
        %v578 = vld [vmem:[%s1 + $0x3f8] sm:$0xff]
        %v579 = vld [vmem:[%s1 + $0x400] sm:$0xff]
        %v580 = vld [vmem:[%s1 + $0x408] sm:$0xff]
        %v581 = vld [vmem:[%s1 + $0x410] sm:$0xff]
        %v582 = vld [vmem:[%s1 + $0x418] sm:$0xff]
        %v583 = vld [vmem:[%s1 + $0x420] sm:$0xff]
        %v584 = vld [vmem:[%s1 + $0x428] sm:$0xff]
        %v585 = vld [vmem:[%s1 + $0x430] sm:$0xff]
        %v586 = vld [vmem:[%s1 + $0x438] sm:$0xff]
        %v587 = vld [vmem:[%s1 + $0x440] sm:$0xff]
        %v588 = vld [vmem:[%s1 + $0x448] sm:$0xff]
        %v589 = vld [vmem:[%s1 + $0x450] sm:$0xff]
        %v590 = vld [vmem:[%s1 + $0x458] sm:$0xff]
        %v591 = vld [vmem:[%s1 + $0x460] sm:$0xff]
        %v592 = vld [vmem:[%s1 + $0x468] sm:$0xff]
        %v593 = vld [vmem:[%s1 + $0x470] sm:$0xff]
        %v594 = vld [vmem:[%s1 + $0x478] sm:$0xff]
        %v595 = vld [vmem:[%s1 + $0x480] sm:$0xff]
        %v596 = vld [vmem:[%s1 + $0x488] sm:$0xff]
        %v597 = vld [vmem:[%s1 + $0x490] sm:$0xff]
        %v598 = vld [vmem:[%s1 + $0x498] sm:$0xff]
        %v599 = vld [vmem:[%s1 + $0x4a0] sm:$0xff]
        %v600 = vld [vmem:[%s1 + $0x4a8] sm:$0xff]
        %v601 = vld [vmem:[%s1 + $0x4b0] sm:$0xff]
        %v602 = vld [vmem:[%s1 + $0x4b8] sm:$0xff]
        %v603 = vld [vmem:[%s1 + $0x4c0] sm:$0xff]
        %v604 = vld [vmem:[%s1 + $0x4c8] sm:$0xff]
        %v605 = vld [vmem:[%s1 + $0x4d0] sm:$0xff]
        %v606 = vld [vmem:[%s1 + $0x4d8] sm:$0xff]
        %v607 = vld [vmem:[%s1 + $0x4e0] sm:$0xff]
        %v608 = vld [vmem:[%s1 + $0x4e8] sm:$0xff]
        %v609 = vld [vmem:[%s1 + $0x4f0] sm:$0xff]
        %v610 = vld [vmem:[%s1 + $0x4f8] sm:$0xff]
        %v611 = vld [vmem:[%s1 + $0x500] sm:$0xff]
        %v612 = vld [vmem:[%s1 + $0x508] sm:$0xff]
        %v613 = vld [vmem:[%s1 + $0x510] sm:$0xff]
        %v614 = vld [vmem:[%s1 + $0x518] sm:$0xff]
        %v615 = vld [vmem:[%s1 + $0x520] sm:$0xff]
        %v616 = vld [vmem:[%s1 + $0x528] sm:$0xff]
        %v617 = vld [vmem:[%s1 + $0x530] sm:$0xff]
        %v618 = vld [vmem:[%s1 + $0x538] sm:$0xff]
        %v619 = vld [vmem:[%s1 + $0x540] sm:$0xff]
        %v620 = vld [vmem:[%s1 + $0x548] sm:$0xff]
        %v621 = vld [vmem:[%s1 + $0x550] sm:$0xff]
        %v622 = vld [vmem:[%s1 + $0x558] sm:$0xff]
        %v623 = vld [vmem:[%s1 + $0x560] sm:$0xff]
        %v624 = vld [vmem:[%s1 + $0x568] sm:$0xff]
        %v625 = vld [vmem:[%s1 + $0x570] sm:$0xff]
        %v626 = vld [vmem:[%s1 + $0x578] sm:$0xff]
        %v627 = vld [vmem:[%s1 + $0x580] sm:$0xff]
        %v628 = vld [vmem:[%s1 + $0x588] sm:$0xff]
        %v629 = vld [vmem:[%s1 + $0x590] sm:$0xff]
        %v630 = vld [vmem:[%s1 + $0x598] sm:$0xff]
        %v631 = vld [vmem:[%s1 + $0x5a0] sm:$0xff]
        %v632 = vld [vmem:[%s1 + $0x5a8] sm:$0xff]
        %v633 = vld [vmem:[%s1 + $0x5b0] sm:$0xff]
        %v634 = vld [vmem:[%s1 + $0x5b8] sm:$0xff]
        %v635 = vld [vmem:[%s1 + $0x5c0] sm:$0xff]
        %v636 = vld [vmem:[%s1 + $0x5c8] sm:$0xff]
        %v637 = vld [vmem:[%s1 + $0x5d0] sm:$0xff]
        %v638 = vld [vmem:[%s1 + $0x5d8] sm:$0xff]
        %v639 = vld [vmem:[%s1 + $0x5e0] sm:$0xff]
        %v640 = vld [vmem:[%s1 + $0x5e8] sm:$0xff]
        %v641 = vld [vmem:[%s1 + $0x5f0] sm:$0xff]
        %v642 = vld [vmem:[%s1 + $0x5f8] sm:$0xff]
        %v643 = vld [vmem:[%s1 + $0x600] sm:$0xff]
        %v644 = vld [vmem:[%s1 + $0x608] sm:$0xff]
        %v645 = vld [vmem:[%s1 + $0x610] sm:$0xff]
        %v646 = vld [vmem:[%s1 + $0x618] sm:$0xff]
        %v647 = vld [vmem:[%s1 + $0x620] sm:$0xff]
        %v648 = vld [vmem:[%s1 + $0x628] sm:$0xff]
        %v649 = vld [vmem:[%s1 + $0x630] sm:$0xff]
        %v650 = vld [vmem:[%s1 + $0x638] sm:$0xff]
        %v651 = vld [vmem:[%s1 + $0x640] sm:$0xff]
        %v652 = vld [vmem:[%s1 + $0x648] sm:$0xff]
        %v653 = vld [vmem:[%s1 + $0x650] sm:$0xff]
        %v654 = vld [vmem:[%s1 + $0x658] sm:$0xff]
        %v655 = vld [vmem:[%s1 + $0x660] sm:$0xff]
        %v656 = vld [vmem:[%s1 + $0x668] sm:$0xff]
        %v657 = vld [vmem:[%s1 + $0x670] sm:$0xff]
        %v658 = vld [vmem:[%s1 + $0x678] sm:$0xff]
        %v659 = vld [vmem:[%s1 + $0x680] sm:$0xff]
        %v660 = vld [vmem:[%s1 + $0x688] sm:$0xff]
        %v661 = vld [vmem:[%s1 + $0x690] sm:$0xff]
        %v662 = vld [vmem:[%s1 + $0x698] sm:$0xff]
        %v663 = vld [vmem:[%s1 + $0x6a0] sm:$0xff]
        %v664 = vld [vmem:[%s1 + $0x6a8] sm:$0xff]
        %v665 = vld [vmem:[%s1 + $0x6b0] sm:$0xff]
        %v666 = vld [vmem:[%s1 + $0x6b8] sm:$0xff]
        %v667 = vld [vmem:[%s1 + $0x6c0] sm:$0xff]
        %v668 = vld [vmem:[%s1 + $0x6c8] sm:$0xff]
        %v669 = vld [vmem:[%s1 + $0x6d0] sm:$0xff]
        %v670 = vld [vmem:[%s1 + $0x6d8] sm:$0xff]
        %v671 = vld [vmem:[%s1 + $0x6e0] sm:$0xff]
        %v672 = vld [vmem:[%s1 + $0x6e8] sm:$0xff]
        %v673 = vld [vmem:[%s1 + $0x6f0] sm:$0xff]
        %v674 = vld [vmem:[%s1 + $0x6f8] sm:$0xff]
        %v675 = vld [vmem:[%s1 + $0x700] sm:$0xff]
        %v676 = vld [vmem:[%s1 + $0x708] sm:$0xff]
        %v677 = vld [vmem:[%s1 + $0x710] sm:$0xff]
        %v678 = vld [vmem:[%s1 + $0x718] sm:$0xff]
        %v679 = vld [vmem:[%s1 + $0x720] sm:$0xff]
        %v680 = vld [vmem:[%s1 + $0x728] sm:$0xff]
        %v681 = vld [vmem:[%s1 + $0x730] sm:$0xff]
        %v682 = vld [vmem:[%s1 + $0x738] sm:$0xff]
        %v683 = vld [vmem:[%s1 + $0x740] sm:$0xff]
        %v684 = vld [vmem:[%s1 + $0x748] sm:$0xff]
        %v685 = vld [vmem:[%s1 + $0x750] sm:$0xff]
        %v686 = vld [vmem:[%s1 + $0x758] sm:$0xff]
        %v687 = vld [vmem:[%s1 + $0x760] sm:$0xff]
        %v688 = vld [vmem:[%s1 + $0x768] sm:$0xff]
        %v689 = vld [vmem:[%s1 + $0x770] sm:$0xff]
        %v690 = vld [vmem:[%s1 + $0x778] sm:$0xff]
        %v691 = vld [vmem:[%s1 + $0x780] sm:$0xff]
        %v692 = vld [vmem:[%s1 + $0x788] sm:$0xff]
        %v693 = vld [vmem:[%s1 + $0x790] sm:$0xff]
        %v694 = vld [vmem:[%s1 + $0x798] sm:$0xff]
        %v695 = vld [vmem:[%s1 + $0x7a0] sm:$0xff]
        %v696 = vld [vmem:[%s1 + $0x7a8] sm:$0xff]
        %v697 = vld [vmem:[%s1 + $0x7b0] sm:$0xff]
        %v698 = vld [vmem:[%s1 + $0x7b8] sm:$0xff]
        %v699 = vld [vmem:[%s1 + $0x7c0] sm:$0xff]
        %v700 = vld [vmem:[%s1 + $0x7c8] sm:$0xff]
        %v701 = vld [vmem:[%s1 + $0x7d0] sm:$0xff]
        %v702 = vld [vmem:[%s1 + $0x7d8] sm:$0xff]
        %v703 = vld [vmem:[%s1 + $0x7e0] sm:$0xff]
        %v704 = vld [vmem:[%s1 + $0x7e8] sm:$0xff]
        %v705 = vld [vmem:[%s1 + $0x7f0] sm:$0xff]
        %v706 = vld [vmem:[%s1 + $0x7f8] sm:$0xff]
        %v707 = vadd.f32 %v195, %v451
        %v708 = vadd.f32 %v196, %v452
        %v709 = vadd.f32 %v197, %v453
        %v710 = vadd.f32 %v198, %v454
        %v711 = vadd.f32 %v199, %v455
        %v712 = vadd.f32 %v200, %v456
        %v713 = vadd.f32 %v201, %v457
        %v714 = vadd.f32 %v202, %v458
        %v715 = vadd.f32 %v203, %v459
        %v716 = vadd.f32 %v204, %v460
        %v717 = vadd.f32 %v205, %v461
        %v718 = vadd.f32 %v206, %v462
        %v719 = vadd.f32 %v207, %v463
        %v720 = vadd.f32 %v208, %v464
        %v721 = vadd.f32 %v209, %v465
        %v722 = vadd.f32 %v210, %v466
        %v723 = vadd.f32 %v211, %v467
        %v724 = vadd.f32 %v212, %v468
        %v725 = vadd.f32 %v213, %v469
        %v726 = vadd.f32 %v214, %v470
        %v727 = vadd.f32 %v215, %v471
        %v728 = vadd.f32 %v216, %v472
        %v729 = vadd.f32 %v217, %v473
        %v730 = vadd.f32 %v218, %v474
        %v731 = vadd.f32 %v219, %v475
        %v732 = vadd.f32 %v220, %v476
        %v733 = vadd.f32 %v221, %v477
        %v734 = vadd.f32 %v222, %v478
        %v735 = vadd.f32 %v223, %v479
        %v736 = vadd.f32 %v224, %v480
        %v737 = vadd.f32 %v225, %v481
        %v738 = vadd.f32 %v226, %v482
        %v739 = vadd.f32 %v227, %v483
        %v740 = vadd.f32 %v228, %v484
        %v741 = vadd.f32 %v229, %v485
        %v742 = vadd.f32 %v230, %v486
        %v743 = vadd.f32 %v231, %v487
        %v744 = vadd.f32 %v232, %v488
        %v745 = vadd.f32 %v233, %v489
        %v746 = vadd.f32 %v234, %v490
        %v747 = vadd.f32 %v235, %v491
        %v748 = vadd.f32 %v236, %v492
        %v749 = vadd.f32 %v237, %v493
        %v750 = vadd.f32 %v238, %v494
        %v751 = vadd.f32 %v239, %v495
        %v752 = vadd.f32 %v240, %v496
        %v753 = vadd.f32 %v241, %v497
        %v754 = vadd.f32 %v242, %v498
        %v755 = vadd.f32 %v243, %v499
        %v756 = vadd.f32 %v244, %v500
        %v757 = vadd.f32 %v245, %v501
        %v758 = vadd.f32 %v246, %v502
        %v759 = vadd.f32 %v247, %v503
        %v760 = vadd.f32 %v248, %v504
        %v761 = vadd.f32 %v249, %v505
        %v762 = vadd.f32 %v250, %v506
        %v763 = vadd.f32 %v251, %v507
        %v764 = vadd.f32 %v252, %v508
        %v765 = vadd.f32 %v253, %v509
        %v766 = vadd.f32 %v254, %v510
        %v767 = vadd.f32 %v255, %v511
        %v768 = vadd.f32 %v256, %v512
        %v769 = vadd.f32 %v257, %v513
        %v770 = vadd.f32 %v258, %v514
        %v771 = vadd.f32 %v259, %v515
        %v772 = vadd.f32 %v260, %v516
        %v773 = vadd.f32 %v261, %v517
        %v774 = vadd.f32 %v262, %v518
        %v775 = vadd.f32 %v263, %v519
        %v776 = vadd.f32 %v264, %v520
        %v777 = vadd.f32 %v265, %v521
        %v778 = vadd.f32 %v266, %v522
        %v779 = vadd.f32 %v267, %v523
        %v780 = vadd.f32 %v268, %v524
        %v781 = vadd.f32 %v269, %v525
        %v782 = vadd.f32 %v270, %v526
        %v783 = vadd.f32 %v271, %v527
        %v784 = vadd.f32 %v272, %v528
        %v785 = vadd.f32 %v273, %v529
        %v786 = vadd.f32 %v274, %v530
        %v787 = vadd.f32 %v275, %v531
        %v788 = vadd.f32 %v276, %v532
        %v789 = vadd.f32 %v277, %v533
        %v790 = vadd.f32 %v278, %v534
        %v791 = vadd.f32 %v279, %v535
        %v792 = vadd.f32 %v280, %v536
        %v793 = vadd.f32 %v281, %v537
        %v794 = vadd.f32 %v282, %v538
        %v795 = vadd.f32 %v283, %v539
        %v796 = vadd.f32 %v284, %v540
        %v797 = vadd.f32 %v285, %v541
        %v798 = vadd.f32 %v286, %v542
        %v799 = vadd.f32 %v287, %v543
        %v800 = vadd.f32 %v288, %v544
        %v801 = vadd.f32 %v289, %v545
        %v802 = vadd.f32 %v290, %v546
        %v803 = vadd.f32 %v291, %v547
        %v804 = vadd.f32 %v292, %v548
        %v805 = vadd.f32 %v293, %v549
        %v806 = vadd.f32 %v294, %v550
        %v807 = vadd.f32 %v295, %v551
        %v808 = vadd.f32 %v296, %v552
        %v809 = vadd.f32 %v297, %v553
        %v810 = vadd.f32 %v298, %v554
        %v811 = vadd.f32 %v299, %v555
        %v812 = vadd.f32 %v300, %v556
        %v813 = vadd.f32 %v301, %v557
        %v814 = vadd.f32 %v302, %v558
        %v815 = vadd.f32 %v303, %v559
        %v816 = vadd.f32 %v304, %v560
        %v817 = vadd.f32 %v305, %v561
        %v818 = vadd.f32 %v306, %v562
        %v819 = vadd.f32 %v307, %v563
        %v820 = vadd.f32 %v308, %v564
        %v821 = vadd.f32 %v309, %v565
        %v822 = vadd.f32 %v310, %v566
        %v823 = vadd.f32 %v311, %v567
        %v824 = vadd.f32 %v312, %v568
        %v825 = vadd.f32 %v313, %v569
        %v826 = vadd.f32 %v314, %v570
        %v827 = vadd.f32 %v315, %v571
        %v828 = vadd.f32 %v316, %v572
        %v829 = vadd.f32 %v317, %v573
        %v830 = vadd.f32 %v318, %v574
        %v831 = vadd.f32 %v319, %v575
        %v832 = vadd.f32 %v320, %v576
        %v833 = vadd.f32 %v321, %v577
        %v834 = vadd.f32 %v322, %v578
        %v835 = vadd.f32 %v323, %v579
        %v836 = vadd.f32 %v324, %v580
        %v837 = vadd.f32 %v325, %v581
        %v838 = vadd.f32 %v326, %v582
        %v839 = vadd.f32 %v327, %v583
        %v840 = vadd.f32 %v328, %v584
        %v841 = vadd.f32 %v329, %v585
        %v842 = vadd.f32 %v330, %v586
        %v843 = vadd.f32 %v331, %v587
        %v844 = vadd.f32 %v332, %v588
        %v845 = vadd.f32 %v333, %v589
        %v846 = vadd.f32 %v334, %v590
        %v847 = vadd.f32 %v335, %v591
        %v848 = vadd.f32 %v336, %v592
        %v849 = vadd.f32 %v337, %v593
        %v850 = vadd.f32 %v338, %v594
        %v851 = vadd.f32 %v339, %v595
        %v852 = vadd.f32 %v340, %v596
        %v853 = vadd.f32 %v341, %v597
        %v854 = vadd.f32 %v342, %v598
        %v855 = vadd.f32 %v343, %v599
        %v856 = vadd.f32 %v344, %v600
        %v857 = vadd.f32 %v345, %v601
        %v858 = vadd.f32 %v346, %v602
        %v859 = vadd.f32 %v347, %v603
        %v860 = vadd.f32 %v348, %v604
        %v861 = vadd.f32 %v349, %v605
        %v862 = vadd.f32 %v350, %v606
        %v863 = vadd.f32 %v351, %v607
        %v864 = vadd.f32 %v352, %v608
        %v865 = vadd.f32 %v353, %v609
        %v866 = vadd.f32 %v354, %v610
        %v867 = vadd.f32 %v355, %v611
        %v868 = vadd.f32 %v356, %v612
        %v869 = vadd.f32 %v357, %v613
        %v870 = vadd.f32 %v358, %v614
        %v871 = vadd.f32 %v359, %v615
        %v872 = vadd.f32 %v360, %v616
        %v873 = vadd.f32 %v361, %v617
        %v874 = vadd.f32 %v362, %v618
        %v875 = vadd.f32 %v363, %v619
        %v876 = vadd.f32 %v364, %v620
        %v877 = vadd.f32 %v365, %v621
        %v878 = vadd.f32 %v366, %v622
        %v879 = vadd.f32 %v367, %v623
        %v880 = vadd.f32 %v368, %v624
        %v881 = vadd.f32 %v369, %v625
        %v882 = vadd.f32 %v370, %v626
        %v883 = vadd.f32 %v371, %v627
        %v884 = vadd.f32 %v372, %v628
        %v885 = vadd.f32 %v373, %v629
        %v886 = vadd.f32 %v374, %v630
        %v887 = vadd.f32 %v375, %v631
        %v888 = vadd.f32 %v376, %v632
        %v889 = vadd.f32 %v377, %v633
        %v890 = vadd.f32 %v378, %v634
        %v891 = vadd.f32 %v379, %v635
        %v892 = vadd.f32 %v380, %v636
        %v893 = vadd.f32 %v381, %v637
        %v894 = vadd.f32 %v382, %v638
        %v895 = vadd.f32 %v383, %v639
        %v896 = vadd.f32 %v384, %v640
        %v897 = vadd.f32 %v385, %v641
        %v898 = vadd.f32 %v386, %v642
        %v899 = vadd.f32 %v387, %v643
        %v900 = vadd.f32 %v388, %v644
        %v901 = vadd.f32 %v389, %v645
        %v902 = vadd.f32 %v390, %v646
        %v903 = vadd.f32 %v391, %v647
        %v904 = vadd.f32 %v392, %v648
        %v905 = vadd.f32 %v393, %v649
        %v906 = vadd.f32 %v394, %v650
        %v907 = vadd.f32 %v395, %v651
        %v908 = vadd.f32 %v396, %v652
        %v909 = vadd.f32 %v397, %v653
        %v910 = vadd.f32 %v398, %v654
        %v911 = vadd.f32 %v399, %v655
        %v912 = vadd.f32 %v400, %v656
        %v913 = vadd.f32 %v401, %v657
        %v914 = vadd.f32 %v402, %v658
        %v915 = vadd.f32 %v403, %v659
        %v916 = vadd.f32 %v404, %v660
        %v917 = vadd.f32 %v405, %v661
        %v918 = vadd.f32 %v406, %v662
        %v919 = vadd.f32 %v407, %v663
        %v920 = vadd.f32 %v408, %v664
        %v921 = vadd.f32 %v409, %v665
        %v922 = vadd.f32 %v410, %v666
        %v923 = vadd.f32 %v411, %v667
        %v924 = vadd.f32 %v412, %v668
        %v925 = vadd.f32 %v413, %v669
        %v926 = vadd.f32 %v414, %v670
        %v927 = vadd.f32 %v415, %v671
        %v928 = vadd.f32 %v416, %v672
        %v929 = vadd.f32 %v417, %v673
        %v930 = vadd.f32 %v418, %v674
        %v931 = vadd.f32 %v419, %v675
        %v932 = vadd.f32 %v420, %v676
        %v933 = vadd.f32 %v421, %v677
        %v934 = vadd.f32 %v422, %v678
        %v935 = vadd.f32 %v423, %v679
        %v936 = vadd.f32 %v424, %v680
        %v937 = vadd.f32 %v425, %v681
        %v938 = vadd.f32 %v426, %v682
        %v939 = vadd.f32 %v427, %v683
        %v940 = vadd.f32 %v428, %v684
        %v941 = vadd.f32 %v429, %v685
        %v942 = vadd.f32 %v430, %v686
        %v943 = vadd.f32 %v431, %v687
        %v944 = vadd.f32 %v432, %v688
        %v945 = vadd.f32 %v433, %v689
        %v946 = vadd.f32 %v434, %v690
        %v947 = vadd.f32 %v435, %v691
        %v948 = vadd.f32 %v436, %v692
        %v949 = vadd.f32 %v437, %v693
        %v950 = vadd.f32 %v438, %v694
        %v951 = vadd.f32 %v439, %v695
        %v952 = vadd.f32 %v440, %v696
        %v953 = vadd.f32 %v441, %v697
        %v954 = vadd.f32 %v442, %v698
        %v955 = vadd.f32 %v443, %v699
        %v956 = vadd.f32 %v444, %v700
        %v957 = vadd.f32 %v445, %v701
        %v958 = vadd.f32 %v446, %v702
        %v959 = vadd.f32 %v447, %v703
        %v960 = vadd.f32 %v448, %v704
        %v961 = vadd.f32 %v449, %v705
        %v962 = vadd.f32 %v450, %v706
        %v963 = vmax.f32 %v707, 0.0
        %v964 = vmax.f32 %v708, 0.0
        %v965 = vmax.f32 %v709, 0.0
        %v966 = vmax.f32 %v710, 0.0
        %v967 = vmax.f32 %v711, 0.0
        %v968 = vmax.f32 %v712, 0.0
        %v969 = vmax.f32 %v713, 0.0
        %v970 = vmax.f32 %v714, 0.0
        %v971 = vmax.f32 %v715, 0.0
        %v972 = vmax.f32 %v716, 0.0
        %v973 = vmax.f32 %v717, 0.0
        %v974 = vmax.f32 %v718, 0.0
        %v975 = vmax.f32 %v719, 0.0
        %v976 = vmax.f32 %v720, 0.0
        %v977 = vmax.f32 %v721, 0.0
        %v978 = vmax.f32 %v722, 0.0
        %v979 = vmax.f32 %v723, 0.0
        %v980 = vmax.f32 %v724, 0.0
        %v981 = vmax.f32 %v725, 0.0
        %v982 = vmax.f32 %v726, 0.0
        %v983 = vmax.f32 %v727, 0.0
        %v984 = vmax.f32 %v728, 0.0
        %v985 = vmax.f32 %v729, 0.0
        %v986 = vmax.f32 %v730, 0.0
        %v987 = vmax.f32 %v731, 0.0
        %v988 = vmax.f32 %v732, 0.0
        %v989 = vmax.f32 %v733, 0.0
        %v990 = vmax.f32 %v734, 0.0
        %v991 = vmax.f32 %v735, 0.0
        %v992 = vmax.f32 %v736, 0.0
        %v993 = vmax.f32 %v737, 0.0
        %v994 = vmax.f32 %v738, 0.0
        %v995 = vmax.f32 %v739, 0.0
        %v996 = vmax.f32 %v740, 0.0
        %v997 = vmax.f32 %v741, 0.0
        %v998 = vmax.f32 %v742, 0.0
        %v999 = vmax.f32 %v743, 0.0
        %v1000 = vmax.f32 %v744, 0.0
        %v1001 = vmax.f32 %v745, 0.0
        %v1002 = vmax.f32 %v746, 0.0
        %v1003 = vmax.f32 %v747, 0.0
        %v1004 = vmax.f32 %v748, 0.0
        %v1005 = vmax.f32 %v749, 0.0
        %v1006 = vmax.f32 %v750, 0.0
        %v1007 = vmax.f32 %v751, 0.0
        %v1008 = vmax.f32 %v752, 0.0
        %v1009 = vmax.f32 %v753, 0.0
        %v1010 = vmax.f32 %v754, 0.0
        %v1011 = vmax.f32 %v755, 0.0
        %v1012 = vmax.f32 %v756, 0.0
        %v1013 = vmax.f32 %v757, 0.0
        %v1014 = vmax.f32 %v758, 0.0
        %v1015 = vmax.f32 %v759, 0.0
        %v1016 = vmax.f32 %v760, 0.0
        %v1017 = vmax.f32 %v761, 0.0
        %v1018 = vmax.f32 %v762, 0.0
        %v1019 = vmax.f32 %v763, 0.0
        %v1020 = vmax.f32 %v764, 0.0
        %v1021 = vmax.f32 %v765, 0.0
        %v1022 = vmax.f32 %v766, 0.0
        %v1023 = vmax.f32 %v767, 0.0
        %v1024 = vmax.f32 %v768, 0.0
        %v1025 = vmax.f32 %v769, 0.0
        %v1026 = vmax.f32 %v770, 0.0
        %v1027 = vmax.f32 %v771, 0.0
        %v1028 = vmax.f32 %v772, 0.0
        %v1029 = vmax.f32 %v773, 0.0
        %v1030 = vmax.f32 %v774, 0.0
        %v1031 = vmax.f32 %v775, 0.0
        %v1032 = vmax.f32 %v776, 0.0
        %v1033 = vmax.f32 %v777, 0.0
        %v1034 = vmax.f32 %v778, 0.0
        %v1035 = vmax.f32 %v779, 0.0
        %v1036 = vmax.f32 %v780, 0.0
        %v1037 = vmax.f32 %v781, 0.0
        %v1038 = vmax.f32 %v782, 0.0
        %v1039 = vmax.f32 %v783, 0.0
        %v1040 = vmax.f32 %v784, 0.0
        %v1041 = vmax.f32 %v785, 0.0
        %v1042 = vmax.f32 %v786, 0.0
        %v1043 = vmax.f32 %v787, 0.0
        %v1044 = vmax.f32 %v788, 0.0
        %v1045 = vmax.f32 %v789, 0.0
        %v1046 = vmax.f32 %v790, 0.0
        %v1047 = vmax.f32 %v791, 0.0
        %v1048 = vmax.f32 %v792, 0.0
        %v1049 = vmax.f32 %v793, 0.0
        %v1050 = vmax.f32 %v794, 0.0
        %v1051 = vmax.f32 %v795, 0.0
        %v1052 = vmax.f32 %v796, 0.0
        %v1053 = vmax.f32 %v797, 0.0
        %v1054 = vmax.f32 %v798, 0.0
        %v1055 = vmax.f32 %v799, 0.0
        %v1056 = vmax.f32 %v800, 0.0
        %v1057 = vmax.f32 %v801, 0.0
        %v1058 = vmax.f32 %v802, 0.0
        %v1059 = vmax.f32 %v803, 0.0
        %v1060 = vmax.f32 %v804, 0.0
        %v1061 = vmax.f32 %v805, 0.0
        %v1062 = vmax.f32 %v806, 0.0
        %v1063 = vmax.f32 %v807, 0.0
        %v1064 = vmax.f32 %v808, 0.0
        %v1065 = vmax.f32 %v809, 0.0
        %v1066 = vmax.f32 %v810, 0.0
        %v1067 = vmax.f32 %v811, 0.0
        %v1068 = vmax.f32 %v812, 0.0
        %v1069 = vmax.f32 %v813, 0.0
        %v1070 = vmax.f32 %v814, 0.0
        %v1071 = vmax.f32 %v815, 0.0
        %v1072 = vmax.f32 %v816, 0.0
        %v1073 = vmax.f32 %v817, 0.0
        %v1074 = vmax.f32 %v818, 0.0
        %v1075 = vmax.f32 %v819, 0.0
        %v1076 = vmax.f32 %v820, 0.0
        %v1077 = vmax.f32 %v821, 0.0
        %v1078 = vmax.f32 %v822, 0.0
        %v1079 = vmax.f32 %v823, 0.0
        %v1080 = vmax.f32 %v824, 0.0
        %v1081 = vmax.f32 %v825, 0.0
        %v1082 = vmax.f32 %v826, 0.0
        %v1083 = vmax.f32 %v827, 0.0
        %v1084 = vmax.f32 %v828, 0.0
        %v1085 = vmax.f32 %v829, 0.0
        %v1086 = vmax.f32 %v830, 0.0
        %v1087 = vmax.f32 %v831, 0.0
        %v1088 = vmax.f32 %v832, 0.0
        %v1089 = vmax.f32 %v833, 0.0
        %v1090 = vmax.f32 %v834, 0.0
        %v1091 = vmax.f32 %v835, 0.0
        %v1092 = vmax.f32 %v836, 0.0
        %v1093 = vmax.f32 %v837, 0.0
        %v1094 = vmax.f32 %v838, 0.0
        %v1095 = vmax.f32 %v839, 0.0
        %v1096 = vmax.f32 %v840, 0.0
        %v1097 = vmax.f32 %v841, 0.0
        %v1098 = vmax.f32 %v842, 0.0
        %v1099 = vmax.f32 %v843, 0.0
        %v1100 = vmax.f32 %v844, 0.0
        %v1101 = vmax.f32 %v845, 0.0
        %v1102 = vmax.f32 %v846, 0.0
        %v1103 = vmax.f32 %v847, 0.0
        %v1104 = vmax.f32 %v848, 0.0
        %v1105 = vmax.f32 %v849, 0.0
        %v1106 = vmax.f32 %v850, 0.0
        %v1107 = vmax.f32 %v851, 0.0
        %v1108 = vmax.f32 %v852, 0.0
        %v1109 = vmax.f32 %v853, 0.0
        %v1110 = vmax.f32 %v854, 0.0
        %v1111 = vmax.f32 %v855, 0.0
        %v1112 = vmax.f32 %v856, 0.0
        %v1113 = vmax.f32 %v857, 0.0
        %v1114 = vmax.f32 %v858, 0.0
        %v1115 = vmax.f32 %v859, 0.0
        %v1116 = vmax.f32 %v860, 0.0
        %v1117 = vmax.f32 %v861, 0.0
        %v1118 = vmax.f32 %v862, 0.0
        %v1119 = vmax.f32 %v863, 0.0
        %v1120 = vmax.f32 %v864, 0.0
        %v1121 = vmax.f32 %v865, 0.0
        %v1122 = vmax.f32 %v866, 0.0
        %v1123 = vmax.f32 %v867, 0.0
        %v1124 = vmax.f32 %v868, 0.0
        %v1125 = vmax.f32 %v869, 0.0
        %v1126 = vmax.f32 %v870, 0.0
        %v1127 = vmax.f32 %v871, 0.0
        %v1128 = vmax.f32 %v872, 0.0
        %v1129 = vmax.f32 %v873, 0.0
        %v1130 = vmax.f32 %v874, 0.0
        %v1131 = vmax.f32 %v875, 0.0
        %v1132 = vmax.f32 %v876, 0.0
        %v1133 = vmax.f32 %v877, 0.0
        %v1134 = vmax.f32 %v878, 0.0
        %v1135 = vmax.f32 %v879, 0.0
        %v1136 = vmax.f32 %v880, 0.0
        %v1137 = vmax.f32 %v881, 0.0
        %v1138 = vmax.f32 %v882, 0.0
        %v1139 = vmax.f32 %v883, 0.0
        %v1140 = vmax.f32 %v884, 0.0
        %v1141 = vmax.f32 %v885, 0.0
        %v1142 = vmax.f32 %v886, 0.0
        %v1143 = vmax.f32 %v887, 0.0
        %v1144 = vmax.f32 %v888, 0.0
        %v1145 = vmax.f32 %v889, 0.0
        %v1146 = vmax.f32 %v890, 0.0
        %v1147 = vmax.f32 %v891, 0.0
        %v1148 = vmax.f32 %v892, 0.0
        %v1149 = vmax.f32 %v893, 0.0
        %v1150 = vmax.f32 %v894, 0.0
        %v1151 = vmax.f32 %v895, 0.0
        %v1152 = vmax.f32 %v896, 0.0
        %v1153 = vmax.f32 %v897, 0.0
        %v1154 = vmax.f32 %v898, 0.0
        %v1155 = vmax.f32 %v899, 0.0
        %v1156 = vmax.f32 %v900, 0.0
        %v1157 = vmax.f32 %v901, 0.0
        %v1158 = vmax.f32 %v902, 0.0
        %v1159 = vmax.f32 %v903, 0.0
        %v1160 = vmax.f32 %v904, 0.0
        %v1161 = vmax.f32 %v905, 0.0
        %v1162 = vmax.f32 %v906, 0.0
        %v1163 = vmax.f32 %v907, 0.0
        %v1164 = vmax.f32 %v908, 0.0
        %v1165 = vmax.f32 %v909, 0.0
        %v1166 = vmax.f32 %v910, 0.0
        %v1167 = vmax.f32 %v911, 0.0
        %v1168 = vmax.f32 %v912, 0.0
        %v1169 = vmax.f32 %v913, 0.0
        %v1170 = vmax.f32 %v914, 0.0
        %v1171 = vmax.f32 %v915, 0.0
        %v1172 = vmax.f32 %v916, 0.0
        %v1173 = vmax.f32 %v917, 0.0
        %v1174 = vmax.f32 %v918, 0.0
        %v1175 = vmax.f32 %v919, 0.0
        %v1176 = vmax.f32 %v920, 0.0
        %v1177 = vmax.f32 %v921, 0.0
        %v1178 = vmax.f32 %v922, 0.0
        %v1179 = vmax.f32 %v923, 0.0
        %v1180 = vmax.f32 %v924, 0.0
        %v1181 = vmax.f32 %v925, 0.0
        %v1182 = vmax.f32 %v926, 0.0
        %v1183 = vmax.f32 %v927, 0.0
        %v1184 = vmax.f32 %v928, 0.0
        %v1185 = vmax.f32 %v929, 0.0
        %v1186 = vmax.f32 %v930, 0.0
        %v1187 = vmax.f32 %v931, 0.0
        %v1188 = vmax.f32 %v932, 0.0
        %v1189 = vmax.f32 %v933, 0.0
        %v1190 = vmax.f32 %v934, 0.0
        %v1191 = vmax.f32 %v935, 0.0
        %v1192 = vmax.f32 %v936, 0.0
        %v1193 = vmax.f32 %v937, 0.0
        %v1194 = vmax.f32 %v938, 0.0
        %v1195 = vmax.f32 %v939, 0.0
        %v1196 = vmax.f32 %v940, 0.0
        %v1197 = vmax.f32 %v941, 0.0
        %v1198 = vmax.f32 %v942, 0.0
        %v1199 = vmax.f32 %v943, 0.0
        %v1200 = vmax.f32 %v944, 0.0
        %v1201 = vmax.f32 %v945, 0.0
        %v1202 = vmax.f32 %v946, 0.0
        %v1203 = vmax.f32 %v947, 0.0
        %v1204 = vmax.f32 %v948, 0.0
        %v1205 = vmax.f32 %v949, 0.0
        %v1206 = vmax.f32 %v950, 0.0
        %v1207 = vmax.f32 %v951, 0.0
        %v1208 = vmax.f32 %v952, 0.0
        %v1209 = vmax.f32 %v953, 0.0
        %v1210 = vmax.f32 %v954, 0.0
        %v1211 = vmax.f32 %v955, 0.0
        %v1212 = vmax.f32 %v956, 0.0
        %v1213 = vmax.f32 %v957, 0.0
        %v1214 = vmax.f32 %v958, 0.0
        %v1215 = vmax.f32 %v959, 0.0
        %v1216 = vmax.f32 %v960, 0.0
        %v1217 = vmax.f32 %v961, 0.0
        %v1218 = vmax.f32 %v962, 0.0
        %v1219 = vpack.c.bf16 %v964, %v963
        %v1220 = vpack.c.bf16 %v966, %v965
        %v1221 = vpack.c.bf16 %v968, %v967
        %v1222 = vpack.c.bf16 %v970, %v969
        %v1223 = vpack.c.bf16 %v972, %v971
        %v1224 = vpack.c.bf16 %v974, %v973
        %v1225 = vpack.c.bf16 %v976, %v975
        %v1226 = vpack.c.bf16 %v978, %v977
        %v1227 = vpack.c.bf16 %v980, %v979
        %v1228 = vpack.c.bf16 %v982, %v981
        %v1229 = vpack.c.bf16 %v984, %v983
        %v1230 = vpack.c.bf16 %v986, %v985
        %v1231 = vpack.c.bf16 %v988, %v987
        %v1232 = vpack.c.bf16 %v990, %v989
        %v1233 = vpack.c.bf16 %v992, %v991
        %v1234 = vpack.c.bf16 %v994, %v993
        %v1235 = vpack.c.bf16 %v996, %v995
        %v1236 = vpack.c.bf16 %v998, %v997
        %v1237 = vpack.c.bf16 %v1000, %v999
        %v1238 = vpack.c.bf16 %v1002, %v1001
        %v1239 = vpack.c.bf16 %v1004, %v1003
        %v1240 = vpack.c.bf16 %v1006, %v1005
        %v1241 = vpack.c.bf16 %v1008, %v1007
        %v1242 = vpack.c.bf16 %v1010, %v1009
        %v1243 = vpack.c.bf16 %v1012, %v1011
        %v1244 = vpack.c.bf16 %v1014, %v1013
        %v1245 = vpack.c.bf16 %v1016, %v1015
        %v1246 = vpack.c.bf16 %v1018, %v1017
        %v1247 = vpack.c.bf16 %v1020, %v1019
        %v1248 = vpack.c.bf16 %v1022, %v1021
        %v1249 = vpack.c.bf16 %v1024, %v1023
        %v1250 = vpack.c.bf16 %v1026, %v1025
        %v1251 = vpack.c.bf16 %v1028, %v1027
        %v1252 = vpack.c.bf16 %v1030, %v1029
        %v1253 = vpack.c.bf16 %v1032, %v1031
        %v1254 = vpack.c.bf16 %v1034, %v1033
        %v1255 = vpack.c.bf16 %v1036, %v1035
        %v1256 = vpack.c.bf16 %v1038, %v1037
        %v1257 = vpack.c.bf16 %v1040, %v1039
        %v1258 = vpack.c.bf16 %v1042, %v1041
        %v1259 = vpack.c.bf16 %v1044, %v1043
        %v1260 = vpack.c.bf16 %v1046, %v1045
        %v1261 = vpack.c.bf16 %v1048, %v1047
        %v1262 = vpack.c.bf16 %v1050, %v1049
        %v1263 = vpack.c.bf16 %v1052, %v1051
        %v1264 = vpack.c.bf16 %v1054, %v1053
        %v1265 = vpack.c.bf16 %v1056, %v1055
        %v1266 = vpack.c.bf16 %v1058, %v1057
        %v1267 = vpack.c.bf16 %v1060, %v1059
        %v1268 = vpack.c.bf16 %v1062, %v1061
        %v1269 = vpack.c.bf16 %v1064, %v1063
        %v1270 = vpack.c.bf16 %v1066, %v1065
        %v1271 = vpack.c.bf16 %v1068, %v1067
        %v1272 = vpack.c.bf16 %v1070, %v1069
        %v1273 = vpack.c.bf16 %v1072, %v1071
        %v1274 = vpack.c.bf16 %v1074, %v1073
        %v1275 = vpack.c.bf16 %v1076, %v1075
        %v1276 = vpack.c.bf16 %v1078, %v1077
        %v1277 = vpack.c.bf16 %v1080, %v1079
        %v1278 = vpack.c.bf16 %v1082, %v1081
        %v1279 = vpack.c.bf16 %v1084, %v1083
        %v1280 = vpack.c.bf16 %v1086, %v1085
        %v1281 = vpack.c.bf16 %v1088, %v1087
        %v1282 = vpack.c.bf16 %v1090, %v1089
        %v1283 = vpack.c.bf16 %v1092, %v1091
        %v1284 = vpack.c.bf16 %v1094, %v1093
        %v1285 = vpack.c.bf16 %v1096, %v1095
        %v1286 = vpack.c.bf16 %v1098, %v1097
        %v1287 = vpack.c.bf16 %v1100, %v1099
        %v1288 = vpack.c.bf16 %v1102, %v1101
        %v1289 = vpack.c.bf16 %v1104, %v1103
        %v1290 = vpack.c.bf16 %v1106, %v1105
        %v1291 = vpack.c.bf16 %v1108, %v1107
        %v1292 = vpack.c.bf16 %v1110, %v1109
        %v1293 = vpack.c.bf16 %v1112, %v1111
        %v1294 = vpack.c.bf16 %v1114, %v1113
        %v1295 = vpack.c.bf16 %v1116, %v1115
        %v1296 = vpack.c.bf16 %v1118, %v1117
        %v1297 = vpack.c.bf16 %v1120, %v1119
        %v1298 = vpack.c.bf16 %v1122, %v1121
        %v1299 = vpack.c.bf16 %v1124, %v1123
        %v1300 = vpack.c.bf16 %v1126, %v1125
        %v1301 = vpack.c.bf16 %v1128, %v1127
        %v1302 = vpack.c.bf16 %v1130, %v1129
        %v1303 = vpack.c.bf16 %v1132, %v1131
        %v1304 = vpack.c.bf16 %v1134, %v1133
        %v1305 = vpack.c.bf16 %v1136, %v1135
        %v1306 = vpack.c.bf16 %v1138, %v1137
        %v1307 = vpack.c.bf16 %v1140, %v1139
        %v1308 = vpack.c.bf16 %v1142, %v1141
        %v1309 = vpack.c.bf16 %v1144, %v1143
        %v1310 = vpack.c.bf16 %v1146, %v1145
        %v1311 = vpack.c.bf16 %v1148, %v1147
        %v1312 = vpack.c.bf16 %v1150, %v1149
        %v1313 = vpack.c.bf16 %v1152, %v1151
        %v1314 = vpack.c.bf16 %v1154, %v1153
        %v1315 = vpack.c.bf16 %v1156, %v1155
        %v1316 = vpack.c.bf16 %v1158, %v1157
        %v1317 = vpack.c.bf16 %v1160, %v1159
        %v1318 = vpack.c.bf16 %v1162, %v1161
        %v1319 = vpack.c.bf16 %v1164, %v1163
        %v1320 = vpack.c.bf16 %v1166, %v1165
        %v1321 = vpack.c.bf16 %v1168, %v1167
        %v1322 = vpack.c.bf16 %v1170, %v1169
        %v1323 = vpack.c.bf16 %v1172, %v1171
        %v1324 = vpack.c.bf16 %v1174, %v1173
        %v1325 = vpack.c.bf16 %v1176, %v1175
        %v1326 = vpack.c.bf16 %v1178, %v1177
        %v1327 = vpack.c.bf16 %v1180, %v1179
        %v1328 = vpack.c.bf16 %v1182, %v1181
        %v1329 = vpack.c.bf16 %v1184, %v1183
        %v1330 = vpack.c.bf16 %v1186, %v1185
        %v1331 = vpack.c.bf16 %v1188, %v1187
        %v1332 = vpack.c.bf16 %v1190, %v1189
        %v1333 = vpack.c.bf16 %v1192, %v1191
        %v1334 = vpack.c.bf16 %v1194, %v1193
        %v1335 = vpack.c.bf16 %v1196, %v1195
        %v1336 = vpack.c.bf16 %v1198, %v1197
        %v1337 = vpack.c.bf16 %v1200, %v1199
        %v1338 = vpack.c.bf16 %v1202, %v1201
        %v1339 = vpack.c.bf16 %v1204, %v1203
        %v1340 = vpack.c.bf16 %v1206, %v1205
        %v1341 = vpack.c.bf16 %v1208, %v1207
        %v1342 = vpack.c.bf16 %v1210, %v1209
        %v1343 = vpack.c.bf16 %v1212, %v1211
        %v1344 = vpack.c.bf16 %v1214, %v1213
        %v1345 = vpack.c.bf16 %v1216, %v1215
        %v1346 = vpack.c.bf16 %v1218, %v1217
        %v1347 = vld [vmem:[%s164] sm:$0xff]
        %v1348 = vld [vmem:[%s164 + $0x8] sm:$0xff]
        %v1349 = vld [vmem:[%s164 + $0x10] sm:$0xff]
        %v1350 = vld [vmem:[%s164 + $0x18] sm:$0xff]
        %v1351 = vld [vmem:[%s164 + $0x20] sm:$0xff]
        %v1352 = vld [vmem:[%s164 + $0x28] sm:$0xff]
        %v1353 = vld [vmem:[%s164 + $0x30] sm:$0xff]
        %v1354 = vld [vmem:[%s164 + $0x38] sm:$0xff]
        %v1355 = vld [vmem:[%s164 + $0x40] sm:$0xff]
        %v1356 = vld [vmem:[%s164 + $0x48] sm:$0xff]
        %v1357 = vld [vmem:[%s164 + $0x50] sm:$0xff]
        %v1358 = vld [vmem:[%s164 + $0x58] sm:$0xff]
        %v1359 = vld [vmem:[%s164 + $0x60] sm:$0xff]
        %v1360 = vld [vmem:[%s164 + $0x68] sm:$0xff]
        %v1361 = vld [vmem:[%s164 + $0x70] sm:$0xff]
        %v1362 = vld [vmem:[%s164 + $0x78] sm:$0xff]
        %v1363 = vld [vmem:[%s164 + $0x80] sm:$0xff]
        %v1364 = vld [vmem:[%s164 + $0x88] sm:$0xff]
        %v1365 = vld [vmem:[%s164 + $0x90] sm:$0xff]
        %v1366 = vld [vmem:[%s164 + $0x98] sm:$0xff]
        %v1367 = vld [vmem:[%s164 + $0xa0] sm:$0xff]
        %v1368 = vld [vmem:[%s164 + $0xa8] sm:$0xff]
        %v1369 = vld [vmem:[%s164 + $0xb0] sm:$0xff]
        %v1370 = vld [vmem:[%s164 + $0xb8] sm:$0xff]
        %v1371 = vld [vmem:[%s164 + $0xc0] sm:$0xff]
        %v1372 = vld [vmem:[%s164 + $0xc8] sm:$0xff]
        %v1373 = vld [vmem:[%s164 + $0xd0] sm:$0xff]
        %v1374 = vld [vmem:[%s164 + $0xd8] sm:$0xff]
        %v1375 = vld [vmem:[%s164 + $0xe0] sm:$0xff]
        %v1376 = vld [vmem:[%s164 + $0xe8] sm:$0xff]
        %v1377 = vld [vmem:[%s164 + $0xf0] sm:$0xff]
        %v1378 = vld [vmem:[%s164 + $0xf8] sm:$0xff]
        %v1379 = vld [vmem:[%s164 + $0x100] sm:$0xff]
        %v1380 = vld [vmem:[%s164 + $0x108] sm:$0xff]
        %v1381 = vld [vmem:[%s164 + $0x110] sm:$0xff]
        %v1382 = vld [vmem:[%s164 + $0x118] sm:$0xff]
        %v1383 = vld [vmem:[%s164 + $0x120] sm:$0xff]
        %v1384 = vld [vmem:[%s164 + $0x128] sm:$0xff]
        %v1385 = vld [vmem:[%s164 + $0x130] sm:$0xff]
        %v1386 = vld [vmem:[%s164 + $0x138] sm:$0xff]
        %v1387 = vld [vmem:[%s164 + $0x140] sm:$0xff]
        %v1388 = vld [vmem:[%s164 + $0x148] sm:$0xff]
        %v1389 = vld [vmem:[%s164 + $0x150] sm:$0xff]
        %v1390 = vld [vmem:[%s164 + $0x158] sm:$0xff]
        %v1391 = vld [vmem:[%s164 + $0x160] sm:$0xff]
        %v1392 = vld [vmem:[%s164 + $0x168] sm:$0xff]
        %v1393 = vld [vmem:[%s164 + $0x170] sm:$0xff]
        %v1394 = vld [vmem:[%s164 + $0x178] sm:$0xff]
        %v1395 = vld [vmem:[%s164 + $0x180] sm:$0xff]
        %v1396 = vld [vmem:[%s164 + $0x188] sm:$0xff]
        %v1397 = vld [vmem:[%s164 + $0x190] sm:$0xff]
        %v1398 = vld [vmem:[%s164 + $0x198] sm:$0xff]
        %v1399 = vld [vmem:[%s164 + $0x1a0] sm:$0xff]
        %v1400 = vld [vmem:[%s164 + $0x1a8] sm:$0xff]
        %v1401 = vld [vmem:[%s164 + $0x1b0] sm:$0xff]
        %v1402 = vld [vmem:[%s164 + $0x1b8] sm:$0xff]
        %v1403 = vld [vmem:[%s164 + $0x1c0] sm:$0xff]
        %v1404 = vld [vmem:[%s164 + $0x1c8] sm:$0xff]
        %v1405 = vld [vmem:[%s164 + $0x1d0] sm:$0xff]
        %v1406 = vld [vmem:[%s164 + $0x1d8] sm:$0xff]
        %v1407 = vld [vmem:[%s164 + $0x1e0] sm:$0xff]
        %v1408 = vld [vmem:[%s164 + $0x1e8] sm:$0xff]
        %v1409 = vld [vmem:[%s164 + $0x1f0] sm:$0xff]
        %v1410 = vld [vmem:[%s164 + $0x1f8] sm:$0xff]
        %v1411 = vld [vmem:[%s164 + $0x200] sm:$0xff]
        %v1412 = vld [vmem:[%s164 + $0x208] sm:$0xff]
        %v1413 = vld [vmem:[%s164 + $0x210] sm:$0xff]
        %v1414 = vld [vmem:[%s164 + $0x218] sm:$0xff]
        %v1415 = vld [vmem:[%s164 + $0x220] sm:$0xff]
        %v1416 = vld [vmem:[%s164 + $0x228] sm:$0xff]
        %v1417 = vld [vmem:[%s164 + $0x230] sm:$0xff]
        %v1418 = vld [vmem:[%s164 + $0x238] sm:$0xff]
        %v1419 = vld [vmem:[%s164 + $0x240] sm:$0xff]
        %v1420 = vld [vmem:[%s164 + $0x248] sm:$0xff]
        %v1421 = vld [vmem:[%s164 + $0x250] sm:$0xff]
        %v1422 = vld [vmem:[%s164 + $0x258] sm:$0xff]
        %v1423 = vld [vmem:[%s164 + $0x260] sm:$0xff]
        %v1424 = vld [vmem:[%s164 + $0x268] sm:$0xff]
        %v1425 = vld [vmem:[%s164 + $0x270] sm:$0xff]
        %v1426 = vld [vmem:[%s164 + $0x278] sm:$0xff]
        %v1427 = vld [vmem:[%s164 + $0x280] sm:$0xff]
        %v1428 = vld [vmem:[%s164 + $0x288] sm:$0xff]
        %v1429 = vld [vmem:[%s164 + $0x290] sm:$0xff]
        %v1430 = vld [vmem:[%s164 + $0x298] sm:$0xff]
        %v1431 = vld [vmem:[%s164 + $0x2a0] sm:$0xff]
        %v1432 = vld [vmem:[%s164 + $0x2a8] sm:$0xff]
        %v1433 = vld [vmem:[%s164 + $0x2b0] sm:$0xff]
        %v1434 = vld [vmem:[%s164 + $0x2b8] sm:$0xff]
        %v1435 = vld [vmem:[%s164 + $0x2c0] sm:$0xff]
        %v1436 = vld [vmem:[%s164 + $0x2c8] sm:$0xff]
        %v1437 = vld [vmem:[%s164 + $0x2d0] sm:$0xff]
        %v1438 = vld [vmem:[%s164 + $0x2d8] sm:$0xff]
        %v1439 = vld [vmem:[%s164 + $0x2e0] sm:$0xff]
        %v1440 = vld [vmem:[%s164 + $0x2e8] sm:$0xff]
        %v1441 = vld [vmem:[%s164 + $0x2f0] sm:$0xff]
        %v1442 = vld [vmem:[%s164 + $0x2f8] sm:$0xff]
        %v1443 = vld [vmem:[%s164 + $0x300] sm:$0xff]
        %v1444 = vld [vmem:[%s164 + $0x308] sm:$0xff]
        %v1445 = vld [vmem:[%s164 + $0x310] sm:$0xff]
        %v1446 = vld [vmem:[%s164 + $0x318] sm:$0xff]
        %v1447 = vld [vmem:[%s164 + $0x320] sm:$0xff]
        %v1448 = vld [vmem:[%s164 + $0x328] sm:$0xff]
        %v1449 = vld [vmem:[%s164 + $0x330] sm:$0xff]
        %v1450 = vld [vmem:[%s164 + $0x338] sm:$0xff]
        %v1451 = vld [vmem:[%s164 + $0x340] sm:$0xff]
        %v1452 = vld [vmem:[%s164 + $0x348] sm:$0xff]
        %v1453 = vld [vmem:[%s164 + $0x350] sm:$0xff]
        %v1454 = vld [vmem:[%s164 + $0x358] sm:$0xff]
        %v1455 = vld [vmem:[%s164 + $0x360] sm:$0xff]
        %v1456 = vld [vmem:[%s164 + $0x368] sm:$0xff]
        %v1457 = vld [vmem:[%s164 + $0x370] sm:$0xff]
        %v1458 = vld [vmem:[%s164 + $0x378] sm:$0xff]
        %v1459 = vld [vmem:[%s164 + $0x380] sm:$0xff]
        %v1460 = vld [vmem:[%s164 + $0x388] sm:$0xff]
        %v1461 = vld [vmem:[%s164 + $0x390] sm:$0xff]
        %v1462 = vld [vmem:[%s164 + $0x398] sm:$0xff]
        %v1463 = vld [vmem:[%s164 + $0x3a0] sm:$0xff]
        %v1464 = vld [vmem:[%s164 + $0x3a8] sm:$0xff]
        %v1465 = vld [vmem:[%s164 + $0x3b0] sm:$0xff]
        %v1466 = vld [vmem:[%s164 + $0x3b8] sm:$0xff]
        %v1467 = vld [vmem:[%s164 + $0x3c0] sm:$0xff]
        %v1468 = vld [vmem:[%s164 + $0x3c8] sm:$0xff]
        %v1469 = vld [vmem:[%s164 + $0x3d0] sm:$0xff]
        %v1470 = vld [vmem:[%s164 + $0x3d8] sm:$0xff]
        %v1471 = vld [vmem:[%s164 + $0x3e0] sm:$0xff]
        %v1472 = vld [vmem:[%s164 + $0x3e8] sm:$0xff]
        %v1473 = vld [vmem:[%s164 + $0x3f0] sm:$0xff]
        %v1474 = vld [vmem:[%s164 + $0x3f8] sm:$0xff]
        %v1475 = vld [vmem:[%s164 + $0x400] sm:$0xff]
        %v1476 = vld [vmem:[%s164 + $0x408] sm:$0xff]
        %v1477 = vld [vmem:[%s164 + $0x410] sm:$0xff]
        %v1478 = vld [vmem:[%s164 + $0x418] sm:$0xff]
        %v1479 = vld [vmem:[%s164 + $0x420] sm:$0xff]
        %v1480 = vld [vmem:[%s164 + $0x428] sm:$0xff]
        %v1481 = vld [vmem:[%s164 + $0x430] sm:$0xff]
        %v1482 = vld [vmem:[%s164 + $0x438] sm:$0xff]
        %v1483 = vld [vmem:[%s164 + $0x440] sm:$0xff]
        %v1484 = vld [vmem:[%s164 + $0x448] sm:$0xff]
        %v1485 = vld [vmem:[%s164 + $0x450] sm:$0xff]
        %v1486 = vld [vmem:[%s164 + $0x458] sm:$0xff]
        %v1487 = vld [vmem:[%s164 + $0x460] sm:$0xff]
        %v1488 = vld [vmem:[%s164 + $0x468] sm:$0xff]
        %v1489 = vld [vmem:[%s164 + $0x470] sm:$0xff]
        %v1490 = vld [vmem:[%s164 + $0x478] sm:$0xff]
        %v1491 = vld [vmem:[%s164 + $0x480] sm:$0xff]
        %v1492 = vld [vmem:[%s164 + $0x488] sm:$0xff]
        %v1493 = vld [vmem:[%s164 + $0x490] sm:$0xff]
        %v1494 = vld [vmem:[%s164 + $0x498] sm:$0xff]
        %v1495 = vld [vmem:[%s164 + $0x4a0] sm:$0xff]
        %v1496 = vld [vmem:[%s164 + $0x4a8] sm:$0xff]
        %v1497 = vld [vmem:[%s164 + $0x4b0] sm:$0xff]
        %v1498 = vld [vmem:[%s164 + $0x4b8] sm:$0xff]
        %v1499 = vld [vmem:[%s164 + $0x4c0] sm:$0xff]
        %v1500 = vld [vmem:[%s164 + $0x4c8] sm:$0xff]
        %v1501 = vld [vmem:[%s164 + $0x4d0] sm:$0xff]
        %v1502 = vld [vmem:[%s164 + $0x4d8] sm:$0xff]
        %v1503 = vld [vmem:[%s164 + $0x4e0] sm:$0xff]
        %v1504 = vld [vmem:[%s164 + $0x4e8] sm:$0xff]
        %v1505 = vld [vmem:[%s164 + $0x4f0] sm:$0xff]
        %v1506 = vld [vmem:[%s164 + $0x4f8] sm:$0xff]
        %v1507 = vld [vmem:[%s164 + $0x500] sm:$0xff]
        %v1508 = vld [vmem:[%s164 + $0x508] sm:$0xff]
        %v1509 = vld [vmem:[%s164 + $0x510] sm:$0xff]
        %v1510 = vld [vmem:[%s164 + $0x518] sm:$0xff]
        %v1511 = vld [vmem:[%s164 + $0x520] sm:$0xff]
        %v1512 = vld [vmem:[%s164 + $0x528] sm:$0xff]
        %v1513 = vld [vmem:[%s164 + $0x530] sm:$0xff]
        %v1514 = vld [vmem:[%s164 + $0x538] sm:$0xff]
        %v1515 = vld [vmem:[%s164 + $0x540] sm:$0xff]
        %v1516 = vld [vmem:[%s164 + $0x548] sm:$0xff]
        %v1517 = vld [vmem:[%s164 + $0x550] sm:$0xff]
        %v1518 = vld [vmem:[%s164 + $0x558] sm:$0xff]
        %v1519 = vld [vmem:[%s164 + $0x560] sm:$0xff]
        %v1520 = vld [vmem:[%s164 + $0x568] sm:$0xff]
        %v1521 = vld [vmem:[%s164 + $0x570] sm:$0xff]
        %v1522 = vld [vmem:[%s164 + $0x578] sm:$0xff]
        %v1523 = vld [vmem:[%s164 + $0x580] sm:$0xff]
        %v1524 = vld [vmem:[%s164 + $0x588] sm:$0xff]
        %v1525 = vld [vmem:[%s164 + $0x590] sm:$0xff]
        %v1526 = vld [vmem:[%s164 + $0x598] sm:$0xff]
        %v1527 = vld [vmem:[%s164 + $0x5a0] sm:$0xff]
        %v1528 = vld [vmem:[%s164 + $0x5a8] sm:$0xff]
        %v1529 = vld [vmem:[%s164 + $0x5b0] sm:$0xff]
        %v1530 = vld [vmem:[%s164 + $0x5b8] sm:$0xff]
        %v1531 = vld [vmem:[%s164 + $0x5c0] sm:$0xff]
        %v1532 = vld [vmem:[%s164 + $0x5c8] sm:$0xff]
        %v1533 = vld [vmem:[%s164 + $0x5d0] sm:$0xff]
        %v1534 = vld [vmem:[%s164 + $0x5d8] sm:$0xff]
        %v1535 = vld [vmem:[%s164 + $0x5e0] sm:$0xff]
        %v1536 = vld [vmem:[%s164 + $0x5e8] sm:$0xff]
        %v1537 = vld [vmem:[%s164 + $0x5f0] sm:$0xff]
        %v1538 = vld [vmem:[%s164 + $0x5f8] sm:$0xff]
        %v1539 = vld [vmem:[%s164 + $0x600] sm:$0xff]
        %v1540 = vld [vmem:[%s164 + $0x608] sm:$0xff]
        %v1541 = vld [vmem:[%s164 + $0x610] sm:$0xff]
        %v1542 = vld [vmem:[%s164 + $0x618] sm:$0xff]
        %v1543 = vld [vmem:[%s164 + $0x620] sm:$0xff]
        %v1544 = vld [vmem:[%s164 + $0x628] sm:$0xff]
        %v1545 = vld [vmem:[%s164 + $0x630] sm:$0xff]
        %v1546 = vld [vmem:[%s164 + $0x638] sm:$0xff]
        %v1547 = vld [vmem:[%s164 + $0x640] sm:$0xff]
        %v1548 = vld [vmem:[%s164 + $0x648] sm:$0xff]
        %v1549 = vld [vmem:[%s164 + $0x650] sm:$0xff]
        %v1550 = vld [vmem:[%s164 + $0x658] sm:$0xff]
        %v1551 = vld [vmem:[%s164 + $0x660] sm:$0xff]
        %v1552 = vld [vmem:[%s164 + $0x668] sm:$0xff]
        %v1553 = vld [vmem:[%s164 + $0x670] sm:$0xff]
        %v1554 = vld [vmem:[%s164 + $0x678] sm:$0xff]
        %v1555 = vld [vmem:[%s164 + $0x680] sm:$0xff]
        %v1556 = vld [vmem:[%s164 + $0x688] sm:$0xff]
        %v1557 = vld [vmem:[%s164 + $0x690] sm:$0xff]
        %v1558 = vld [vmem:[%s164 + $0x698] sm:$0xff]
        %v1559 = vld [vmem:[%s164 + $0x6a0] sm:$0xff]
        %v1560 = vld [vmem:[%s164 + $0x6a8] sm:$0xff]
        %v1561 = vld [vmem:[%s164 + $0x6b0] sm:$0xff]
        %v1562 = vld [vmem:[%s164 + $0x6b8] sm:$0xff]
        %v1563 = vld [vmem:[%s164 + $0x6c0] sm:$0xff]
        %v1564 = vld [vmem:[%s164 + $0x6c8] sm:$0xff]
        %v1565 = vld [vmem:[%s164 + $0x6d0] sm:$0xff]
        %v1566 = vld [vmem:[%s164 + $0x6d8] sm:$0xff]
        %v1567 = vld [vmem:[%s164 + $0x6e0] sm:$0xff]
        %v1568 = vld [vmem:[%s164 + $0x6e8] sm:$0xff]
        %v1569 = vld [vmem:[%s164 + $0x6f0] sm:$0xff]
        %v1570 = vld [vmem:[%s164 + $0x6f8] sm:$0xff]
        %v1571 = vld [vmem:[%s164 + $0x700] sm:$0xff]
        %v1572 = vld [vmem:[%s164 + $0x708] sm:$0xff]
        %v1573 = vld [vmem:[%s164 + $0x710] sm:$0xff]
        %v1574 = vld [vmem:[%s164 + $0x718] sm:$0xff]
        %v1575 = vld [vmem:[%s164 + $0x720] sm:$0xff]
        %v1576 = vld [vmem:[%s164 + $0x728] sm:$0xff]
        %v1577 = vld [vmem:[%s164 + $0x730] sm:$0xff]
        %v1578 = vld [vmem:[%s164 + $0x738] sm:$0xff]
        %v1579 = vld [vmem:[%s164 + $0x740] sm:$0xff]
        %v1580 = vld [vmem:[%s164 + $0x748] sm:$0xff]
        %v1581 = vld [vmem:[%s164 + $0x750] sm:$0xff]
        %v1582 = vld [vmem:[%s164 + $0x758] sm:$0xff]
        %v1583 = vld [vmem:[%s164 + $0x760] sm:$0xff]
        %v1584 = vld [vmem:[%s164 + $0x768] sm:$0xff]
        %v1585 = vld [vmem:[%s164 + $0x770] sm:$0xff]
        %v1586 = vld [vmem:[%s164 + $0x778] sm:$0xff]
        %v1587 = vld [vmem:[%s164 + $0x780] sm:$0xff]
        %v1588 = vld [vmem:[%s164 + $0x788] sm:$0xff]
        %v1589 = vld [vmem:[%s164 + $0x790] sm:$0xff]
        %v1590 = vld [vmem:[%s164 + $0x798] sm:$0xff]
        %v1591 = vld [vmem:[%s164 + $0x7a0] sm:$0xff]
        %v1592 = vld [vmem:[%s164 + $0x7a8] sm:$0xff]
        %v1593 = vld [vmem:[%s164 + $0x7b0] sm:$0xff]
        %v1594 = vld [vmem:[%s164 + $0x7b8] sm:$0xff]
        %v1595 = vld [vmem:[%s164 + $0x7c0] sm:$0xff]
        %v1596 = vld [vmem:[%s164 + $0x7c8] sm:$0xff]
        %v1597 = vld [vmem:[%s164 + $0x7d0] sm:$0xff]
        %v1598 = vld [vmem:[%s164 + $0x7d8] sm:$0xff]
        %v1599 = vld [vmem:[%s164 + $0x7e0] sm:$0xff]
        %v1600 = vld [vmem:[%s164 + $0x7e8] sm:$0xff]
        %v1601 = vld [vmem:[%s164 + $0x7f0] sm:$0xff]
        %v1602 = vld [vmem:[%s164 + $0x7f8] sm:$0xff]
        %v1603 = vld [vmem:[%s164 + $0x800] sm:$0xff]
        %v1604 = vld [vmem:[%s164 + $0x808] sm:$0xff]
        %v1605 = vld [vmem:[%s164 + $0x810] sm:$0xff]
        %v1606 = vld [vmem:[%s164 + $0x818] sm:$0xff]
        %v1607 = vld [vmem:[%s164 + $0x820] sm:$0xff]
        %v1608 = vld [vmem:[%s164 + $0x828] sm:$0xff]
        %v1609 = vld [vmem:[%s164 + $0x830] sm:$0xff]
        %v1610 = vld [vmem:[%s164 + $0x838] sm:$0xff]
        %v1611 = vld [vmem:[%s164 + $0x840] sm:$0xff]
        %v1612 = vld [vmem:[%s164 + $0x848] sm:$0xff]
        %v1613 = vld [vmem:[%s164 + $0x850] sm:$0xff]
        %v1614 = vld [vmem:[%s164 + $0x858] sm:$0xff]
        %v1615 = vld [vmem:[%s164 + $0x860] sm:$0xff]
        %v1616 = vld [vmem:[%s164 + $0x868] sm:$0xff]
        %v1617 = vld [vmem:[%s164 + $0x870] sm:$0xff]
        %v1618 = vld [vmem:[%s164 + $0x878] sm:$0xff]
        %v1619 = vld [vmem:[%s164 + $0x880] sm:$0xff]
        %v1620 = vld [vmem:[%s164 + $0x888] sm:$0xff]
        %v1621 = vld [vmem:[%s164 + $0x890] sm:$0xff]
        %v1622 = vld [vmem:[%s164 + $0x898] sm:$0xff]
        %v1623 = vld [vmem:[%s164 + $0x8a0] sm:$0xff]
        %v1624 = vld [vmem:[%s164 + $0x8a8] sm:$0xff]
        %v1625 = vld [vmem:[%s164 + $0x8b0] sm:$0xff]
        %v1626 = vld [vmem:[%s164 + $0x8b8] sm:$0xff]
        %v1627 = vld [vmem:[%s164 + $0x8c0] sm:$0xff]
        %v1628 = vld [vmem:[%s164 + $0x8c8] sm:$0xff]
        %v1629 = vld [vmem:[%s164 + $0x8d0] sm:$0xff]
        %v1630 = vld [vmem:[%s164 + $0x8d8] sm:$0xff]
        %v1631 = vld [vmem:[%s164 + $0x8e0] sm:$0xff]
        %v1632 = vld [vmem:[%s164 + $0x8e8] sm:$0xff]
        %v1633 = vld [vmem:[%s164 + $0x8f0] sm:$0xff]
        %v1634 = vld [vmem:[%s164 + $0x8f8] sm:$0xff]
        %v1635 = vld [vmem:[%s164 + $0x900] sm:$0xff]
        %v1636 = vld [vmem:[%s164 + $0x908] sm:$0xff]
        %v1637 = vld [vmem:[%s164 + $0x910] sm:$0xff]
        %v1638 = vld [vmem:[%s164 + $0x918] sm:$0xff]
        %v1639 = vld [vmem:[%s164 + $0x920] sm:$0xff]
        %v1640 = vld [vmem:[%s164 + $0x928] sm:$0xff]
        %v1641 = vld [vmem:[%s164 + $0x930] sm:$0xff]
        %v1642 = vld [vmem:[%s164 + $0x938] sm:$0xff]
        %v1643 = vld [vmem:[%s164 + $0x940] sm:$0xff]
        %v1644 = vld [vmem:[%s164 + $0x948] sm:$0xff]
        %v1645 = vld [vmem:[%s164 + $0x950] sm:$0xff]
        %v1646 = vld [vmem:[%s164 + $0x958] sm:$0xff]
        %v1647 = vld [vmem:[%s164 + $0x960] sm:$0xff]
        %v1648 = vld [vmem:[%s164 + $0x968] sm:$0xff]
        %v1649 = vld [vmem:[%s164 + $0x970] sm:$0xff]
        %v1650 = vld [vmem:[%s164 + $0x978] sm:$0xff]
        %v1651 = vld [vmem:[%s164 + $0x980] sm:$0xff]
        %v1652 = vld [vmem:[%s164 + $0x988] sm:$0xff]
        %v1653 = vld [vmem:[%s164 + $0x990] sm:$0xff]
        %v1654 = vld [vmem:[%s164 + $0x998] sm:$0xff]
        %v1655 = vld [vmem:[%s164 + $0x9a0] sm:$0xff]
        %v1656 = vld [vmem:[%s164 + $0x9a8] sm:$0xff]
        %v1657 = vld [vmem:[%s164 + $0x9b0] sm:$0xff]
        %v1658 = vld [vmem:[%s164 + $0x9b8] sm:$0xff]
        %v1659 = vld [vmem:[%s164 + $0x9c0] sm:$0xff]
        %v1660 = vld [vmem:[%s164 + $0x9c8] sm:$0xff]
        %v1661 = vld [vmem:[%s164 + $0x9d0] sm:$0xff]
        %v1662 = vld [vmem:[%s164 + $0x9d8] sm:$0xff]
        %v1663 = vld [vmem:[%s164 + $0x9e0] sm:$0xff]
        %v1664 = vld [vmem:[%s164 + $0x9e8] sm:$0xff]
        %v1665 = vld [vmem:[%s164 + $0x9f0] sm:$0xff]
        %v1666 = vld [vmem:[%s164 + $0x9f8] sm:$0xff]
        %v1667 = vld [vmem:[%s164 + $0xa00] sm:$0xff]
        %v1668 = vld [vmem:[%s164 + $0xa08] sm:$0xff]
        %v1669 = vld [vmem:[%s164 + $0xa10] sm:$0xff]
        %v1670 = vld [vmem:[%s164 + $0xa18] sm:$0xff]
        %v1671 = vld [vmem:[%s164 + $0xa20] sm:$0xff]
        %v1672 = vld [vmem:[%s164 + $0xa28] sm:$0xff]
        %v1673 = vld [vmem:[%s164 + $0xa30] sm:$0xff]
        %v1674 = vld [vmem:[%s164 + $0xa38] sm:$0xff]
        %v1675 = vld [vmem:[%s164 + $0xa40] sm:$0xff]
        %v1676 = vld [vmem:[%s164 + $0xa48] sm:$0xff]
        %v1677 = vld [vmem:[%s164 + $0xa50] sm:$0xff]
        %v1678 = vld [vmem:[%s164 + $0xa58] sm:$0xff]
        %v1679 = vld [vmem:[%s164 + $0xa60] sm:$0xff]
        %v1680 = vld [vmem:[%s164 + $0xa68] sm:$0xff]
        %v1681 = vld [vmem:[%s164 + $0xa70] sm:$0xff]
        %v1682 = vld [vmem:[%s164 + $0xa78] sm:$0xff]
        %v1683 = vld [vmem:[%s164 + $0xa80] sm:$0xff]
        %v1684 = vld [vmem:[%s164 + $0xa88] sm:$0xff]
        %v1685 = vld [vmem:[%s164 + $0xa90] sm:$0xff]
        %v1686 = vld [vmem:[%s164 + $0xa98] sm:$0xff]
        %v1687 = vld [vmem:[%s164 + $0xaa0] sm:$0xff]
        %v1688 = vld [vmem:[%s164 + $0xaa8] sm:$0xff]
        %v1689 = vld [vmem:[%s164 + $0xab0] sm:$0xff]
        %v1690 = vld [vmem:[%s164 + $0xab8] sm:$0xff]
        %v1691 = vld [vmem:[%s164 + $0xac0] sm:$0xff]
        %v1692 = vld [vmem:[%s164 + $0xac8] sm:$0xff]
        %v1693 = vld [vmem:[%s164 + $0xad0] sm:$0xff]
        %v1694 = vld [vmem:[%s164 + $0xad8] sm:$0xff]
        %v1695 = vld [vmem:[%s164 + $0xae0] sm:$0xff]
        %v1696 = vld [vmem:[%s164 + $0xae8] sm:$0xff]
        %v1697 = vld [vmem:[%s164 + $0xaf0] sm:$0xff]
        %v1698 = vld [vmem:[%s164 + $0xaf8] sm:$0xff]
        %v1699 = vld [vmem:[%s164 + $0xb00] sm:$0xff]
        %v1700 = vld [vmem:[%s164 + $0xb08] sm:$0xff]
        %v1701 = vld [vmem:[%s164 + $0xb10] sm:$0xff]
        %v1702 = vld [vmem:[%s164 + $0xb18] sm:$0xff]
        %v1703 = vld [vmem:[%s164 + $0xb20] sm:$0xff]
        %v1704 = vld [vmem:[%s164 + $0xb28] sm:$0xff]
        %v1705 = vld [vmem:[%s164 + $0xb30] sm:$0xff]
        %v1706 = vld [vmem:[%s164 + $0xb38] sm:$0xff]
        %v1707 = vld [vmem:[%s164 + $0xb40] sm:$0xff]
        %v1708 = vld [vmem:[%s164 + $0xb48] sm:$0xff]
        %v1709 = vld [vmem:[%s164 + $0xb50] sm:$0xff]
        %v1710 = vld [vmem:[%s164 + $0xb58] sm:$0xff]
        %v1711 = vld [vmem:[%s164 + $0xb60] sm:$0xff]
        %v1712 = vld [vmem:[%s164 + $0xb68] sm:$0xff]
        %v1713 = vld [vmem:[%s164 + $0xb70] sm:$0xff]
        %v1714 = vld [vmem:[%s164 + $0xb78] sm:$0xff]
        %v1715 = vld [vmem:[%s164 + $0xb80] sm:$0xff]
        %v1716 = vld [vmem:[%s164 + $0xb88] sm:$0xff]
        %v1717 = vld [vmem:[%s164 + $0xb90] sm:$0xff]
        %v1718 = vld [vmem:[%s164 + $0xb98] sm:$0xff]
        %v1719 = vld [vmem:[%s164 + $0xba0] sm:$0xff]
        %v1720 = vld [vmem:[%s164 + $0xba8] sm:$0xff]
        %v1721 = vld [vmem:[%s164 + $0xbb0] sm:$0xff]
        %v1722 = vld [vmem:[%s164 + $0xbb8] sm:$0xff]
        %v1723 = vld [vmem:[%s164 + $0xbc0] sm:$0xff]
        %v1724 = vld [vmem:[%s164 + $0xbc8] sm:$0xff]
        %v1725 = vld [vmem:[%s164 + $0xbd0] sm:$0xff]
        %v1726 = vld [vmem:[%s164 + $0xbd8] sm:$0xff]
        %v1727 = vld [vmem:[%s164 + $0xbe0] sm:$0xff]
        %v1728 = vld [vmem:[%s164 + $0xbe8] sm:$0xff]
        %v1729 = vld [vmem:[%s164 + $0xbf0] sm:$0xff]
        %v1730 = vld [vmem:[%s164 + $0xbf8] sm:$0xff]
        %v1731 = vld [vmem:[%s164 + $0xc00] sm:$0xff]
        %v1732 = vld [vmem:[%s164 + $0xc08] sm:$0xff]
        %v1733 = vld [vmem:[%s164 + $0xc10] sm:$0xff]
        %v1734 = vld [vmem:[%s164 + $0xc18] sm:$0xff]
        %v1735 = vld [vmem:[%s164 + $0xc20] sm:$0xff]
        %v1736 = vld [vmem:[%s164 + $0xc28] sm:$0xff]
        %v1737 = vld [vmem:[%s164 + $0xc30] sm:$0xff]
        %v1738 = vld [vmem:[%s164 + $0xc38] sm:$0xff]
        %v1739 = vld [vmem:[%s164 + $0xc40] sm:$0xff]
        %v1740 = vld [vmem:[%s164 + $0xc48] sm:$0xff]
        %v1741 = vld [vmem:[%s164 + $0xc50] sm:$0xff]
        %v1742 = vld [vmem:[%s164 + $0xc58] sm:$0xff]
        %v1743 = vld [vmem:[%s164 + $0xc60] sm:$0xff]
        %v1744 = vld [vmem:[%s164 + $0xc68] sm:$0xff]
        %v1745 = vld [vmem:[%s164 + $0xc70] sm:$0xff]
        %v1746 = vld [vmem:[%s164 + $0xc78] sm:$0xff]
        %v1747 = vld [vmem:[%s164 + $0xc80] sm:$0xff]
        %v1748 = vld [vmem:[%s164 + $0xc88] sm:$0xff]
        %v1749 = vld [vmem:[%s164 + $0xc90] sm:$0xff]
        %v1750 = vld [vmem:[%s164 + $0xc98] sm:$0xff]
        %v1751 = vld [vmem:[%s164 + $0xca0] sm:$0xff]
        %v1752 = vld [vmem:[%s164 + $0xca8] sm:$0xff]
        %v1753 = vld [vmem:[%s164 + $0xcb0] sm:$0xff]
        %v1754 = vld [vmem:[%s164 + $0xcb8] sm:$0xff]
        %v1755 = vld [vmem:[%s164 + $0xcc0] sm:$0xff]
        %v1756 = vld [vmem:[%s164 + $0xcc8] sm:$0xff]
        %v1757 = vld [vmem:[%s164 + $0xcd0] sm:$0xff]
        %v1758 = vld [vmem:[%s164 + $0xcd8] sm:$0xff]
        %v1759 = vld [vmem:[%s164 + $0xce0] sm:$0xff]
        %v1760 = vld [vmem:[%s164 + $0xce8] sm:$0xff]
        %v1761 = vld [vmem:[%s164 + $0xcf0] sm:$0xff]
        %v1762 = vld [vmem:[%s164 + $0xcf8] sm:$0xff]
        %v1763 = vld [vmem:[%s164 + $0xd00] sm:$0xff]
        %v1764 = vld [vmem:[%s164 + $0xd08] sm:$0xff]
        %v1765 = vld [vmem:[%s164 + $0xd10] sm:$0xff]
        %v1766 = vld [vmem:[%s164 + $0xd18] sm:$0xff]
        %v1767 = vld [vmem:[%s164 + $0xd20] sm:$0xff]
        %v1768 = vld [vmem:[%s164 + $0xd28] sm:$0xff]
        %v1769 = vld [vmem:[%s164 + $0xd30] sm:$0xff]
        %v1770 = vld [vmem:[%s164 + $0xd38] sm:$0xff]
        %v1771 = vld [vmem:[%s164 + $0xd40] sm:$0xff]
        %v1772 = vld [vmem:[%s164 + $0xd48] sm:$0xff]
        %v1773 = vld [vmem:[%s164 + $0xd50] sm:$0xff]
        %v1774 = vld [vmem:[%s164 + $0xd58] sm:$0xff]
        %v1775 = vld [vmem:[%s164 + $0xd60] sm:$0xff]
        %v1776 = vld [vmem:[%s164 + $0xd68] sm:$0xff]
        %v1777 = vld [vmem:[%s164 + $0xd70] sm:$0xff]
        %v1778 = vld [vmem:[%s164 + $0xd78] sm:$0xff]
        %v1779 = vld [vmem:[%s164 + $0xd80] sm:$0xff]
        %v1780 = vld [vmem:[%s164 + $0xd88] sm:$0xff]
        %v1781 = vld [vmem:[%s164 + $0xd90] sm:$0xff]
        %v1782 = vld [vmem:[%s164 + $0xd98] sm:$0xff]
        %v1783 = vld [vmem:[%s164 + $0xda0] sm:$0xff]
        %v1784 = vld [vmem:[%s164 + $0xda8] sm:$0xff]
        %v1785 = vld [vmem:[%s164 + $0xdb0] sm:$0xff]
        %v1786 = vld [vmem:[%s164 + $0xdb8] sm:$0xff]
        %v1787 = vld [vmem:[%s164 + $0xdc0] sm:$0xff]
        %v1788 = vld [vmem:[%s164 + $0xdc8] sm:$0xff]
        %v1789 = vld [vmem:[%s164 + $0xdd0] sm:$0xff]
        %v1790 = vld [vmem:[%s164 + $0xdd8] sm:$0xff]
        %v1791 = vld [vmem:[%s164 + $0xde0] sm:$0xff]
        %v1792 = vld [vmem:[%s164 + $0xde8] sm:$0xff]
        %v1793 = vld [vmem:[%s164 + $0xdf0] sm:$0xff]
        %v1794 = vld [vmem:[%s164 + $0xdf8] sm:$0xff]
        %v1795 = vld [vmem:[%s164 + $0xe00] sm:$0xff]
        %v1796 = vld [vmem:[%s164 + $0xe08] sm:$0xff]
        %v1797 = vld [vmem:[%s164 + $0xe10] sm:$0xff]
        %v1798 = vld [vmem:[%s164 + $0xe18] sm:$0xff]
        %v1799 = vld [vmem:[%s164 + $0xe20] sm:$0xff]
        %v1800 = vld [vmem:[%s164 + $0xe28] sm:$0xff]
        %v1801 = vld [vmem:[%s164 + $0xe30] sm:$0xff]
        %v1802 = vld [vmem:[%s164 + $0xe38] sm:$0xff]
        %v1803 = vld [vmem:[%s164 + $0xe40] sm:$0xff]
        %v1804 = vld [vmem:[%s164 + $0xe48] sm:$0xff]
        %v1805 = vld [vmem:[%s164 + $0xe50] sm:$0xff]
        %v1806 = vld [vmem:[%s164 + $0xe58] sm:$0xff]
        %v1807 = vld [vmem:[%s164 + $0xe60] sm:$0xff]
        %v1808 = vld [vmem:[%s164 + $0xe68] sm:$0xff]
        %v1809 = vld [vmem:[%s164 + $0xe70] sm:$0xff]
        %v1810 = vld [vmem:[%s164 + $0xe78] sm:$0xff]
        %v1811 = vld [vmem:[%s164 + $0xe80] sm:$0xff]
        %v1812 = vld [vmem:[%s164 + $0xe88] sm:$0xff]
        %v1813 = vld [vmem:[%s164 + $0xe90] sm:$0xff]
        %v1814 = vld [vmem:[%s164 + $0xe98] sm:$0xff]
        %v1815 = vld [vmem:[%s164 + $0xea0] sm:$0xff]
        %v1816 = vld [vmem:[%s164 + $0xea8] sm:$0xff]
        %v1817 = vld [vmem:[%s164 + $0xeb0] sm:$0xff]
        %v1818 = vld [vmem:[%s164 + $0xeb8] sm:$0xff]
        %v1819 = vld [vmem:[%s164 + $0xec0] sm:$0xff]
        %v1820 = vld [vmem:[%s164 + $0xec8] sm:$0xff]
        %v1821 = vld [vmem:[%s164 + $0xed0] sm:$0xff]
        %v1822 = vld [vmem:[%s164 + $0xed8] sm:$0xff]
        %v1823 = vld [vmem:[%s164 + $0xee0] sm:$0xff]
        %v1824 = vld [vmem:[%s164 + $0xee8] sm:$0xff]
        %v1825 = vld [vmem:[%s164 + $0xef0] sm:$0xff]
        %v1826 = vld [vmem:[%s164 + $0xef8] sm:$0xff]
        %v1827 = vld [vmem:[%s164 + $0xf00] sm:$0xff]
        %v1828 = vld [vmem:[%s164 + $0xf08] sm:$0xff]
        %v1829 = vld [vmem:[%s164 + $0xf10] sm:$0xff]
        %v1830 = vld [vmem:[%s164 + $0xf18] sm:$0xff]
        %v1831 = vld [vmem:[%s164 + $0xf20] sm:$0xff]
        %v1832 = vld [vmem:[%s164 + $0xf28] sm:$0xff]
        %v1833 = vld [vmem:[%s164 + $0xf30] sm:$0xff]
        %v1834 = vld [vmem:[%s164 + $0xf38] sm:$0xff]
        %v1835 = vld [vmem:[%s164 + $0xf40] sm:$0xff]
        %v1836 = vld [vmem:[%s164 + $0xf48] sm:$0xff]
        %v1837 = vld [vmem:[%s164 + $0xf50] sm:$0xff]
        %v1838 = vld [vmem:[%s164 + $0xf58] sm:$0xff]
        %v1839 = vld [vmem:[%s164 + $0xf60] sm:$0xff]
        %v1840 = vld [vmem:[%s164 + $0xf68] sm:$0xff]
        %v1841 = vld [vmem:[%s164 + $0xf70] sm:$0xff]
        %v1842 = vld [vmem:[%s164 + $0xf78] sm:$0xff]
        %v1843 = vld [vmem:[%s164 + $0xf80] sm:$0xff]
        %v1844 = vld [vmem:[%s164 + $0xf88] sm:$0xff]
        %v1845 = vld [vmem:[%s164 + $0xf90] sm:$0xff]
        %v1846 = vld [vmem:[%s164 + $0xf98] sm:$0xff]
        %v1847 = vld [vmem:[%s164 + $0xfa0] sm:$0xff]
        %v1848 = vld [vmem:[%s164 + $0xfa8] sm:$0xff]
        %v1849 = vld [vmem:[%s164 + $0xfb0] sm:$0xff]
        %v1850 = vld [vmem:[%s164 + $0xfb8] sm:$0xff]
        %v1851 = vld [vmem:[%s164 + $0xfc0] sm:$0xff]
        %v1852 = vld [vmem:[%s164 + $0xfc8] sm:$0xff]
        %v1853 = vld [vmem:[%s164 + $0xfd0] sm:$0xff]
        %v1854 = vld [vmem:[%s164 + $0xfd8] sm:$0xff]
        %v1855 = vld [vmem:[%s164 + $0xfe0] sm:$0xff]
        %v1856 = vld [vmem:[%s164 + $0xfe8] sm:$0xff]
        %v1857 = vld [vmem:[%s164 + $0xff0] sm:$0xff]
        %v1858 = vld [vmem:[%s164 + $0xff8] sm:$0xff]
        %v2371 = vunpack.c.l.b16 %v1347
        %v2372 = vunpack.c.h.b16 %v1347
        %v2373 = vunpack.c.l.b16 %v1348
        %v2374 = vunpack.c.h.b16 %v1348
        %v2375 = vunpack.c.l.b16 %v1349
        %v2376 = vunpack.c.h.b16 %v1349
        %v2377 = vunpack.c.l.b16 %v1350
        %v2378 = vunpack.c.h.b16 %v1350
        %v2379 = vunpack.c.l.b16 %v1351
        %v2380 = vunpack.c.h.b16 %v1351
        %v2381 = vunpack.c.l.b16 %v1352
        %v2382 = vunpack.c.h.b16 %v1352
        %v2383 = vunpack.c.l.b16 %v1353
        %v2384 = vunpack.c.h.b16 %v1353
        %v2385 = vunpack.c.l.b16 %v1354
        %v2386 = vunpack.c.h.b16 %v1354
        %v2387 = vunpack.c.l.b16 %v1355
        %v2388 = vunpack.c.h.b16 %v1355
        %v2389 = vunpack.c.l.b16 %v1356
        %v2390 = vunpack.c.h.b16 %v1356
        %v2391 = vunpack.c.l.b16 %v1357
        %v2392 = vunpack.c.h.b16 %v1357
        %v2393 = vunpack.c.l.b16 %v1358
        %v2394 = vunpack.c.h.b16 %v1358
        %v2395 = vunpack.c.l.b16 %v1359
        %v2396 = vunpack.c.h.b16 %v1359
        %v2397 = vunpack.c.l.b16 %v1360
        %v2398 = vunpack.c.h.b16 %v1360
        %v2399 = vunpack.c.l.b16 %v1361
        %v2400 = vunpack.c.h.b16 %v1361
        %v2401 = vunpack.c.l.b16 %v1362
        %v2402 = vunpack.c.h.b16 %v1362
        %v2403 = vunpack.c.l.b16 %v1363
        %v2404 = vunpack.c.h.b16 %v1363
        %v2405 = vunpack.c.l.b16 %v1364
        %v2406 = vunpack.c.h.b16 %v1364
        %v2407 = vunpack.c.l.b16 %v1365
        %v2408 = vunpack.c.h.b16 %v1365
        %v2409 = vunpack.c.l.b16 %v1366
        %v2410 = vunpack.c.h.b16 %v1366
        %v2411 = vunpack.c.l.b16 %v1367
        %v2412 = vunpack.c.h.b16 %v1367
        %v2413 = vunpack.c.l.b16 %v1368
        %v2414 = vunpack.c.h.b16 %v1368
        %v2415 = vunpack.c.l.b16 %v1369
        %v2416 = vunpack.c.h.b16 %v1369
        %v2417 = vunpack.c.l.b16 %v1370
        %v2418 = vunpack.c.h.b16 %v1370
        %v2419 = vunpack.c.l.b16 %v1371
        %v2420 = vunpack.c.h.b16 %v1371
        %v2421 = vunpack.c.l.b16 %v1372
        %v2422 = vunpack.c.h.b16 %v1372
        %v2423 = vunpack.c.l.b16 %v1373
        %v2424 = vunpack.c.h.b16 %v1373
        %v2425 = vunpack.c.l.b16 %v1374
        %v2426 = vunpack.c.h.b16 %v1374
        %v2427 = vunpack.c.l.b16 %v1375
        %v2428 = vunpack.c.h.b16 %v1375
        %v2429 = vunpack.c.l.b16 %v1376
        %v2430 = vunpack.c.h.b16 %v1376
        %v2431 = vunpack.c.l.b16 %v1377
        %v2432 = vunpack.c.h.b16 %v1377
        %v2433 = vunpack.c.l.b16 %v1378
        %v2434 = vunpack.c.h.b16 %v1378
        %v2435 = vunpack.c.l.b16 %v1379
        %v2436 = vunpack.c.h.b16 %v1379
        %v2437 = vunpack.c.l.b16 %v1380
        %v2438 = vunpack.c.h.b16 %v1380
        %v2439 = vunpack.c.l.b16 %v1381
        %v2440 = vunpack.c.h.b16 %v1381
        %v2441 = vunpack.c.l.b16 %v1382
        %v2442 = vunpack.c.h.b16 %v1382
        %v2443 = vunpack.c.l.b16 %v1383
        %v2444 = vunpack.c.h.b16 %v1383
        %v2445 = vunpack.c.l.b16 %v1384
        %v2446 = vunpack.c.h.b16 %v1384
        %v2447 = vunpack.c.l.b16 %v1385
        %v2448 = vunpack.c.h.b16 %v1385
        %v2449 = vunpack.c.l.b16 %v1386
        %v2450 = vunpack.c.h.b16 %v1386
        %v2451 = vunpack.c.l.b16 %v1387
        %v2452 = vunpack.c.h.b16 %v1387
        %v2453 = vunpack.c.l.b16 %v1388
        %v2454 = vunpack.c.h.b16 %v1388
        %v2455 = vunpack.c.l.b16 %v1389
        %v2456 = vunpack.c.h.b16 %v1389
        %v2457 = vunpack.c.l.b16 %v1390
        %v2458 = vunpack.c.h.b16 %v1390
        %v2459 = vunpack.c.l.b16 %v1391
        %v2460 = vunpack.c.h.b16 %v1391
        %v2461 = vunpack.c.l.b16 %v1392
        %v2462 = vunpack.c.h.b16 %v1392
        %v2463 = vunpack.c.l.b16 %v1393
        %v2464 = vunpack.c.h.b16 %v1393
        %v2465 = vunpack.c.l.b16 %v1394
        %v2466 = vunpack.c.h.b16 %v1394
        %v2467 = vunpack.c.l.b16 %v1395
        %v2468 = vunpack.c.h.b16 %v1395
        %v2469 = vunpack.c.l.b16 %v1396
        %v2470 = vunpack.c.h.b16 %v1396
        %v2471 = vunpack.c.l.b16 %v1397
        %v2472 = vunpack.c.h.b16 %v1397
        %v2473 = vunpack.c.l.b16 %v1398
        %v2474 = vunpack.c.h.b16 %v1398
        %v2475 = vunpack.c.l.b16 %v1399
        %v2476 = vunpack.c.h.b16 %v1399
        %v2477 = vunpack.c.l.b16 %v1400
        %v2478 = vunpack.c.h.b16 %v1400
        %v2479 = vunpack.c.l.b16 %v1401
        %v2480 = vunpack.c.h.b16 %v1401
        %v2481 = vunpack.c.l.b16 %v1402
        %v2482 = vunpack.c.h.b16 %v1402
        %v2483 = vunpack.c.l.b16 %v1403
        %v2484 = vunpack.c.h.b16 %v1403
        %v2485 = vunpack.c.l.b16 %v1404
        %v2486 = vunpack.c.h.b16 %v1404
        %v2487 = vunpack.c.l.b16 %v1405
        %v2488 = vunpack.c.h.b16 %v1405
        %v2489 = vunpack.c.l.b16 %v1406
        %v2490 = vunpack.c.h.b16 %v1406
        %v2491 = vunpack.c.l.b16 %v1407
        %v2492 = vunpack.c.h.b16 %v1407
        %v2493 = vunpack.c.l.b16 %v1408
        %v2494 = vunpack.c.h.b16 %v1408
        %v2495 = vunpack.c.l.b16 %v1409
        %v2496 = vunpack.c.h.b16 %v1409
        %v2497 = vunpack.c.l.b16 %v1410
        %v2498 = vunpack.c.h.b16 %v1410
        %v2499 = vunpack.c.l.b16 %v1411
        %v2500 = vunpack.c.h.b16 %v1411
        %v2501 = vunpack.c.l.b16 %v1412
        %v2502 = vunpack.c.h.b16 %v1412
        %v2503 = vunpack.c.l.b16 %v1413
        %v2504 = vunpack.c.h.b16 %v1413
        %v2505 = vunpack.c.l.b16 %v1414
        %v2506 = vunpack.c.h.b16 %v1414
        %v2507 = vunpack.c.l.b16 %v1415
        %v2508 = vunpack.c.h.b16 %v1415
        %v2509 = vunpack.c.l.b16 %v1416
        %v2510 = vunpack.c.h.b16 %v1416
        %v2511 = vunpack.c.l.b16 %v1417
        %v2512 = vunpack.c.h.b16 %v1417
        %v2513 = vunpack.c.l.b16 %v1418
        %v2514 = vunpack.c.h.b16 %v1418
        %v2515 = vunpack.c.l.b16 %v1419
        %v2516 = vunpack.c.h.b16 %v1419
        %v2517 = vunpack.c.l.b16 %v1420
        %v2518 = vunpack.c.h.b16 %v1420
        %v2519 = vunpack.c.l.b16 %v1421
        %v2520 = vunpack.c.h.b16 %v1421
        %v2521 = vunpack.c.l.b16 %v1422
        %v2522 = vunpack.c.h.b16 %v1422
        %v2523 = vunpack.c.l.b16 %v1423
        %v2524 = vunpack.c.h.b16 %v1423
        %v2525 = vunpack.c.l.b16 %v1424
        %v2526 = vunpack.c.h.b16 %v1424
        %v2527 = vunpack.c.l.b16 %v1425
        %v2528 = vunpack.c.h.b16 %v1425
        %v2529 = vunpack.c.l.b16 %v1426
        %v2530 = vunpack.c.h.b16 %v1426
        %v2531 = vunpack.c.l.b16 %v1427
        %v2532 = vunpack.c.h.b16 %v1427
        %v2533 = vunpack.c.l.b16 %v1428
        %v2534 = vunpack.c.h.b16 %v1428
        %v2535 = vunpack.c.l.b16 %v1429
        %v2536 = vunpack.c.h.b16 %v1429
        %v2537 = vunpack.c.l.b16 %v1430
        %v2538 = vunpack.c.h.b16 %v1430
        %v2539 = vunpack.c.l.b16 %v1431
        %v2540 = vunpack.c.h.b16 %v1431
        %v2541 = vunpack.c.l.b16 %v1432
        %v2542 = vunpack.c.h.b16 %v1432
        %v2543 = vunpack.c.l.b16 %v1433
        %v2544 = vunpack.c.h.b16 %v1433
        %v2545 = vunpack.c.l.b16 %v1434
        %v2546 = vunpack.c.h.b16 %v1434
        %v2547 = vunpack.c.l.b16 %v1435
        %v2548 = vunpack.c.h.b16 %v1435
        %v2549 = vunpack.c.l.b16 %v1436
        %v2550 = vunpack.c.h.b16 %v1436
        %v2551 = vunpack.c.l.b16 %v1437
        %v2552 = vunpack.c.h.b16 %v1437
        %v2553 = vunpack.c.l.b16 %v1438
        %v2554 = vunpack.c.h.b16 %v1438
        %v2555 = vunpack.c.l.b16 %v1439
        %v2556 = vunpack.c.h.b16 %v1439
        %v2557 = vunpack.c.l.b16 %v1440
        %v2558 = vunpack.c.h.b16 %v1440
        %v2559 = vunpack.c.l.b16 %v1441
        %v2560 = vunpack.c.h.b16 %v1441
        %v2561 = vunpack.c.l.b16 %v1442
        %v2562 = vunpack.c.h.b16 %v1442
        %v2563 = vunpack.c.l.b16 %v1443
        %v2564 = vunpack.c.h.b16 %v1443
        %v2565 = vunpack.c.l.b16 %v1444
        %v2566 = vunpack.c.h.b16 %v1444
        %v2567 = vunpack.c.l.b16 %v1445
        %v2568 = vunpack.c.h.b16 %v1445
        %v2569 = vunpack.c.l.b16 %v1446
        %v2570 = vunpack.c.h.b16 %v1446
        %v2571 = vunpack.c.l.b16 %v1447
        %v2572 = vunpack.c.h.b16 %v1447
        %v2573 = vunpack.c.l.b16 %v1448
        %v2574 = vunpack.c.h.b16 %v1448
        %v2575 = vunpack.c.l.b16 %v1449
        %v2576 = vunpack.c.h.b16 %v1449
        %v2577 = vunpack.c.l.b16 %v1450
        %v2578 = vunpack.c.h.b16 %v1450
        %v2579 = vunpack.c.l.b16 %v1451
        %v2580 = vunpack.c.h.b16 %v1451
        %v2581 = vunpack.c.l.b16 %v1452
        %v2582 = vunpack.c.h.b16 %v1452
        %v2583 = vunpack.c.l.b16 %v1453
        %v2584 = vunpack.c.h.b16 %v1453
        %v2585 = vunpack.c.l.b16 %v1454
        %v2586 = vunpack.c.h.b16 %v1454
        %v2587 = vunpack.c.l.b16 %v1455
        %v2588 = vunpack.c.h.b16 %v1455
        %v2589 = vunpack.c.l.b16 %v1456
        %v2590 = vunpack.c.h.b16 %v1456
        %v2591 = vunpack.c.l.b16 %v1457
        %v2592 = vunpack.c.h.b16 %v1457
        %v2593 = vunpack.c.l.b16 %v1458
        %v2594 = vunpack.c.h.b16 %v1458
        %v2595 = vunpack.c.l.b16 %v1459
        %v2596 = vunpack.c.h.b16 %v1459
        %v2597 = vunpack.c.l.b16 %v1460
        %v2598 = vunpack.c.h.b16 %v1460
        %v2599 = vunpack.c.l.b16 %v1461
        %v2600 = vunpack.c.h.b16 %v1461
        %v2601 = vunpack.c.l.b16 %v1462
        %v2602 = vunpack.c.h.b16 %v1462
        %v2603 = vunpack.c.l.b16 %v1463
        %v2604 = vunpack.c.h.b16 %v1463
        %v2605 = vunpack.c.l.b16 %v1464
        %v2606 = vunpack.c.h.b16 %v1464
        %v2607 = vunpack.c.l.b16 %v1465
        %v2608 = vunpack.c.h.b16 %v1465
        %v2609 = vunpack.c.l.b16 %v1466
        %v2610 = vunpack.c.h.b16 %v1466
        %v2611 = vunpack.c.l.b16 %v1467
        %v2612 = vunpack.c.h.b16 %v1467
        %v2613 = vunpack.c.l.b16 %v1468
        %v2614 = vunpack.c.h.b16 %v1468
        %v2615 = vunpack.c.l.b16 %v1469
        %v2616 = vunpack.c.h.b16 %v1469
        %v2617 = vunpack.c.l.b16 %v1470
        %v2618 = vunpack.c.h.b16 %v1470
        %v2619 = vunpack.c.l.b16 %v1471
        %v2620 = vunpack.c.h.b16 %v1471
        %v2621 = vunpack.c.l.b16 %v1472
        %v2622 = vunpack.c.h.b16 %v1472
        %v2623 = vunpack.c.l.b16 %v1473
        %v2624 = vunpack.c.h.b16 %v1473
        %v2625 = vunpack.c.l.b16 %v1474
        %v2626 = vunpack.c.h.b16 %v1474
        %v2627 = vunpack.c.l.b16 %v1475
        %v2628 = vunpack.c.h.b16 %v1475
        %v2629 = vunpack.c.l.b16 %v1476
        %v2630 = vunpack.c.h.b16 %v1476
        %v2631 = vunpack.c.l.b16 %v1477
        %v2632 = vunpack.c.h.b16 %v1477
        %v2633 = vunpack.c.l.b16 %v1478
        %v2634 = vunpack.c.h.b16 %v1478
        %v2635 = vunpack.c.l.b16 %v1479
        %v2636 = vunpack.c.h.b16 %v1479
        %v2637 = vunpack.c.l.b16 %v1480
        %v2638 = vunpack.c.h.b16 %v1480
        %v2639 = vunpack.c.l.b16 %v1481
        %v2640 = vunpack.c.h.b16 %v1481
        %v2641 = vunpack.c.l.b16 %v1482
        %v2642 = vunpack.c.h.b16 %v1482
        %v2643 = vunpack.c.l.b16 %v1483
        %v2644 = vunpack.c.h.b16 %v1483
        %v2645 = vunpack.c.l.b16 %v1484
        %v2646 = vunpack.c.h.b16 %v1484
        %v2647 = vunpack.c.l.b16 %v1485
        %v2648 = vunpack.c.h.b16 %v1485
        %v2649 = vunpack.c.l.b16 %v1486
        %v2650 = vunpack.c.h.b16 %v1486
        %v2651 = vunpack.c.l.b16 %v1487
        %v2652 = vunpack.c.h.b16 %v1487
        %v2653 = vunpack.c.l.b16 %v1488
        %v2654 = vunpack.c.h.b16 %v1488
        %v2655 = vunpack.c.l.b16 %v1489
        %v2656 = vunpack.c.h.b16 %v1489
        %v2657 = vunpack.c.l.b16 %v1490
        %v2658 = vunpack.c.h.b16 %v1490
        %v2659 = vunpack.c.l.b16 %v1491
        %v2660 = vunpack.c.h.b16 %v1491
        %v2661 = vunpack.c.l.b16 %v1492
        %v2662 = vunpack.c.h.b16 %v1492
        %v2663 = vunpack.c.l.b16 %v1493
        %v2664 = vunpack.c.h.b16 %v1493
        %v2665 = vunpack.c.l.b16 %v1494
        %v2666 = vunpack.c.h.b16 %v1494
        %v2667 = vunpack.c.l.b16 %v1495
        %v2668 = vunpack.c.h.b16 %v1495
        %v2669 = vunpack.c.l.b16 %v1496
        %v2670 = vunpack.c.h.b16 %v1496
        %v2671 = vunpack.c.l.b16 %v1497
        %v2672 = vunpack.c.h.b16 %v1497
        %v2673 = vunpack.c.l.b16 %v1498
        %v2674 = vunpack.c.h.b16 %v1498
        %v2675 = vunpack.c.l.b16 %v1499
        %v2676 = vunpack.c.h.b16 %v1499
        %v2677 = vunpack.c.l.b16 %v1500
        %v2678 = vunpack.c.h.b16 %v1500
        %v2679 = vunpack.c.l.b16 %v1501
        %v2680 = vunpack.c.h.b16 %v1501
        %v2681 = vunpack.c.l.b16 %v1502
        %v2682 = vunpack.c.h.b16 %v1502
        %v2683 = vunpack.c.l.b16 %v1503
        %v2684 = vunpack.c.h.b16 %v1503
        %v2685 = vunpack.c.l.b16 %v1504
        %v2686 = vunpack.c.h.b16 %v1504
        %v2687 = vunpack.c.l.b16 %v1505
        %v2688 = vunpack.c.h.b16 %v1505
        %v2689 = vunpack.c.l.b16 %v1506
        %v2690 = vunpack.c.h.b16 %v1506
        %v2691 = vunpack.c.l.b16 %v1507
        %v2692 = vunpack.c.h.b16 %v1507
        %v2693 = vunpack.c.l.b16 %v1508
        %v2694 = vunpack.c.h.b16 %v1508
        %v2695 = vunpack.c.l.b16 %v1509
        %v2696 = vunpack.c.h.b16 %v1509
        %v2697 = vunpack.c.l.b16 %v1510
        %v2698 = vunpack.c.h.b16 %v1510
        %v2699 = vunpack.c.l.b16 %v1511
        %v2700 = vunpack.c.h.b16 %v1511
        %v2701 = vunpack.c.l.b16 %v1512
        %v2702 = vunpack.c.h.b16 %v1512
        %v2703 = vunpack.c.l.b16 %v1513
        %v2704 = vunpack.c.h.b16 %v1513
        %v2705 = vunpack.c.l.b16 %v1514
        %v2706 = vunpack.c.h.b16 %v1514
        %v2707 = vunpack.c.l.b16 %v1515
        %v2708 = vunpack.c.h.b16 %v1515
        %v2709 = vunpack.c.l.b16 %v1516
        %v2710 = vunpack.c.h.b16 %v1516
        %v2711 = vunpack.c.l.b16 %v1517
        %v2712 = vunpack.c.h.b16 %v1517
        %v2713 = vunpack.c.l.b16 %v1518
        %v2714 = vunpack.c.h.b16 %v1518
        %v2715 = vunpack.c.l.b16 %v1519
        %v2716 = vunpack.c.h.b16 %v1519
        %v2717 = vunpack.c.l.b16 %v1520
        %v2718 = vunpack.c.h.b16 %v1520
        %v2719 = vunpack.c.l.b16 %v1521
        %v2720 = vunpack.c.h.b16 %v1521
        %v2721 = vunpack.c.l.b16 %v1522
        %v2722 = vunpack.c.h.b16 %v1522
        %v2723 = vunpack.c.l.b16 %v1523
        %v2724 = vunpack.c.h.b16 %v1523
        %v2725 = vunpack.c.l.b16 %v1524
        %v2726 = vunpack.c.h.b16 %v1524
        %v2727 = vunpack.c.l.b16 %v1525
        %v2728 = vunpack.c.h.b16 %v1525
        %v2729 = vunpack.c.l.b16 %v1526
        %v2730 = vunpack.c.h.b16 %v1526
        %v2731 = vunpack.c.l.b16 %v1527
        %v2732 = vunpack.c.h.b16 %v1527
        %v2733 = vunpack.c.l.b16 %v1528
        %v2734 = vunpack.c.h.b16 %v1528
        %v2735 = vunpack.c.l.b16 %v1529
        %v2736 = vunpack.c.h.b16 %v1529
        %v2737 = vunpack.c.l.b16 %v1530
        %v2738 = vunpack.c.h.b16 %v1530
        %v2739 = vunpack.c.l.b16 %v1531
        %v2740 = vunpack.c.h.b16 %v1531
        %v2741 = vunpack.c.l.b16 %v1532
        %v2742 = vunpack.c.h.b16 %v1532
        %v2743 = vunpack.c.l.b16 %v1533
        %v2744 = vunpack.c.h.b16 %v1533
        %v2745 = vunpack.c.l.b16 %v1534
        %v2746 = vunpack.c.h.b16 %v1534
        %v2747 = vunpack.c.l.b16 %v1535
        %v2748 = vunpack.c.h.b16 %v1535
        %v2749 = vunpack.c.l.b16 %v1536
        %v2750 = vunpack.c.h.b16 %v1536
        %v2751 = vunpack.c.l.b16 %v1537
        %v2752 = vunpack.c.h.b16 %v1537
        %v2753 = vunpack.c.l.b16 %v1538
        %v2754 = vunpack.c.h.b16 %v1538
        %v2755 = vunpack.c.l.b16 %v1539
        %v2756 = vunpack.c.h.b16 %v1539
        %v2757 = vunpack.c.l.b16 %v1540
        %v2758 = vunpack.c.h.b16 %v1540
        %v2759 = vunpack.c.l.b16 %v1541
        %v2760 = vunpack.c.h.b16 %v1541
        %v2761 = vunpack.c.l.b16 %v1542
        %v2762 = vunpack.c.h.b16 %v1542
        %v2763 = vunpack.c.l.b16 %v1543
        %v2764 = vunpack.c.h.b16 %v1543
        %v2765 = vunpack.c.l.b16 %v1544
        %v2766 = vunpack.c.h.b16 %v1544
        %v2767 = vunpack.c.l.b16 %v1545
        %v2768 = vunpack.c.h.b16 %v1545
        %v2769 = vunpack.c.l.b16 %v1546
        %v2770 = vunpack.c.h.b16 %v1546
        %v2771 = vunpack.c.l.b16 %v1547
        %v2772 = vunpack.c.h.b16 %v1547
        %v2773 = vunpack.c.l.b16 %v1548
        %v2774 = vunpack.c.h.b16 %v1548
        %v2775 = vunpack.c.l.b16 %v1549
        %v2776 = vunpack.c.h.b16 %v1549
        %v2777 = vunpack.c.l.b16 %v1550
        %v2778 = vunpack.c.h.b16 %v1550
        %v2779 = vunpack.c.l.b16 %v1551
        %v2780 = vunpack.c.h.b16 %v1551
        %v2781 = vunpack.c.l.b16 %v1552
        %v2782 = vunpack.c.h.b16 %v1552
        %v2783 = vunpack.c.l.b16 %v1553
        %v2784 = vunpack.c.h.b16 %v1553
        %v2785 = vunpack.c.l.b16 %v1554
        %v2786 = vunpack.c.h.b16 %v1554
        %v2787 = vunpack.c.l.b16 %v1555
        %v2788 = vunpack.c.h.b16 %v1555
        %v2789 = vunpack.c.l.b16 %v1556
        %v2790 = vunpack.c.h.b16 %v1556
        %v2791 = vunpack.c.l.b16 %v1557
        %v2792 = vunpack.c.h.b16 %v1557
        %v2793 = vunpack.c.l.b16 %v1558
        %v2794 = vunpack.c.h.b16 %v1558
        %v2795 = vunpack.c.l.b16 %v1559
        %v2796 = vunpack.c.h.b16 %v1559
        %v2797 = vunpack.c.l.b16 %v1560
        %v2798 = vunpack.c.h.b16 %v1560
        %v2799 = vunpack.c.l.b16 %v1561
        %v2800 = vunpack.c.h.b16 %v1561
        %v2801 = vunpack.c.l.b16 %v1562
        %v2802 = vunpack.c.h.b16 %v1562
        %v2803 = vunpack.c.l.b16 %v1563
        %v2804 = vunpack.c.h.b16 %v1563
        %v2805 = vunpack.c.l.b16 %v1564
        %v2806 = vunpack.c.h.b16 %v1564
        %v2807 = vunpack.c.l.b16 %v1565
        %v2808 = vunpack.c.h.b16 %v1565
        %v2809 = vunpack.c.l.b16 %v1566
        %v2810 = vunpack.c.h.b16 %v1566
        %v2811 = vunpack.c.l.b16 %v1567
        %v2812 = vunpack.c.h.b16 %v1567
        %v2813 = vunpack.c.l.b16 %v1568
        %v2814 = vunpack.c.h.b16 %v1568
        %v2815 = vunpack.c.l.b16 %v1569
        %v2816 = vunpack.c.h.b16 %v1569
        %v2817 = vunpack.c.l.b16 %v1570
        %v2818 = vunpack.c.h.b16 %v1570
        %v2819 = vunpack.c.l.b16 %v1571
        %v2820 = vunpack.c.h.b16 %v1571
        %v2821 = vunpack.c.l.b16 %v1572
        %v2822 = vunpack.c.h.b16 %v1572
        %v2823 = vunpack.c.l.b16 %v1573
        %v2824 = vunpack.c.h.b16 %v1573
        %v2825 = vunpack.c.l.b16 %v1574
        %v2826 = vunpack.c.h.b16 %v1574
        %v2827 = vunpack.c.l.b16 %v1575
        %v2828 = vunpack.c.h.b16 %v1575
        %v2829 = vunpack.c.l.b16 %v1576
        %v2830 = vunpack.c.h.b16 %v1576
        %v2831 = vunpack.c.l.b16 %v1577
        %v2832 = vunpack.c.h.b16 %v1577
        %v2833 = vunpack.c.l.b16 %v1578
        %v2834 = vunpack.c.h.b16 %v1578
        %v2835 = vunpack.c.l.b16 %v1579
        %v2836 = vunpack.c.h.b16 %v1579
        %v2837 = vunpack.c.l.b16 %v1580
        %v2838 = vunpack.c.h.b16 %v1580
        %v2839 = vunpack.c.l.b16 %v1581
        %v2840 = vunpack.c.h.b16 %v1581
        %v2841 = vunpack.c.l.b16 %v1582
        %v2842 = vunpack.c.h.b16 %v1582
        %v2843 = vunpack.c.l.b16 %v1583
        %v2844 = vunpack.c.h.b16 %v1583
        %v2845 = vunpack.c.l.b16 %v1584
        %v2846 = vunpack.c.h.b16 %v1584
        %v2847 = vunpack.c.l.b16 %v1585
        %v2848 = vunpack.c.h.b16 %v1585
        %v2849 = vunpack.c.l.b16 %v1586
        %v2850 = vunpack.c.h.b16 %v1586
        %v2851 = vunpack.c.l.b16 %v1587
        %v2852 = vunpack.c.h.b16 %v1587
        %v2853 = vunpack.c.l.b16 %v1588
        %v2854 = vunpack.c.h.b16 %v1588
        %v2855 = vunpack.c.l.b16 %v1589
        %v2856 = vunpack.c.h.b16 %v1589
        %v2857 = vunpack.c.l.b16 %v1590
        %v2858 = vunpack.c.h.b16 %v1590
        %v2859 = vunpack.c.l.b16 %v1591
        %v2860 = vunpack.c.h.b16 %v1591
        %v2861 = vunpack.c.l.b16 %v1592
        %v2862 = vunpack.c.h.b16 %v1592
        %v2863 = vunpack.c.l.b16 %v1593
        %v2864 = vunpack.c.h.b16 %v1593
        %v2865 = vunpack.c.l.b16 %v1594
        %v2866 = vunpack.c.h.b16 %v1594
        %v2867 = vunpack.c.l.b16 %v1595
        %v2868 = vunpack.c.h.b16 %v1595
        %v2869 = vunpack.c.l.b16 %v1596
        %v2870 = vunpack.c.h.b16 %v1596
        %v2871 = vunpack.c.l.b16 %v1597
        %v2872 = vunpack.c.h.b16 %v1597
        %v2873 = vunpack.c.l.b16 %v1598
        %v2874 = vunpack.c.h.b16 %v1598
        %v2875 = vunpack.c.l.b16 %v1599
        %v2876 = vunpack.c.h.b16 %v1599
        %v2877 = vunpack.c.l.b16 %v1600
        %v2878 = vunpack.c.h.b16 %v1600
        %v2879 = vunpack.c.l.b16 %v1601
        %v2880 = vunpack.c.h.b16 %v1601
        %v2881 = vunpack.c.l.b16 %v1602
        %v2882 = vunpack.c.h.b16 %v1602
        %v2883 = vunpack.c.l.b16 %v1603
        %v2884 = vunpack.c.h.b16 %v1603
        %v2885 = vunpack.c.l.b16 %v1604
        %v2886 = vunpack.c.h.b16 %v1604
        %v2887 = vunpack.c.l.b16 %v1605
        %v2888 = vunpack.c.h.b16 %v1605
        %v2889 = vunpack.c.l.b16 %v1606
        %v2890 = vunpack.c.h.b16 %v1606
        %v2891 = vunpack.c.l.b16 %v1607
        %v2892 = vunpack.c.h.b16 %v1607
        %v2893 = vunpack.c.l.b16 %v1608
        %v2894 = vunpack.c.h.b16 %v1608
        %v2895 = vunpack.c.l.b16 %v1609
        %v2896 = vunpack.c.h.b16 %v1609
        %v2897 = vunpack.c.l.b16 %v1610
        %v2898 = vunpack.c.h.b16 %v1610
        %v2899 = vunpack.c.l.b16 %v1611
        %v2900 = vunpack.c.h.b16 %v1611
        %v2901 = vunpack.c.l.b16 %v1612
        %v2902 = vunpack.c.h.b16 %v1612
        %v2903 = vunpack.c.l.b16 %v1613
        %v2904 = vunpack.c.h.b16 %v1613
        %v2905 = vunpack.c.l.b16 %v1614
        %v2906 = vunpack.c.h.b16 %v1614
        %v2907 = vunpack.c.l.b16 %v1615
        %v2908 = vunpack.c.h.b16 %v1615
        %v2909 = vunpack.c.l.b16 %v1616
        %v2910 = vunpack.c.h.b16 %v1616
        %v2911 = vunpack.c.l.b16 %v1617
        %v2912 = vunpack.c.h.b16 %v1617
        %v2913 = vunpack.c.l.b16 %v1618
        %v2914 = vunpack.c.h.b16 %v1618
        %v2915 = vunpack.c.l.b16 %v1619
        %v2916 = vunpack.c.h.b16 %v1619
        %v2917 = vunpack.c.l.b16 %v1620
        %v2918 = vunpack.c.h.b16 %v1620
        %v2919 = vunpack.c.l.b16 %v1621
        %v2920 = vunpack.c.h.b16 %v1621
        %v2921 = vunpack.c.l.b16 %v1622
        %v2922 = vunpack.c.h.b16 %v1622
        %v2923 = vunpack.c.l.b16 %v1623
        %v2924 = vunpack.c.h.b16 %v1623
        %v2925 = vunpack.c.l.b16 %v1624
        %v2926 = vunpack.c.h.b16 %v1624
        %v2927 = vunpack.c.l.b16 %v1625
        %v2928 = vunpack.c.h.b16 %v1625
        %v2929 = vunpack.c.l.b16 %v1626
        %v2930 = vunpack.c.h.b16 %v1626
        %v2931 = vunpack.c.l.b16 %v1627
        %v2932 = vunpack.c.h.b16 %v1627
        %v2933 = vunpack.c.l.b16 %v1628
        %v2934 = vunpack.c.h.b16 %v1628
        %v2935 = vunpack.c.l.b16 %v1629
        %v2936 = vunpack.c.h.b16 %v1629
        %v2937 = vunpack.c.l.b16 %v1630
        %v2938 = vunpack.c.h.b16 %v1630
        %v2939 = vunpack.c.l.b16 %v1631
        %v2940 = vunpack.c.h.b16 %v1631
        %v2941 = vunpack.c.l.b16 %v1632
        %v2942 = vunpack.c.h.b16 %v1632
        %v2943 = vunpack.c.l.b16 %v1633
        %v2944 = vunpack.c.h.b16 %v1633
        %v2945 = vunpack.c.l.b16 %v1634
        %v2946 = vunpack.c.h.b16 %v1634
        %v2947 = vunpack.c.l.b16 %v1635
        %v2948 = vunpack.c.h.b16 %v1635
        %v2949 = vunpack.c.l.b16 %v1636
        %v2950 = vunpack.c.h.b16 %v1636
        %v2951 = vunpack.c.l.b16 %v1637
        %v2952 = vunpack.c.h.b16 %v1637
        %v2953 = vunpack.c.l.b16 %v1638
        %v2954 = vunpack.c.h.b16 %v1638
        %v2955 = vunpack.c.l.b16 %v1639
        %v2956 = vunpack.c.h.b16 %v1639
        %v2957 = vunpack.c.l.b16 %v1640
        %v2958 = vunpack.c.h.b16 %v1640
        %v2959 = vunpack.c.l.b16 %v1641
        %v2960 = vunpack.c.h.b16 %v1641
        %v2961 = vunpack.c.l.b16 %v1642
        %v2962 = vunpack.c.h.b16 %v1642
        %v2963 = vunpack.c.l.b16 %v1643
        %v2964 = vunpack.c.h.b16 %v1643
        %v2965 = vunpack.c.l.b16 %v1644
        %v2966 = vunpack.c.h.b16 %v1644
        %v2967 = vunpack.c.l.b16 %v1645
        %v2968 = vunpack.c.h.b16 %v1645
        %v2969 = vunpack.c.l.b16 %v1646
        %v2970 = vunpack.c.h.b16 %v1646
        %v2971 = vunpack.c.l.b16 %v1647
        %v2972 = vunpack.c.h.b16 %v1647
        %v2973 = vunpack.c.l.b16 %v1648
        %v2974 = vunpack.c.h.b16 %v1648
        %v2975 = vunpack.c.l.b16 %v1649
        %v2976 = vunpack.c.h.b16 %v1649
        %v2977 = vunpack.c.l.b16 %v1650
        %v2978 = vunpack.c.h.b16 %v1650
        %v2979 = vunpack.c.l.b16 %v1651
        %v2980 = vunpack.c.h.b16 %v1651
        %v2981 = vunpack.c.l.b16 %v1652
        %v2982 = vunpack.c.h.b16 %v1652
        %v2983 = vunpack.c.l.b16 %v1653
        %v2984 = vunpack.c.h.b16 %v1653
        %v2985 = vunpack.c.l.b16 %v1654
        %v2986 = vunpack.c.h.b16 %v1654
        %v2987 = vunpack.c.l.b16 %v1655
        %v2988 = vunpack.c.h.b16 %v1655
        %v2989 = vunpack.c.l.b16 %v1656
        %v2990 = vunpack.c.h.b16 %v1656
        %v2991 = vunpack.c.l.b16 %v1657
        %v2992 = vunpack.c.h.b16 %v1657
        %v2993 = vunpack.c.l.b16 %v1658
        %v2994 = vunpack.c.h.b16 %v1658
        %v2995 = vunpack.c.l.b16 %v1659
        %v2996 = vunpack.c.h.b16 %v1659
        %v2997 = vunpack.c.l.b16 %v1660
        %v2998 = vunpack.c.h.b16 %v1660
        %v2999 = vunpack.c.l.b16 %v1661
        %v3000 = vunpack.c.h.b16 %v1661
        %v3001 = vunpack.c.l.b16 %v1662
        %v3002 = vunpack.c.h.b16 %v1662
        %v3003 = vunpack.c.l.b16 %v1663
        %v3004 = vunpack.c.h.b16 %v1663
        %v3005 = vunpack.c.l.b16 %v1664
        %v3006 = vunpack.c.h.b16 %v1664
        %v3007 = vunpack.c.l.b16 %v1665
        %v3008 = vunpack.c.h.b16 %v1665
        %v3009 = vunpack.c.l.b16 %v1666
        %v3010 = vunpack.c.h.b16 %v1666
        %v3011 = vunpack.c.l.b16 %v1667
        %v3012 = vunpack.c.h.b16 %v1667
        %v3013 = vunpack.c.l.b16 %v1668
        %v3014 = vunpack.c.h.b16 %v1668
        %v3015 = vunpack.c.l.b16 %v1669
        %v3016 = vunpack.c.h.b16 %v1669
        %v3017 = vunpack.c.l.b16 %v1670
        %v3018 = vunpack.c.h.b16 %v1670
        %v3019 = vunpack.c.l.b16 %v1671
        %v3020 = vunpack.c.h.b16 %v1671
        %v3021 = vunpack.c.l.b16 %v1672
        %v3022 = vunpack.c.h.b16 %v1672
        %v3023 = vunpack.c.l.b16 %v1673
        %v3024 = vunpack.c.h.b16 %v1673
        %v3025 = vunpack.c.l.b16 %v1674
        %v3026 = vunpack.c.h.b16 %v1674
        %v3027 = vunpack.c.l.b16 %v1675
        %v3028 = vunpack.c.h.b16 %v1675
        %v3029 = vunpack.c.l.b16 %v1676
        %v3030 = vunpack.c.h.b16 %v1676
        %v3031 = vunpack.c.l.b16 %v1677
        %v3032 = vunpack.c.h.b16 %v1677
        %v3033 = vunpack.c.l.b16 %v1678
        %v3034 = vunpack.c.h.b16 %v1678
        %v3035 = vunpack.c.l.b16 %v1679
        %v3036 = vunpack.c.h.b16 %v1679
        %v3037 = vunpack.c.l.b16 %v1680
        %v3038 = vunpack.c.h.b16 %v1680
        %v3039 = vunpack.c.l.b16 %v1681
        %v3040 = vunpack.c.h.b16 %v1681
        %v3041 = vunpack.c.l.b16 %v1682
        %v3042 = vunpack.c.h.b16 %v1682
        %v3043 = vunpack.c.l.b16 %v1683
        %v3044 = vunpack.c.h.b16 %v1683
        %v3045 = vunpack.c.l.b16 %v1684
        %v3046 = vunpack.c.h.b16 %v1684
        %v3047 = vunpack.c.l.b16 %v1685
        %v3048 = vunpack.c.h.b16 %v1685
        %v3049 = vunpack.c.l.b16 %v1686
        %v3050 = vunpack.c.h.b16 %v1686
        %v3051 = vunpack.c.l.b16 %v1687
        %v3052 = vunpack.c.h.b16 %v1687
        %v3053 = vunpack.c.l.b16 %v1688
        %v3054 = vunpack.c.h.b16 %v1688
        %v3055 = vunpack.c.l.b16 %v1689
        %v3056 = vunpack.c.h.b16 %v1689
        %v3057 = vunpack.c.l.b16 %v1690
        %v3058 = vunpack.c.h.b16 %v1690
        %v3059 = vunpack.c.l.b16 %v1691
        %v3060 = vunpack.c.h.b16 %v1691
        %v3061 = vunpack.c.l.b16 %v1692
        %v3062 = vunpack.c.h.b16 %v1692
        %v3063 = vunpack.c.l.b16 %v1693
        %v3064 = vunpack.c.h.b16 %v1693
        %v3065 = vunpack.c.l.b16 %v1694
        %v3066 = vunpack.c.h.b16 %v1694
        %v3067 = vunpack.c.l.b16 %v1695
        %v3068 = vunpack.c.h.b16 %v1695
        %v3069 = vunpack.c.l.b16 %v1696
        %v3070 = vunpack.c.h.b16 %v1696
        %v3071 = vunpack.c.l.b16 %v1697
        %v3072 = vunpack.c.h.b16 %v1697
        %v3073 = vunpack.c.l.b16 %v1698
        %v3074 = vunpack.c.h.b16 %v1698
        %v3075 = vunpack.c.l.b16 %v1699
        %v3076 = vunpack.c.h.b16 %v1699
        %v3077 = vunpack.c.l.b16 %v1700
        %v3078 = vunpack.c.h.b16 %v1700
        %v3079 = vunpack.c.l.b16 %v1701
        %v3080 = vunpack.c.h.b16 %v1701
        %v3081 = vunpack.c.l.b16 %v1702
        %v3082 = vunpack.c.h.b16 %v1702
        %v3083 = vunpack.c.l.b16 %v1703
        %v3084 = vunpack.c.h.b16 %v1703
        %v3085 = vunpack.c.l.b16 %v1704
        %v3086 = vunpack.c.h.b16 %v1704
        %v3087 = vunpack.c.l.b16 %v1705
        %v3088 = vunpack.c.h.b16 %v1705
        %v3089 = vunpack.c.l.b16 %v1706
        %v3090 = vunpack.c.h.b16 %v1706
        %v3091 = vunpack.c.l.b16 %v1707
        %v3092 = vunpack.c.h.b16 %v1707
        %v3093 = vunpack.c.l.b16 %v1708
        %v3094 = vunpack.c.h.b16 %v1708
        %v3095 = vunpack.c.l.b16 %v1709
        %v3096 = vunpack.c.h.b16 %v1709
        %v3097 = vunpack.c.l.b16 %v1710
        %v3098 = vunpack.c.h.b16 %v1710
        %v3099 = vunpack.c.l.b16 %v1711
        %v3100 = vunpack.c.h.b16 %v1711
        %v3101 = vunpack.c.l.b16 %v1712
        %v3102 = vunpack.c.h.b16 %v1712
        %v3103 = vunpack.c.l.b16 %v1713
        %v3104 = vunpack.c.h.b16 %v1713
        %v3105 = vunpack.c.l.b16 %v1714
        %v3106 = vunpack.c.h.b16 %v1714
        %v3107 = vunpack.c.l.b16 %v1715
        %v3108 = vunpack.c.h.b16 %v1715
        %v3109 = vunpack.c.l.b16 %v1716
        %v3110 = vunpack.c.h.b16 %v1716
        %v3111 = vunpack.c.l.b16 %v1717
        %v3112 = vunpack.c.h.b16 %v1717
        %v3113 = vunpack.c.l.b16 %v1718
        %v3114 = vunpack.c.h.b16 %v1718
        %v3115 = vunpack.c.l.b16 %v1719
        %v3116 = vunpack.c.h.b16 %v1719
        %v3117 = vunpack.c.l.b16 %v1720
        %v3118 = vunpack.c.h.b16 %v1720
        %v3119 = vunpack.c.l.b16 %v1721
        %v3120 = vunpack.c.h.b16 %v1721
        %v3121 = vunpack.c.l.b16 %v1722
        %v3122 = vunpack.c.h.b16 %v1722
        %v3123 = vunpack.c.l.b16 %v1723
        %v3124 = vunpack.c.h.b16 %v1723
        %v3125 = vunpack.c.l.b16 %v1724
        %v3126 = vunpack.c.h.b16 %v1724
        %v3127 = vunpack.c.l.b16 %v1725
        %v3128 = vunpack.c.h.b16 %v1725
        %v3129 = vunpack.c.l.b16 %v1726
        %v3130 = vunpack.c.h.b16 %v1726
        %v3131 = vunpack.c.l.b16 %v1727
        %v3132 = vunpack.c.h.b16 %v1727
        %v3133 = vunpack.c.l.b16 %v1728
        %v3134 = vunpack.c.h.b16 %v1728
        %v3135 = vunpack.c.l.b16 %v1729
        %v3136 = vunpack.c.h.b16 %v1729
        %v3137 = vunpack.c.l.b16 %v1730
        %v3138 = vunpack.c.h.b16 %v1730
        %v3139 = vunpack.c.l.b16 %v1731
        %v3140 = vunpack.c.h.b16 %v1731
        %v3141 = vunpack.c.l.b16 %v1732
        %v3142 = vunpack.c.h.b16 %v1732
        %v3143 = vunpack.c.l.b16 %v1733
        %v3144 = vunpack.c.h.b16 %v1733
        %v3145 = vunpack.c.l.b16 %v1734
        %v3146 = vunpack.c.h.b16 %v1734
        %v3147 = vunpack.c.l.b16 %v1735
        %v3148 = vunpack.c.h.b16 %v1735
        %v3149 = vunpack.c.l.b16 %v1736
        %v3150 = vunpack.c.h.b16 %v1736
        %v3151 = vunpack.c.l.b16 %v1737
        %v3152 = vunpack.c.h.b16 %v1737
        %v3153 = vunpack.c.l.b16 %v1738
        %v3154 = vunpack.c.h.b16 %v1738
        %v3155 = vunpack.c.l.b16 %v1739
        %v3156 = vunpack.c.h.b16 %v1739
        %v3157 = vunpack.c.l.b16 %v1740
        %v3158 = vunpack.c.h.b16 %v1740
        %v3159 = vunpack.c.l.b16 %v1741
        %v3160 = vunpack.c.h.b16 %v1741
        %v3161 = vunpack.c.l.b16 %v1742
        %v3162 = vunpack.c.h.b16 %v1742
        %v3163 = vunpack.c.l.b16 %v1743
        %v3164 = vunpack.c.h.b16 %v1743
        %v3165 = vunpack.c.l.b16 %v1744
        %v3166 = vunpack.c.h.b16 %v1744
        %v3167 = vunpack.c.l.b16 %v1745
        %v3168 = vunpack.c.h.b16 %v1745
        %v3169 = vunpack.c.l.b16 %v1746
        %v3170 = vunpack.c.h.b16 %v1746
        %v3171 = vunpack.c.l.b16 %v1747
        %v3172 = vunpack.c.h.b16 %v1747
        %v3173 = vunpack.c.l.b16 %v1748
        %v3174 = vunpack.c.h.b16 %v1748
        %v3175 = vunpack.c.l.b16 %v1749
        %v3176 = vunpack.c.h.b16 %v1749
        %v3177 = vunpack.c.l.b16 %v1750
        %v3178 = vunpack.c.h.b16 %v1750
        %v3179 = vunpack.c.l.b16 %v1751
        %v3180 = vunpack.c.h.b16 %v1751
        %v3181 = vunpack.c.l.b16 %v1752
        %v3182 = vunpack.c.h.b16 %v1752
        %v3183 = vunpack.c.l.b16 %v1753
        %v3184 = vunpack.c.h.b16 %v1753
        %v3185 = vunpack.c.l.b16 %v1754
        %v3186 = vunpack.c.h.b16 %v1754
        %v3187 = vunpack.c.l.b16 %v1755
        %v3188 = vunpack.c.h.b16 %v1755
        %v3189 = vunpack.c.l.b16 %v1756
        %v3190 = vunpack.c.h.b16 %v1756
        %v3191 = vunpack.c.l.b16 %v1757
        %v3192 = vunpack.c.h.b16 %v1757
        %v3193 = vunpack.c.l.b16 %v1758
        %v3194 = vunpack.c.h.b16 %v1758
        %v3195 = vunpack.c.l.b16 %v1759
        %v3196 = vunpack.c.h.b16 %v1759
        %v3197 = vunpack.c.l.b16 %v1760
        %v3198 = vunpack.c.h.b16 %v1760
        %v3199 = vunpack.c.l.b16 %v1761
        %v3200 = vunpack.c.h.b16 %v1761
        %v3201 = vunpack.c.l.b16 %v1762
        %v3202 = vunpack.c.h.b16 %v1762
        %v3203 = vunpack.c.l.b16 %v1763
        %v3204 = vunpack.c.h.b16 %v1763
        %v3205 = vunpack.c.l.b16 %v1764
        %v3206 = vunpack.c.h.b16 %v1764
        %v3207 = vunpack.c.l.b16 %v1765
        %v3208 = vunpack.c.h.b16 %v1765
        %v3209 = vunpack.c.l.b16 %v1766
        %v3210 = vunpack.c.h.b16 %v1766
        %v3211 = vunpack.c.l.b16 %v1767
        %v3212 = vunpack.c.h.b16 %v1767
        %v3213 = vunpack.c.l.b16 %v1768
        %v3214 = vunpack.c.h.b16 %v1768
        %v3215 = vunpack.c.l.b16 %v1769
        %v3216 = vunpack.c.h.b16 %v1769
        %v3217 = vunpack.c.l.b16 %v1770
        %v3218 = vunpack.c.h.b16 %v1770
        %v3219 = vunpack.c.l.b16 %v1771
        %v3220 = vunpack.c.h.b16 %v1771
        %v3221 = vunpack.c.l.b16 %v1772
        %v3222 = vunpack.c.h.b16 %v1772
        %v3223 = vunpack.c.l.b16 %v1773
        %v3224 = vunpack.c.h.b16 %v1773
        %v3225 = vunpack.c.l.b16 %v1774
        %v3226 = vunpack.c.h.b16 %v1774
        %v3227 = vunpack.c.l.b16 %v1775
        %v3228 = vunpack.c.h.b16 %v1775
        %v3229 = vunpack.c.l.b16 %v1776
        %v3230 = vunpack.c.h.b16 %v1776
        %v3231 = vunpack.c.l.b16 %v1777
        %v3232 = vunpack.c.h.b16 %v1777
        %v3233 = vunpack.c.l.b16 %v1778
        %v3234 = vunpack.c.h.b16 %v1778
        %v3235 = vunpack.c.l.b16 %v1779
        %v3236 = vunpack.c.h.b16 %v1779
        %v3237 = vunpack.c.l.b16 %v1780
        %v3238 = vunpack.c.h.b16 %v1780
        %v3239 = vunpack.c.l.b16 %v1781
        %v3240 = vunpack.c.h.b16 %v1781
        %v3241 = vunpack.c.l.b16 %v1782
        %v3242 = vunpack.c.h.b16 %v1782
        %v3243 = vunpack.c.l.b16 %v1783
        %v3244 = vunpack.c.h.b16 %v1783
        %v3245 = vunpack.c.l.b16 %v1784
        %v3246 = vunpack.c.h.b16 %v1784
        %v3247 = vunpack.c.l.b16 %v1785
        %v3248 = vunpack.c.h.b16 %v1785
        %v3249 = vunpack.c.l.b16 %v1786
        %v3250 = vunpack.c.h.b16 %v1786
        %v3251 = vunpack.c.l.b16 %v1787
        %v3252 = vunpack.c.h.b16 %v1787
        %v3253 = vunpack.c.l.b16 %v1788
        %v3254 = vunpack.c.h.b16 %v1788
        %v3255 = vunpack.c.l.b16 %v1789
        %v3256 = vunpack.c.h.b16 %v1789
        %v3257 = vunpack.c.l.b16 %v1790
        %v3258 = vunpack.c.h.b16 %v1790
        %v3259 = vunpack.c.l.b16 %v1791
        %v3260 = vunpack.c.h.b16 %v1791
        %v3261 = vunpack.c.l.b16 %v1792
        %v3262 = vunpack.c.h.b16 %v1792
        %v3263 = vunpack.c.l.b16 %v1793
        %v3264 = vunpack.c.h.b16 %v1793
        %v3265 = vunpack.c.l.b16 %v1794
        %v3266 = vunpack.c.h.b16 %v1794
        %v3267 = vunpack.c.l.b16 %v1795
        %v3268 = vunpack.c.h.b16 %v1795
        %v3269 = vunpack.c.l.b16 %v1796
        %v3270 = vunpack.c.h.b16 %v1796
        %v3271 = vunpack.c.l.b16 %v1797
        %v3272 = vunpack.c.h.b16 %v1797
        %v3273 = vunpack.c.l.b16 %v1798
        %v3274 = vunpack.c.h.b16 %v1798
        %v3275 = vunpack.c.l.b16 %v1799
        %v3276 = vunpack.c.h.b16 %v1799
        %v3277 = vunpack.c.l.b16 %v1800
        %v3278 = vunpack.c.h.b16 %v1800
        %v3279 = vunpack.c.l.b16 %v1801
        %v3280 = vunpack.c.h.b16 %v1801
        %v3281 = vunpack.c.l.b16 %v1802
        %v3282 = vunpack.c.h.b16 %v1802
        %v3283 = vunpack.c.l.b16 %v1803
        %v3284 = vunpack.c.h.b16 %v1803
        %v3285 = vunpack.c.l.b16 %v1804
        %v3286 = vunpack.c.h.b16 %v1804
        %v3287 = vunpack.c.l.b16 %v1805
        %v3288 = vunpack.c.h.b16 %v1805
        %v3289 = vunpack.c.l.b16 %v1806
        %v3290 = vunpack.c.h.b16 %v1806
        %v3291 = vunpack.c.l.b16 %v1807
        %v3292 = vunpack.c.h.b16 %v1807
        %v3293 = vunpack.c.l.b16 %v1808
        %v3294 = vunpack.c.h.b16 %v1808
        %v3295 = vunpack.c.l.b16 %v1809
        %v3296 = vunpack.c.h.b16 %v1809
        %v3297 = vunpack.c.l.b16 %v1810
        %v3298 = vunpack.c.h.b16 %v1810
        %v3299 = vunpack.c.l.b16 %v1811
        %v3300 = vunpack.c.h.b16 %v1811
        %v3301 = vunpack.c.l.b16 %v1812
        %v3302 = vunpack.c.h.b16 %v1812
        %v3303 = vunpack.c.l.b16 %v1813
        %v3304 = vunpack.c.h.b16 %v1813
        %v3305 = vunpack.c.l.b16 %v1814
        %v3306 = vunpack.c.h.b16 %v1814
        %v3307 = vunpack.c.l.b16 %v1815
        %v3308 = vunpack.c.h.b16 %v1815
        %v3309 = vunpack.c.l.b16 %v1816
        %v3310 = vunpack.c.h.b16 %v1816
        %v3311 = vunpack.c.l.b16 %v1817
        %v3312 = vunpack.c.h.b16 %v1817
        %v3313 = vunpack.c.l.b16 %v1818
        %v3314 = vunpack.c.h.b16 %v1818
        %v3315 = vunpack.c.l.b16 %v1819
        %v3316 = vunpack.c.h.b16 %v1819
        %v3317 = vunpack.c.l.b16 %v1820
        %v3318 = vunpack.c.h.b16 %v1820
        %v3319 = vunpack.c.l.b16 %v1821
        %v3320 = vunpack.c.h.b16 %v1821
        %v3321 = vunpack.c.l.b16 %v1822
        %v3322 = vunpack.c.h.b16 %v1822
        %v3323 = vunpack.c.l.b16 %v1823
        %v3324 = vunpack.c.h.b16 %v1823
        %v3325 = vunpack.c.l.b16 %v1824
        %v3326 = vunpack.c.h.b16 %v1824
        %v3327 = vunpack.c.l.b16 %v1825
        %v3328 = vunpack.c.h.b16 %v1825
        %v3329 = vunpack.c.l.b16 %v1826
        %v3330 = vunpack.c.h.b16 %v1826
        %v3331 = vunpack.c.l.b16 %v1827
        %v3332 = vunpack.c.h.b16 %v1827
        %v3333 = vunpack.c.l.b16 %v1828
        %v3334 = vunpack.c.h.b16 %v1828
        %v3335 = vunpack.c.l.b16 %v1829
        %v3336 = vunpack.c.h.b16 %v1829
        %v3337 = vunpack.c.l.b16 %v1830
        %v3338 = vunpack.c.h.b16 %v1830
        %v3339 = vunpack.c.l.b16 %v1831
        %v3340 = vunpack.c.h.b16 %v1831
        %v3341 = vunpack.c.l.b16 %v1832
        %v3342 = vunpack.c.h.b16 %v1832
        %v3343 = vunpack.c.l.b16 %v1833
        %v3344 = vunpack.c.h.b16 %v1833
        %v3345 = vunpack.c.l.b16 %v1834
        %v3346 = vunpack.c.h.b16 %v1834
        %v3347 = vunpack.c.l.b16 %v1835
        %v3348 = vunpack.c.h.b16 %v1835
        %v3349 = vunpack.c.l.b16 %v1836
        %v3350 = vunpack.c.h.b16 %v1836
        %v3351 = vunpack.c.l.b16 %v1837
        %v3352 = vunpack.c.h.b16 %v1837
        %v3353 = vunpack.c.l.b16 %v1838
        %v3354 = vunpack.c.h.b16 %v1838
        %v3355 = vunpack.c.l.b16 %v1839
        %v3356 = vunpack.c.h.b16 %v1839
        %v3357 = vunpack.c.l.b16 %v1840
        %v3358 = vunpack.c.h.b16 %v1840
        %v3359 = vunpack.c.l.b16 %v1841
        %v3360 = vunpack.c.h.b16 %v1841
        %v3361 = vunpack.c.l.b16 %v1842
        %v3362 = vunpack.c.h.b16 %v1842
        %v3363 = vunpack.c.l.b16 %v1843
        %v3364 = vunpack.c.h.b16 %v1843
        %v3365 = vunpack.c.l.b16 %v1844
        %v3366 = vunpack.c.h.b16 %v1844
        %v3367 = vunpack.c.l.b16 %v1845
        %v3368 = vunpack.c.h.b16 %v1845
        %v3369 = vunpack.c.l.b16 %v1846
        %v3370 = vunpack.c.h.b16 %v1846
        %v3371 = vunpack.c.l.b16 %v1847
        %v3372 = vunpack.c.h.b16 %v1847
        %v3373 = vunpack.c.l.b16 %v1848
        %v3374 = vunpack.c.h.b16 %v1848
        %v3375 = vunpack.c.l.b16 %v1849
        %v3376 = vunpack.c.h.b16 %v1849
        %v3377 = vunpack.c.l.b16 %v1850
        %v3378 = vunpack.c.h.b16 %v1850
        %v3379 = vunpack.c.l.b16 %v1851
        %v3380 = vunpack.c.h.b16 %v1851
        %v3381 = vunpack.c.l.b16 %v1852
        %v3382 = vunpack.c.h.b16 %v1852
        %v3383 = vunpack.c.l.b16 %v1853
        %v3384 = vunpack.c.h.b16 %v1853
        %v3385 = vunpack.c.l.b16 %v1854
        %v3386 = vunpack.c.h.b16 %v1854
        %v3387 = vunpack.c.l.b16 %v1855
        %v3388 = vunpack.c.h.b16 %v1855
        %v3389 = vunpack.c.l.b16 %v1856
        %v3390 = vunpack.c.h.b16 %v1856
        %v3391 = vunpack.c.l.b16 %v1857
        %v3392 = vunpack.c.h.b16 %v1857
        %v3393 = vunpack.c.l.b16 %v1858
        %v3394 = vunpack.c.h.b16 %v1858
        %v3395 = vpack.c.b16 %v2387, %v2371
        %v3396 = vpack.c.b16 %v2388, %v2372
        %v3397 = vpack.c.b16 %v2389, %v2373
        %v3398 = vpack.c.b16 %v2390, %v2374
        %v3399 = vpack.c.b16 %v2391, %v2375
        %v3400 = vpack.c.b16 %v2392, %v2376
        %v3401 = vpack.c.b16 %v2393, %v2377
        %v3402 = vpack.c.b16 %v2394, %v2378
        %v3403 = vpack.c.b16 %v2395, %v2379
        %v3404 = vpack.c.b16 %v2396, %v2380
        %v3405 = vpack.c.b16 %v2397, %v2381
        %v3406 = vpack.c.b16 %v2398, %v2382
        %v3407 = vpack.c.b16 %v2399, %v2383
        %v3408 = vpack.c.b16 %v2400, %v2384
        %v3409 = vpack.c.b16 %v2401, %v2385
        %v3410 = vpack.c.b16 %v2402, %v2386
        %v3411 = vpack.c.b16 %v2419, %v2403
        %v3412 = vpack.c.b16 %v2420, %v2404
        %v3413 = vpack.c.b16 %v2421, %v2405
        %v3414 = vpack.c.b16 %v2422, %v2406
        %v3415 = vpack.c.b16 %v2423, %v2407
        %v3416 = vpack.c.b16 %v2424, %v2408
        %v3417 = vpack.c.b16 %v2425, %v2409
        %v3418 = vpack.c.b16 %v2426, %v2410
        %v3419 = vpack.c.b16 %v2427, %v2411
        %v3420 = vpack.c.b16 %v2428, %v2412
        %v3421 = vpack.c.b16 %v2429, %v2413
        %v3422 = vpack.c.b16 %v2430, %v2414
        %v3423 = vpack.c.b16 %v2431, %v2415
        %v3424 = vpack.c.b16 %v2432, %v2416
        %v3425 = vpack.c.b16 %v2433, %v2417
        %v3426 = vpack.c.b16 %v2434, %v2418
        %v3427 = vpack.c.b16 %v2451, %v2435
        %v3428 = vpack.c.b16 %v2452, %v2436
        %v3429 = vpack.c.b16 %v2453, %v2437
        %v3430 = vpack.c.b16 %v2454, %v2438
        %v3431 = vpack.c.b16 %v2455, %v2439
        %v3432 = vpack.c.b16 %v2456, %v2440
        %v3433 = vpack.c.b16 %v2457, %v2441
        %v3434 = vpack.c.b16 %v2458, %v2442
        %v3435 = vpack.c.b16 %v2459, %v2443
        %v3436 = vpack.c.b16 %v2460, %v2444
        %v3437 = vpack.c.b16 %v2461, %v2445
        %v3438 = vpack.c.b16 %v2462, %v2446
        %v3439 = vpack.c.b16 %v2463, %v2447
        %v3440 = vpack.c.b16 %v2464, %v2448
        %v3441 = vpack.c.b16 %v2465, %v2449
        %v3442 = vpack.c.b16 %v2466, %v2450
        %v3443 = vpack.c.b16 %v2483, %v2467
        %v3444 = vpack.c.b16 %v2484, %v2468
        %v3445 = vpack.c.b16 %v2485, %v2469
        %v3446 = vpack.c.b16 %v2486, %v2470
        %v3447 = vpack.c.b16 %v2487, %v2471
        %v3448 = vpack.c.b16 %v2488, %v2472
        %v3449 = vpack.c.b16 %v2489, %v2473
        %v3450 = vpack.c.b16 %v2490, %v2474
        %v3451 = vpack.c.b16 %v2491, %v2475
        %v3452 = vpack.c.b16 %v2492, %v2476
        %v3453 = vpack.c.b16 %v2493, %v2477
        %v3454 = vpack.c.b16 %v2494, %v2478
        %v3455 = vpack.c.b16 %v2495, %v2479
        %v3456 = vpack.c.b16 %v2496, %v2480
        %v3457 = vpack.c.b16 %v2497, %v2481
        %v3458 = vpack.c.b16 %v2498, %v2482
        %v3459 = vpack.c.b16 %v2515, %v2499
        %v3460 = vpack.c.b16 %v2516, %v2500
        %v3461 = vpack.c.b16 %v2517, %v2501
        %v3462 = vpack.c.b16 %v2518, %v2502
        %v3463 = vpack.c.b16 %v2519, %v2503
        %v3464 = vpack.c.b16 %v2520, %v2504
        %v3465 = vpack.c.b16 %v2521, %v2505
        %v3466 = vpack.c.b16 %v2522, %v2506
        %v3467 = vpack.c.b16 %v2523, %v2507
        %v3468 = vpack.c.b16 %v2524, %v2508
        %v3469 = vpack.c.b16 %v2525, %v2509
        %v3470 = vpack.c.b16 %v2526, %v2510
        %v3471 = vpack.c.b16 %v2527, %v2511
        %v3472 = vpack.c.b16 %v2528, %v2512
        %v3473 = vpack.c.b16 %v2529, %v2513
        %v3474 = vpack.c.b16 %v2530, %v2514
        %v3475 = vpack.c.b16 %v2547, %v2531
        %v3476 = vpack.c.b16 %v2548, %v2532
        %v3477 = vpack.c.b16 %v2549, %v2533
        %v3478 = vpack.c.b16 %v2550, %v2534
        %v3479 = vpack.c.b16 %v2551, %v2535
        %v3480 = vpack.c.b16 %v2552, %v2536
        %v3481 = vpack.c.b16 %v2553, %v2537
        %v3482 = vpack.c.b16 %v2554, %v2538
        %v3483 = vpack.c.b16 %v2555, %v2539
        %v3484 = vpack.c.b16 %v2556, %v2540
        %v3485 = vpack.c.b16 %v2557, %v2541
        %v3486 = vpack.c.b16 %v2558, %v2542
        %v3487 = vpack.c.b16 %v2559, %v2543
        %v3488 = vpack.c.b16 %v2560, %v2544
        %v3489 = vpack.c.b16 %v2561, %v2545
        %v3490 = vpack.c.b16 %v2562, %v2546
        %v3491 = vpack.c.b16 %v2579, %v2563
        %v3492 = vpack.c.b16 %v2580, %v2564
        %v3493 = vpack.c.b16 %v2581, %v2565
        %v3494 = vpack.c.b16 %v2582, %v2566
        %v3495 = vpack.c.b16 %v2583, %v2567
        %v3496 = vpack.c.b16 %v2584, %v2568
        %v3497 = vpack.c.b16 %v2585, %v2569
        %v3498 = vpack.c.b16 %v2586, %v2570
        %v3499 = vpack.c.b16 %v2587, %v2571
        %v3500 = vpack.c.b16 %v2588, %v2572
        %v3501 = vpack.c.b16 %v2589, %v2573
        %v3502 = vpack.c.b16 %v2590, %v2574
        %v3503 = vpack.c.b16 %v2591, %v2575
        %v3504 = vpack.c.b16 %v2592, %v2576
        %v3505 = vpack.c.b16 %v2593, %v2577
        %v3506 = vpack.c.b16 %v2594, %v2578
        %v3507 = vpack.c.b16 %v2611, %v2595
        %v3508 = vpack.c.b16 %v2612, %v2596
        %v3509 = vpack.c.b16 %v2613, %v2597
        %v3510 = vpack.c.b16 %v2614, %v2598
        %v3511 = vpack.c.b16 %v2615, %v2599
        %v3512 = vpack.c.b16 %v2616, %v2600
        %v3513 = vpack.c.b16 %v2617, %v2601
        %v3514 = vpack.c.b16 %v2618, %v2602
        %v3515 = vpack.c.b16 %v2619, %v2603
        %v3516 = vpack.c.b16 %v2620, %v2604
        %v3517 = vpack.c.b16 %v2621, %v2605
        %v3518 = vpack.c.b16 %v2622, %v2606
        %v3519 = vpack.c.b16 %v2623, %v2607
        %v3520 = vpack.c.b16 %v2624, %v2608
        %v3521 = vpack.c.b16 %v2625, %v2609
        %v3522 = vpack.c.b16 %v2626, %v2610
        %v3523 = vpack.c.b16 %v2643, %v2627
        %v3524 = vpack.c.b16 %v2644, %v2628
        %v3525 = vpack.c.b16 %v2645, %v2629
        %v3526 = vpack.c.b16 %v2646, %v2630
        %v3527 = vpack.c.b16 %v2647, %v2631
        %v3528 = vpack.c.b16 %v2648, %v2632
        %v3529 = vpack.c.b16 %v2649, %v2633
        %v3530 = vpack.c.b16 %v2650, %v2634
        %v3531 = vpack.c.b16 %v2651, %v2635
        %v3532 = vpack.c.b16 %v2652, %v2636
        %v3533 = vpack.c.b16 %v2653, %v2637
        %v3534 = vpack.c.b16 %v2654, %v2638
        %v3535 = vpack.c.b16 %v2655, %v2639
        %v3536 = vpack.c.b16 %v2656, %v2640
        %v3537 = vpack.c.b16 %v2657, %v2641
        %v3538 = vpack.c.b16 %v2658, %v2642
        %v3539 = vpack.c.b16 %v2675, %v2659
        %v3540 = vpack.c.b16 %v2676, %v2660
        %v3541 = vpack.c.b16 %v2677, %v2661
        %v3542 = vpack.c.b16 %v2678, %v2662
        %v3543 = vpack.c.b16 %v2679, %v2663
        %v3544 = vpack.c.b16 %v2680, %v2664
        %v3545 = vpack.c.b16 %v2681, %v2665
        %v3546 = vpack.c.b16 %v2682, %v2666
        %v3547 = vpack.c.b16 %v2683, %v2667
        %v3548 = vpack.c.b16 %v2684, %v2668
        %v3549 = vpack.c.b16 %v2685, %v2669
        %v3550 = vpack.c.b16 %v2686, %v2670
        %v3551 = vpack.c.b16 %v2687, %v2671
        %v3552 = vpack.c.b16 %v2688, %v2672
        %v3553 = vpack.c.b16 %v2689, %v2673
        %v3554 = vpack.c.b16 %v2690, %v2674
        %v3555 = vpack.c.b16 %v2707, %v2691
        %v3556 = vpack.c.b16 %v2708, %v2692
        %v3557 = vpack.c.b16 %v2709, %v2693
        %v3558 = vpack.c.b16 %v2710, %v2694
        %v3559 = vpack.c.b16 %v2711, %v2695
        %v3560 = vpack.c.b16 %v2712, %v2696
        %v3561 = vpack.c.b16 %v2713, %v2697
        %v3562 = vpack.c.b16 %v2714, %v2698
        %v3563 = vpack.c.b16 %v2715, %v2699
        %v3564 = vpack.c.b16 %v2716, %v2700
        %v3565 = vpack.c.b16 %v2717, %v2701
        %v3566 = vpack.c.b16 %v2718, %v2702
        %v3567 = vpack.c.b16 %v2719, %v2703
        %v3568 = vpack.c.b16 %v2720, %v2704
        %v3569 = vpack.c.b16 %v2721, %v2705
        %v3570 = vpack.c.b16 %v2722, %v2706
        %v3571 = vpack.c.b16 %v2739, %v2723
        %v3572 = vpack.c.b16 %v2740, %v2724
        %v3573 = vpack.c.b16 %v2741, %v2725
        %v3574 = vpack.c.b16 %v2742, %v2726
        %v3575 = vpack.c.b16 %v2743, %v2727
        %v3576 = vpack.c.b16 %v2744, %v2728
        %v3577 = vpack.c.b16 %v2745, %v2729
        %v3578 = vpack.c.b16 %v2746, %v2730
        %v3579 = vpack.c.b16 %v2747, %v2731
        %v3580 = vpack.c.b16 %v2748, %v2732
        %v3581 = vpack.c.b16 %v2749, %v2733
        %v3582 = vpack.c.b16 %v2750, %v2734
        %v3583 = vpack.c.b16 %v2751, %v2735
        %v3584 = vpack.c.b16 %v2752, %v2736
        %v3585 = vpack.c.b16 %v2753, %v2737
        %v3586 = vpack.c.b16 %v2754, %v2738
        %v3587 = vpack.c.b16 %v2771, %v2755
        %v3588 = vpack.c.b16 %v2772, %v2756
        %v3589 = vpack.c.b16 %v2773, %v2757
        %v3590 = vpack.c.b16 %v2774, %v2758
        %v3591 = vpack.c.b16 %v2775, %v2759
        %v3592 = vpack.c.b16 %v2776, %v2760
        %v3593 = vpack.c.b16 %v2777, %v2761
        %v3594 = vpack.c.b16 %v2778, %v2762
        %v3595 = vpack.c.b16 %v2779, %v2763
        %v3596 = vpack.c.b16 %v2780, %v2764
        %v3597 = vpack.c.b16 %v2781, %v2765
        %v3598 = vpack.c.b16 %v2782, %v2766
        %v3599 = vpack.c.b16 %v2783, %v2767
        %v3600 = vpack.c.b16 %v2784, %v2768
        %v3601 = vpack.c.b16 %v2785, %v2769
        %v3602 = vpack.c.b16 %v2786, %v2770
        %v3603 = vpack.c.b16 %v2803, %v2787
        %v3604 = vpack.c.b16 %v2804, %v2788
        %v3605 = vpack.c.b16 %v2805, %v2789
        %v3606 = vpack.c.b16 %v2806, %v2790
        %v3607 = vpack.c.b16 %v2807, %v2791
        %v3608 = vpack.c.b16 %v2808, %v2792
        %v3609 = vpack.c.b16 %v2809, %v2793
        %v3610 = vpack.c.b16 %v2810, %v2794
        %v3611 = vpack.c.b16 %v2811, %v2795
        %v3612 = vpack.c.b16 %v2812, %v2796
        %v3613 = vpack.c.b16 %v2813, %v2797
        %v3614 = vpack.c.b16 %v2814, %v2798
        %v3615 = vpack.c.b16 %v2815, %v2799
        %v3616 = vpack.c.b16 %v2816, %v2800
        %v3617 = vpack.c.b16 %v2817, %v2801
        %v3618 = vpack.c.b16 %v2818, %v2802
        %v3619 = vpack.c.b16 %v2835, %v2819
        %v3620 = vpack.c.b16 %v2836, %v2820
        %v3621 = vpack.c.b16 %v2837, %v2821
        %v3622 = vpack.c.b16 %v2838, %v2822
        %v3623 = vpack.c.b16 %v2839, %v2823
        %v3624 = vpack.c.b16 %v2840, %v2824
        %v3625 = vpack.c.b16 %v2841, %v2825
        %v3626 = vpack.c.b16 %v2842, %v2826
        %v3627 = vpack.c.b16 %v2843, %v2827
        %v3628 = vpack.c.b16 %v2844, %v2828
        %v3629 = vpack.c.b16 %v2845, %v2829
        %v3630 = vpack.c.b16 %v2846, %v2830
        %v3631 = vpack.c.b16 %v2847, %v2831
        %v3632 = vpack.c.b16 %v2848, %v2832
        %v3633 = vpack.c.b16 %v2849, %v2833
        %v3634 = vpack.c.b16 %v2850, %v2834
        %v3635 = vpack.c.b16 %v2867, %v2851
        %v3636 = vpack.c.b16 %v2868, %v2852
        %v3637 = vpack.c.b16 %v2869, %v2853
        %v3638 = vpack.c.b16 %v2870, %v2854
        %v3639 = vpack.c.b16 %v2871, %v2855
        %v3640 = vpack.c.b16 %v2872, %v2856
        %v3641 = vpack.c.b16 %v2873, %v2857
        %v3642 = vpack.c.b16 %v2874, %v2858
        %v3643 = vpack.c.b16 %v2875, %v2859
        %v3644 = vpack.c.b16 %v2876, %v2860
        %v3645 = vpack.c.b16 %v2877, %v2861
        %v3646 = vpack.c.b16 %v2878, %v2862
        %v3647 = vpack.c.b16 %v2879, %v2863
        %v3648 = vpack.c.b16 %v2880, %v2864
        %v3649 = vpack.c.b16 %v2881, %v2865
        %v3650 = vpack.c.b16 %v2882, %v2866
        %v3651 = vpack.c.b16 %v2899, %v2883
        %v3652 = vpack.c.b16 %v2900, %v2884
        %v3653 = vpack.c.b16 %v2901, %v2885
        %v3654 = vpack.c.b16 %v2902, %v2886
        %v3655 = vpack.c.b16 %v2903, %v2887
        %v3656 = vpack.c.b16 %v2904, %v2888
        %v3657 = vpack.c.b16 %v2905, %v2889
        %v3658 = vpack.c.b16 %v2906, %v2890
        %v3659 = vpack.c.b16 %v2907, %v2891
        %v3660 = vpack.c.b16 %v2908, %v2892
        %v3661 = vpack.c.b16 %v2909, %v2893
        %v3662 = vpack.c.b16 %v2910, %v2894
        %v3663 = vpack.c.b16 %v2911, %v2895
        %v3664 = vpack.c.b16 %v2912, %v2896
        %v3665 = vpack.c.b16 %v2913, %v2897
        %v3666 = vpack.c.b16 %v2914, %v2898
        %v3667 = vpack.c.b16 %v2931, %v2915
        %v3668 = vpack.c.b16 %v2932, %v2916
        %v3669 = vpack.c.b16 %v2933, %v2917
        %v3670 = vpack.c.b16 %v2934, %v2918
        %v3671 = vpack.c.b16 %v2935, %v2919
        %v3672 = vpack.c.b16 %v2936, %v2920
        %v3673 = vpack.c.b16 %v2937, %v2921
        %v3674 = vpack.c.b16 %v2938, %v2922
        %v3675 = vpack.c.b16 %v2939, %v2923
        %v3676 = vpack.c.b16 %v2940, %v2924
        %v3677 = vpack.c.b16 %v2941, %v2925
        %v3678 = vpack.c.b16 %v2942, %v2926
        %v3679 = vpack.c.b16 %v2943, %v2927
        %v3680 = vpack.c.b16 %v2944, %v2928
        %v3681 = vpack.c.b16 %v2945, %v2929
        %v3682 = vpack.c.b16 %v2946, %v2930
        %v3683 = vpack.c.b16 %v2963, %v2947
        %v3684 = vpack.c.b16 %v2964, %v2948
        %v3685 = vpack.c.b16 %v2965, %v2949
        %v3686 = vpack.c.b16 %v2966, %v2950
        %v3687 = vpack.c.b16 %v2967, %v2951
        %v3688 = vpack.c.b16 %v2968, %v2952
        %v3689 = vpack.c.b16 %v2969, %v2953
        %v3690 = vpack.c.b16 %v2970, %v2954
        %v3691 = vpack.c.b16 %v2971, %v2955
        %v3692 = vpack.c.b16 %v2972, %v2956
        %v3693 = vpack.c.b16 %v2973, %v2957
        %v3694 = vpack.c.b16 %v2974, %v2958
        %v3695 = vpack.c.b16 %v2975, %v2959
        %v3696 = vpack.c.b16 %v2976, %v2960
        %v3697 = vpack.c.b16 %v2977, %v2961
        %v3698 = vpack.c.b16 %v2978, %v2962
        %v3699 = vpack.c.b16 %v2995, %v2979
        %v3700 = vpack.c.b16 %v2996, %v2980
        %v3701 = vpack.c.b16 %v2997, %v2981
        %v3702 = vpack.c.b16 %v2998, %v2982
        %v3703 = vpack.c.b16 %v2999, %v2983
        %v3704 = vpack.c.b16 %v3000, %v2984
        %v3705 = vpack.c.b16 %v3001, %v2985
        %v3706 = vpack.c.b16 %v3002, %v2986
        %v3707 = vpack.c.b16 %v3003, %v2987
        %v3708 = vpack.c.b16 %v3004, %v2988
        %v3709 = vpack.c.b16 %v3005, %v2989
        %v3710 = vpack.c.b16 %v3006, %v2990
        %v3711 = vpack.c.b16 %v3007, %v2991
        %v3712 = vpack.c.b16 %v3008, %v2992
        %v3713 = vpack.c.b16 %v3009, %v2993
        %v3714 = vpack.c.b16 %v3010, %v2994
        %v3715 = vpack.c.b16 %v3027, %v3011
        %v3716 = vpack.c.b16 %v3028, %v3012
        %v3717 = vpack.c.b16 %v3029, %v3013
        %v3718 = vpack.c.b16 %v3030, %v3014
        %v3719 = vpack.c.b16 %v3031, %v3015
        %v3720 = vpack.c.b16 %v3032, %v3016
        %v3721 = vpack.c.b16 %v3033, %v3017
        %v3722 = vpack.c.b16 %v3034, %v3018
        %v3723 = vpack.c.b16 %v3035, %v3019
        %v3724 = vpack.c.b16 %v3036, %v3020
        %v3725 = vpack.c.b16 %v3037, %v3021
        %v3726 = vpack.c.b16 %v3038, %v3022
        %v3727 = vpack.c.b16 %v3039, %v3023
        %v3728 = vpack.c.b16 %v3040, %v3024
        %v3729 = vpack.c.b16 %v3041, %v3025
        %v3730 = vpack.c.b16 %v3042, %v3026
        %v3731 = vpack.c.b16 %v3059, %v3043
        %v3732 = vpack.c.b16 %v3060, %v3044
        %v3733 = vpack.c.b16 %v3061, %v3045
        %v3734 = vpack.c.b16 %v3062, %v3046
        %v3735 = vpack.c.b16 %v3063, %v3047
        %v3736 = vpack.c.b16 %v3064, %v3048
        %v3737 = vpack.c.b16 %v3065, %v3049
        %v3738 = vpack.c.b16 %v3066, %v3050
        %v3739 = vpack.c.b16 %v3067, %v3051
        %v3740 = vpack.c.b16 %v3068, %v3052
        %v3741 = vpack.c.b16 %v3069, %v3053
        %v3742 = vpack.c.b16 %v3070, %v3054
        %v3743 = vpack.c.b16 %v3071, %v3055
        %v3744 = vpack.c.b16 %v3072, %v3056
        %v3745 = vpack.c.b16 %v3073, %v3057
        %v3746 = vpack.c.b16 %v3074, %v3058
        %v3747 = vpack.c.b16 %v3091, %v3075
        %v3748 = vpack.c.b16 %v3092, %v3076
        %v3749 = vpack.c.b16 %v3093, %v3077
        %v3750 = vpack.c.b16 %v3094, %v3078
        %v3751 = vpack.c.b16 %v3095, %v3079
        %v3752 = vpack.c.b16 %v3096, %v3080
        %v3753 = vpack.c.b16 %v3097, %v3081
        %v3754 = vpack.c.b16 %v3098, %v3082
        %v3755 = vpack.c.b16 %v3099, %v3083
        %v3756 = vpack.c.b16 %v3100, %v3084
        %v3757 = vpack.c.b16 %v3101, %v3085
        %v3758 = vpack.c.b16 %v3102, %v3086
        %v3759 = vpack.c.b16 %v3103, %v3087
        %v3760 = vpack.c.b16 %v3104, %v3088
        %v3761 = vpack.c.b16 %v3105, %v3089
        %v3762 = vpack.c.b16 %v3106, %v3090
        %v3763 = vpack.c.b16 %v3123, %v3107
        %v3764 = vpack.c.b16 %v3124, %v3108
        %v3765 = vpack.c.b16 %v3125, %v3109
        %v3766 = vpack.c.b16 %v3126, %v3110
        %v3767 = vpack.c.b16 %v3127, %v3111
        %v3768 = vpack.c.b16 %v3128, %v3112
        %v3769 = vpack.c.b16 %v3129, %v3113
        %v3770 = vpack.c.b16 %v3130, %v3114
        %v3771 = vpack.c.b16 %v3131, %v3115
        %v3772 = vpack.c.b16 %v3132, %v3116
        %v3773 = vpack.c.b16 %v3133, %v3117
        %v3774 = vpack.c.b16 %v3134, %v3118
        %v3775 = vpack.c.b16 %v3135, %v3119
        %v3776 = vpack.c.b16 %v3136, %v3120
        %v3777 = vpack.c.b16 %v3137, %v3121
        %v3778 = vpack.c.b16 %v3138, %v3122
        %v3779 = vpack.c.b16 %v3155, %v3139
        %v3780 = vpack.c.b16 %v3156, %v3140
        %v3781 = vpack.c.b16 %v3157, %v3141
        %v3782 = vpack.c.b16 %v3158, %v3142
        %v3783 = vpack.c.b16 %v3159, %v3143
        %v3784 = vpack.c.b16 %v3160, %v3144
        %v3785 = vpack.c.b16 %v3161, %v3145
        %v3786 = vpack.c.b16 %v3162, %v3146
        %v3787 = vpack.c.b16 %v3163, %v3147
        %v3788 = vpack.c.b16 %v3164, %v3148
        %v3789 = vpack.c.b16 %v3165, %v3149
        %v3790 = vpack.c.b16 %v3166, %v3150
        %v3791 = vpack.c.b16 %v3167, %v3151
        %v3792 = vpack.c.b16 %v3168, %v3152
        %v3793 = vpack.c.b16 %v3169, %v3153
        %v3794 = vpack.c.b16 %v3170, %v3154
        %v3795 = vpack.c.b16 %v3187, %v3171
        %v3796 = vpack.c.b16 %v3188, %v3172
        %v3797 = vpack.c.b16 %v3189, %v3173
        %v3798 = vpack.c.b16 %v3190, %v3174
        %v3799 = vpack.c.b16 %v3191, %v3175
        %v3800 = vpack.c.b16 %v3192, %v3176
        %v3801 = vpack.c.b16 %v3193, %v3177
        %v3802 = vpack.c.b16 %v3194, %v3178
        %v3803 = vpack.c.b16 %v3195, %v3179
        %v3804 = vpack.c.b16 %v3196, %v3180
        %v3805 = vpack.c.b16 %v3197, %v3181
        %v3806 = vpack.c.b16 %v3198, %v3182
        %v3807 = vpack.c.b16 %v3199, %v3183
        %v3808 = vpack.c.b16 %v3200, %v3184
        %v3809 = vpack.c.b16 %v3201, %v3185
        %v3810 = vpack.c.b16 %v3202, %v3186
        %v3811 = vpack.c.b16 %v3219, %v3203
        %v3812 = vpack.c.b16 %v3220, %v3204
        %v3813 = vpack.c.b16 %v3221, %v3205
        %v3814 = vpack.c.b16 %v3222, %v3206
        %v3815 = vpack.c.b16 %v3223, %v3207
        %v3816 = vpack.c.b16 %v3224, %v3208
        %v3817 = vpack.c.b16 %v3225, %v3209
        %v3818 = vpack.c.b16 %v3226, %v3210
        %v3819 = vpack.c.b16 %v3227, %v3211
        %v3820 = vpack.c.b16 %v3228, %v3212
        %v3821 = vpack.c.b16 %v3229, %v3213
        %v3822 = vpack.c.b16 %v3230, %v3214
        %v3823 = vpack.c.b16 %v3231, %v3215
        %v3824 = vpack.c.b16 %v3232, %v3216
        %v3825 = vpack.c.b16 %v3233, %v3217
        %v3826 = vpack.c.b16 %v3234, %v3218
        %v3827 = vpack.c.b16 %v3251, %v3235
        %v3828 = vpack.c.b16 %v3252, %v3236
        %v3829 = vpack.c.b16 %v3253, %v3237
        %v3830 = vpack.c.b16 %v3254, %v3238
        %v3831 = vpack.c.b16 %v3255, %v3239
        %v3832 = vpack.c.b16 %v3256, %v3240
        %v3833 = vpack.c.b16 %v3257, %v3241
        %v3834 = vpack.c.b16 %v3258, %v3242
        %v3835 = vpack.c.b16 %v3259, %v3243
        %v3836 = vpack.c.b16 %v3260, %v3244
        %v3837 = vpack.c.b16 %v3261, %v3245
        %v3838 = vpack.c.b16 %v3262, %v3246
        %v3839 = vpack.c.b16 %v3263, %v3247
        %v3840 = vpack.c.b16 %v3264, %v3248
        %v3841 = vpack.c.b16 %v3265, %v3249
        %v3842 = vpack.c.b16 %v3266, %v3250
        %v3843 = vpack.c.b16 %v3283, %v3267
        %v3844 = vpack.c.b16 %v3284, %v3268
        %v3845 = vpack.c.b16 %v3285, %v3269
        %v3846 = vpack.c.b16 %v3286, %v3270
        %v3847 = vpack.c.b16 %v3287, %v3271
        %v3848 = vpack.c.b16 %v3288, %v3272
        %v3849 = vpack.c.b16 %v3289, %v3273
        %v3850 = vpack.c.b16 %v3290, %v3274
        %v3851 = vpack.c.b16 %v3291, %v3275
        %v3852 = vpack.c.b16 %v3292, %v3276
        %v3853 = vpack.c.b16 %v3293, %v3277
        %v3854 = vpack.c.b16 %v3294, %v3278
        %v3855 = vpack.c.b16 %v3295, %v3279
        %v3856 = vpack.c.b16 %v3296, %v3280
        %v3857 = vpack.c.b16 %v3297, %v3281
        %v3858 = vpack.c.b16 %v3298, %v3282
        %v3859 = vpack.c.b16 %v3315, %v3299
        %v3860 = vpack.c.b16 %v3316, %v3300
        %v3861 = vpack.c.b16 %v3317, %v3301
        %v3862 = vpack.c.b16 %v3318, %v3302
        %v3863 = vpack.c.b16 %v3319, %v3303
        %v3864 = vpack.c.b16 %v3320, %v3304
        %v3865 = vpack.c.b16 %v3321, %v3305
        %v3866 = vpack.c.b16 %v3322, %v3306
        %v3867 = vpack.c.b16 %v3323, %v3307
        %v3868 = vpack.c.b16 %v3324, %v3308
        %v3869 = vpack.c.b16 %v3325, %v3309
        %v3870 = vpack.c.b16 %v3326, %v3310
        %v3871 = vpack.c.b16 %v3327, %v3311
        %v3872 = vpack.c.b16 %v3328, %v3312
        %v3873 = vpack.c.b16 %v3329, %v3313
        %v3874 = vpack.c.b16 %v3330, %v3314
        %v3875 = vpack.c.b16 %v3347, %v3331
        %v3876 = vpack.c.b16 %v3348, %v3332
        %v3877 = vpack.c.b16 %v3349, %v3333
        %v3878 = vpack.c.b16 %v3350, %v3334
        %v3879 = vpack.c.b16 %v3351, %v3335
        %v3880 = vpack.c.b16 %v3352, %v3336
        %v3881 = vpack.c.b16 %v3353, %v3337
        %v3882 = vpack.c.b16 %v3354, %v3338
        %v3883 = vpack.c.b16 %v3355, %v3339
        %v3884 = vpack.c.b16 %v3356, %v3340
        %v3885 = vpack.c.b16 %v3357, %v3341
        %v3886 = vpack.c.b16 %v3358, %v3342
        %v3887 = vpack.c.b16 %v3359, %v3343
        %v3888 = vpack.c.b16 %v3360, %v3344
        %v3889 = vpack.c.b16 %v3361, %v3345
        %v3890 = vpack.c.b16 %v3362, %v3346
        %v3891 = vpack.c.b16 %v3379, %v3363
        %v3892 = vpack.c.b16 %v3380, %v3364
        %v3893 = vpack.c.b16 %v3381, %v3365
        %v3894 = vpack.c.b16 %v3382, %v3366
        %v3895 = vpack.c.b16 %v3383, %v3367
        %v3896 = vpack.c.b16 %v3384, %v3368
        %v3897 = vpack.c.b16 %v3385, %v3369
        %v3898 = vpack.c.b16 %v3386, %v3370
        %v3899 = vpack.c.b16 %v3387, %v3371
        %v3900 = vpack.c.b16 %v3388, %v3372
        %v3901 = vpack.c.b16 %v3389, %v3373
        %v3902 = vpack.c.b16 %v3390, %v3374
        %v3903 = vpack.c.b16 %v3391, %v3375
        %v3904 = vpack.c.b16 %v3392, %v3376
        %v3905 = vpack.c.b16 %v3393, %v3377
        %v3906 = vpack.c.b16 %v3394, %v3378
        %4419 = vmatprep.subr.bf16.mxu0 0
        %4420 = vmatpush1.bf16.msra.mxu0 %v1219
        %4421 = vmatprep.subr.bf16.mxu0 0
        %4422 = vmatpush1.bf16.msra.mxu0 %v1220
        %4423 = vmatprep.subr.bf16.mxu0 0
        %4424 = vmatpush1.bf16.msra.mxu0 %v1221
        %4425 = vmatprep.subr.bf16.mxu0 0
        %4426 = vmatpush1.bf16.msra.mxu0 %v1222
        %4427 = vmatprep.subr.bf16.mxu0 0
        %4428 = vmatpush1.bf16.msra.mxu0 %v1223
        %4429 = vmatprep.subr.bf16.mxu0 0
        %4430 = vmatpush1.bf16.msra.mxu0 %v1224
        %4431 = vmatprep.subr.bf16.mxu0 0
        %4432 = vmatpush1.bf16.msra.mxu0 %v1225
        %4433 = vmatprep.subr.bf16.mxu0 0
        %4434 = vmatpush1.bf16.msra.mxu0 %v1226
        %4435 = vmatprep.subr.bf16.mxu0 0
        %4436 = vmatpush1.bf16.msra.mxu0 %v1227
        %4437 = vmatprep.subr.bf16.mxu0 0
        %4438 = vmatpush1.bf16.msra.mxu0 %v1228
        %4439 = vmatprep.subr.bf16.mxu0 0
        %4440 = vmatpush1.bf16.msra.mxu0 %v1229
        %4441 = vmatprep.subr.bf16.mxu0 0
        %4442 = vmatpush1.bf16.msra.mxu0 %v1230
        %4443 = vmatprep.subr.bf16.mxu0 0
        %4444 = vmatpush1.bf16.msra.mxu0 %v1231
        %4445 = vmatprep.subr.bf16.mxu0 0
        %4446 = vmatpush1.bf16.msra.mxu0 %v1232
        %4447 = vmatprep.subr.bf16.mxu0 0
        %4448 = vmatpush1.bf16.msra.mxu0 %v1233
        %4449 = vmatprep.subr.bf16.mxu0 0
        %4450 = vmatpush1.bf16.msra.mxu0 %v1234
        %4451 = vmatprep.mubr.bf16.mxu0 %v3396
        %4452 = vmatmul.mubr.bf16.gmra.mrb[0].mxu0 %v3395
        %v4453 = vpop.f32.mrb[0].mxu0
        %v4454 = vadd.f32 0.0, %v4453
        %v4455 = vpop.f32.mrb[0].mxu0
        %v4456 = vpop.f32.mrb[0].mxu0
        %v4457 = vadd.f32 0.0, %v4456
        %v4458 = vpop.f32.mrb[0].mxu0
        %4459 = vmatprep.mubr.bf16.mxu0 %v3412
        %4460 = vmatmul.mubr.bf16.gmra.mrb[0].mxu0 %v3411
        %v4461 = vpop.f32.mrb[0].mxu0
        %v4462 = vadd.f32 0.0, %v4461
        %v4463 = vpop.f32.mrb[0].mxu0
        %v4464 = vpop.f32.mrb[0].mxu0
        %v4465 = vadd.f32 0.0, %v4464
        %v4466 = vpop.f32.mrb[0].mxu0
        %4467 = vmatprep.mubr.bf16.mxu0 %v3428
        %4468 = vmatmul.mubr.bf16.gmra.mrb[0].mxu0 %v3427
        %v4469 = vpop.f32.mrb[0].mxu0
        %v4470 = vadd.f32 0.0, %v4469
        %v4471 = vpop.f32.mrb[0].mxu0
        %v4472 = vpop.f32.mrb[0].mxu0
        %v4473 = vadd.f32 0.0, %v4472
        %v4474 = vpop.f32.mrb[0].mxu0
        %4475 = vmatprep.mubr.bf16.mxu0 %v3444
        %4476 = vmatmul.mubr.bf16.gmra.mrb[0].mxu0 %v3443
        %v4477 = vpop.f32.mrb[0].mxu0
        %v4478 = vadd.f32 0.0, %v4477
        %v4479 = vpop.f32.mrb[0].mxu0
        %v4480 = vpop.f32.mrb[0].mxu0
        %v4481 = vadd.f32 0.0, %v4480
        %v4482 = vpop.f32.mrb[0].mxu0
        %4483 = vmatprep.mubr.bf16.mxu0 %v3460
        %4484 = vmatmul.mubr.bf16.gmra.mrb[0].mxu0 %v3459
        %v4485 = vpop.f32.mrb[0].mxu0
        %v4486 = vadd.f32 0.0, %v4485
        %v4487 = vpop.f32.mrb[0].mxu0
        %v4488 = vpop.f32.mrb[0].mxu0
        %v4489 = vadd.f32 0.0, %v4488
        %v4490 = vpop.f32.mrb[0].mxu0
        %4491 = vmatprep.mubr.bf16.mxu0 %v3476
        %4492 = vmatmul.mubr.bf16.gmra.mrb[0].mxu0 %v3475
        %v4493 = vpop.f32.mrb[0].mxu0
        %v4494 = vadd.f32 0.0, %v4493
        %v4495 = vpop.f32.mrb[0].mxu0
        %v4496 = vpop.f32.mrb[0].mxu0
        %v4497 = vadd.f32 0.0, %v4496
        %v4498 = vpop.f32.mrb[0].mxu0
        %4499 = vmatprep.mubr.bf16.mxu0 %v3492
        %4500 = vmatmul.mubr.bf16.gmra.mrb[0].mxu0 %v3491
        %v4501 = vpop.f32.mrb[0].mxu0
        %v4502 = vadd.f32 0.0, %v4501
        %v4503 = vpop.f32.mrb[0].mxu0
        %v4504 = vpop.f32.mrb[0].mxu0
        %v4505 = vadd.f32 0.0, %v4504
        %v4506 = vpop.f32.mrb[0].mxu0
        %4507 = vmatprep.mubr.bf16.mxu0 %v3508
        %4508 = vmatmul.mubr.bf16.gmra.mrb[0].mxu0 %v3507
        %v4509 = vpop.f32.mrb[0].mxu0
        %v4510 = vadd.f32 0.0, %v4509
        %v4511 = vpop.f32.mrb[0].mxu0
        %v4512 = vpop.f32.mrb[0].mxu0
        %v4513 = vadd.f32 0.0, %v4512
        %v4514 = vpop.f32.mrb[0].mxu0
        %4515 = vmatprep.mubr.bf16.mxu0 %v3524
        %4516 = vmatmul.mubr.bf16.gmra.mrb[0].mxu0 %v3523
        %v4517 = vpop.f32.mrb[0].mxu0
        %v4518 = vadd.f32 0.0, %v4517
        %v4519 = vpop.f32.mrb[0].mxu0
        %v4520 = vpop.f32.mrb[0].mxu0
        %v4521 = vadd.f32 0.0, %v4520
        %v4522 = vpop.f32.mrb[0].mxu0
        %4523 = vmatprep.mubr.bf16.mxu0 %v3540
        %4524 = vmatmul.mubr.bf16.gmra.mrb[0].mxu0 %v3539
        %v4525 = vpop.f32.mrb[0].mxu0
        %v4526 = vadd.f32 0.0, %v4525
        %v4527 = vpop.f32.mrb[0].mxu0
        %v4528 = vpop.f32.mrb[0].mxu0
        %v4529 = vadd.f32 0.0, %v4528
        %v4530 = vpop.f32.mrb[0].mxu0
        %4531 = vmatprep.mubr.bf16.mxu0 %v3556
        %4532 = vmatmul.mubr.bf16.gmra.mrb[0].mxu0 %v3555
        %v4533 = vpop.f32.mrb[0].mxu0
        %v4534 = vadd.f32 0.0, %v4533
        %v4535 = vpop.f32.mrb[0].mxu0
        %v4536 = vpop.f32.mrb[0].mxu0
        %v4537 = vadd.f32 0.0, %v4536
        %v4538 = vpop.f32.mrb[0].mxu0
        %4539 = vmatprep.mubr.bf16.mxu0 %v3572
        %4540 = vmatmul.mubr.bf16.gmra.mrb[0].mxu0 %v3571
        %v4541 = vpop.f32.mrb[0].mxu0
        %v4542 = vadd.f32 0.0, %v4541
        %v4543 = vpop.f32.mrb[0].mxu0
        %v4544 = vpop.f32.mrb[0].mxu0
        %v4545 = vadd.f32 0.0, %v4544
        %v4546 = vpop.f32.mrb[0].mxu0
        %4547 = vmatprep.mubr.bf16.mxu0 %v3588
        %4548 = vmatmul.mubr.bf16.gmra.mrb[0].mxu0 %v3587
        %v4549 = vpop.f32.mrb[0].mxu0
        %v4550 = vadd.f32 0.0, %v4549
        %v4551 = vpop.f32.mrb[0].mxu0
        %v4552 = vpop.f32.mrb[0].mxu0
        %v4553 = vadd.f32 0.0, %v4552
        %v4554 = vpop.f32.mrb[0].mxu0
        %4555 = vmatprep.mubr.bf16.mxu0 %v3604
        %4556 = vmatmul.mubr.bf16.gmra.mrb[0].mxu0 %v3603
        %v4557 = vpop.f32.mrb[0].mxu0
        %v4558 = vadd.f32 0.0, %v4557
        %v4559 = vpop.f32.mrb[0].mxu0
        %v4560 = vpop.f32.mrb[0].mxu0
        %v4561 = vadd.f32 0.0, %v4560
        %v4562 = vpop.f32.mrb[0].mxu0
        %4563 = vmatprep.mubr.bf16.mxu0 %v3620
        %4564 = vmatmul.mubr.bf16.gmra.mrb[0].mxu0 %v3619
        %v4565 = vpop.f32.mrb[0].mxu0
        %v4566 = vadd.f32 0.0, %v4565
        %v4567 = vpop.f32.mrb[0].mxu0
        %v4568 = vpop.f32.mrb[0].mxu0
        %v4569 = vadd.f32 0.0, %v4568
        %v4570 = vpop.f32.mrb[0].mxu0
        %4571 = vmatprep.mubr.bf16.mxu0 %v3636
        %4572 = vmatmul.mubr.bf16.gmra.mrb[0].mxu0 %v3635
        %v4573 = vpop.f32.mrb[0].mxu0
        %v4574 = vadd.f32 0.0, %v4573
        %v4575 = vpop.f32.mrb[0].mxu0
        %v4576 = vpop.f32.mrb[0].mxu0
        %v4577 = vadd.f32 0.0, %v4576
        %v4578 = vpop.f32.mrb[0].mxu0
        %4579 = vmatprep.mubr.bf16.mxu0 %v3652
        %4580 = vmatmul.mubr.bf16.gmra.mrb[0].mxu0 %v3651
        %v4581 = vpop.f32.mrb[0].mxu0
        %v4582 = vadd.f32 0.0, %v4581
        %v4583 = vpop.f32.mrb[0].mxu0
        %v4584 = vpop.f32.mrb[0].mxu0
        %v4585 = vadd.f32 0.0, %v4584
        %v4586 = vpop.f32.mrb[0].mxu0
        %4587 = vmatprep.mubr.bf16.mxu0 %v3668
        %4588 = vmatmul.mubr.bf16.gmra.mrb[0].mxu0 %v3667
        %v4589 = vpop.f32.mrb[0].mxu0
        %v4590 = vadd.f32 0.0, %v4589
        %v4591 = vpop.f32.mrb[0].mxu0
        %v4592 = vpop.f32.mrb[0].mxu0
        %v4593 = vadd.f32 0.0, %v4592
        %v4594 = vpop.f32.mrb[0].mxu0
        %4595 = vmatprep.mubr.bf16.mxu0 %v3684
        %4596 = vmatmul.mubr.bf16.gmra.mrb[0].mxu0 %v3683
        %v4597 = vpop.f32.mrb[0].mxu0
        %v4598 = vadd.f32 0.0, %v4597
        %v4599 = vpop.f32.mrb[0].mxu0
        %v4600 = vpop.f32.mrb[0].mxu0
        %v4601 = vadd.f32 0.0, %v4600
        %v4602 = vpop.f32.mrb[0].mxu0
        %4603 = vmatprep.mubr.bf16.mxu0 %v3700
        %4604 = vmatmul.mubr.bf16.gmra.mrb[0].mxu0 %v3699
        %v4605 = vpop.f32.mrb[0].mxu0
        %v4606 = vadd.f32 0.0, %v4605
        %v4607 = vpop.f32.mrb[0].mxu0
        %v4608 = vpop.f32.mrb[0].mxu0
        %v4609 = vadd.f32 0.0, %v4608
        %v4610 = vpop.f32.mrb[0].mxu0
        %4611 = vmatprep.mubr.bf16.mxu0 %v3716
        %4612 = vmatmul.mubr.bf16.gmra.mrb[0].mxu0 %v3715
        %v4613 = vpop.f32.mrb[0].mxu0
        %v4614 = vadd.f32 0.0, %v4613
        %v4615 = vpop.f32.mrb[0].mxu0
        %v4616 = vpop.f32.mrb[0].mxu0
        %v4617 = vadd.f32 0.0, %v4616
        %v4618 = vpop.f32.mrb[0].mxu0
        %4619 = vmatprep.mubr.bf16.mxu0 %v3732
        %4620 = vmatmul.mubr.bf16.gmra.mrb[0].mxu0 %v3731
        %v4621 = vpop.f32.mrb[0].mxu0
        %v4622 = vadd.f32 0.0, %v4621
        %v4623 = vpop.f32.mrb[0].mxu0
        %v4624 = vpop.f32.mrb[0].mxu0
        %v4625 = vadd.f32 0.0, %v4624
        %v4626 = vpop.f32.mrb[0].mxu0
        %4627 = vmatprep.mubr.bf16.mxu0 %v3748
        %4628 = vmatmul.mubr.bf16.gmra.mrb[0].mxu0 %v3747
        %v4629 = vpop.f32.mrb[0].mxu0
        %v4630 = vadd.f32 0.0, %v4629
        %v4631 = vpop.f32.mrb[0].mxu0
        %v4632 = vpop.f32.mrb[0].mxu0
        %v4633 = vadd.f32 0.0, %v4632
        %v4634 = vpop.f32.mrb[0].mxu0
        %4635 = vmatprep.mubr.bf16.mxu0 %v3764
        %4636 = vmatmul.mubr.bf16.gmra.mrb[0].mxu0 %v3763
        %v4637 = vpop.f32.mrb[0].mxu0
        %v4638 = vadd.f32 0.0, %v4637
        %v4639 = vpop.f32.mrb[0].mxu0
        %v4640 = vpop.f32.mrb[0].mxu0
        %v4641 = vadd.f32 0.0, %v4640
        %v4642 = vpop.f32.mrb[0].mxu0
        %4643 = vmatprep.mubr.bf16.mxu0 %v3780
        %4644 = vmatmul.mubr.bf16.gmra.mrb[0].mxu0 %v3779
        %v4645 = vpop.f32.mrb[0].mxu0
        %v4646 = vadd.f32 0.0, %v4645
        %v4647 = vpop.f32.mrb[0].mxu0
        %v4648 = vpop.f32.mrb[0].mxu0
        %v4649 = vadd.f32 0.0, %v4648
        %v4650 = vpop.f32.mrb[0].mxu0
        %4651 = vmatprep.mubr.bf16.mxu0 %v3796
        %4652 = vmatmul.mubr.bf16.gmra.mrb[0].mxu0 %v3795
        %v4653 = vpop.f32.mrb[0].mxu0
        %v4654 = vadd.f32 0.0, %v4653
        %v4655 = vpop.f32.mrb[0].mxu0
        %v4656 = vpop.f32.mrb[0].mxu0
        %v4657 = vadd.f32 0.0, %v4656
        %v4658 = vpop.f32.mrb[0].mxu0
        %4659 = vmatprep.mubr.bf16.mxu0 %v3812
        %4660 = vmatmul.mubr.bf16.gmra.mrb[0].mxu0 %v3811
        %v4661 = vpop.f32.mrb[0].mxu0
        %v4662 = vadd.f32 0.0, %v4661
        %v4663 = vpop.f32.mrb[0].mxu0
        %v4664 = vpop.f32.mrb[0].mxu0
        %v4665 = vadd.f32 0.0, %v4664
        %v4666 = vpop.f32.mrb[0].mxu0
        %4667 = vmatprep.mubr.bf16.mxu0 %v3828
        %4668 = vmatmul.mubr.bf16.gmra.mrb[0].mxu0 %v3827
        %v4669 = vpop.f32.mrb[0].mxu0
        %v4670 = vadd.f32 0.0, %v4669
        %v4671 = vpop.f32.mrb[0].mxu0
        %v4672 = vpop.f32.mrb[0].mxu0
        %v4673 = vadd.f32 0.0, %v4672
        %v4674 = vpop.f32.mrb[0].mxu0
        %4675 = vmatprep.mubr.bf16.mxu0 %v3844
        %4676 = vmatmul.mubr.bf16.gmra.mrb[0].mxu0 %v3843
        %v4677 = vpop.f32.mrb[0].mxu0
        %v4678 = vadd.f32 0.0, %v4677
        %v4679 = vpop.f32.mrb[0].mxu0
        %v4680 = vpop.f32.mrb[0].mxu0
        %v4681 = vadd.f32 0.0, %v4680
        %v4682 = vpop.f32.mrb[0].mxu0
        %4683 = vmatprep.mubr.bf16.mxu0 %v3860
        %4684 = vmatmul.mubr.bf16.gmra.mrb[0].mxu0 %v3859
        %v4685 = vpop.f32.mrb[0].mxu0
        %v4686 = vadd.f32 0.0, %v4685
        %v4687 = vpop.f32.mrb[0].mxu0
        %v4688 = vpop.f32.mrb[0].mxu0
        %v4689 = vadd.f32 0.0, %v4688
        %v4690 = vpop.f32.mrb[0].mxu0
        %4691 = vmatprep.mubr.bf16.mxu0 %v3876
        %4692 = vmatmul.mubr.bf16.gmra.mrb[0].mxu0 %v3875
        %v4693 = vpop.f32.mrb[0].mxu0
        %v4694 = vadd.f32 0.0, %v4693
        %v4695 = vpop.f32.mrb[0].mxu0
        %v4696 = vpop.f32.mrb[0].mxu0
        %v4697 = vadd.f32 0.0, %v4696
        %v4698 = vpop.f32.mrb[0].mxu0
        %4699 = vmatprep.mubr.bf16.mxu0 %v3892
        %4700 = vmatmul.mubr.bf16.gmra.mrb[0].mxu0 %v3891
        %v4701 = vpop.f32.mrb[0].mxu0
        %v4702 = vadd.f32 0.0, %v4701
        %v4703 = vpop.f32.mrb[0].mxu0
        %v4704 = vpop.f32.mrb[0].mxu0
        %v4705 = vadd.f32 0.0, %v4704
        %v4706 = vpop.f32.mrb[0].mxu0
        %4707 = vdwg.mxu0
        %4708 = vmatprep.subr.bf16.mxu0 0
        %4709 = vmatpush1.bf16.msra.mxu0 %v1235
        %4710 = vmatprep.subr.bf16.mxu0 0
        %4711 = vmatpush1.bf16.msra.mxu0 %v1236
        %4712 = vmatprep.subr.bf16.mxu0 0
        %4713 = vmatpush1.bf16.msra.mxu0 %v1237
        %4714 = vmatprep.subr.bf16.mxu0 0
        %4715 = vmatpush1.bf16.msra.mxu0 %v1238
        %4716 = vmatprep.subr.bf16.mxu0 0
        %4717 = vmatpush1.bf16.msra.mxu0 %v1239
        %4718 = vmatprep.subr.bf16.mxu0 0
        %4719 = vmatpush1.bf16.msra.mxu0 %v1240
        %4720 = vmatprep.subr.bf16.mxu0 0
        %4721 = vmatpush1.bf16.msra.mxu0 %v1241
        %4722 = vmatprep.subr.bf16.mxu0 0
        %4723 = vmatpush1.bf16.msra.mxu0 %v1242
        %4724 = vmatprep.subr.bf16.mxu0 0
        %4725 = vmatpush1.bf16.msra.mxu0 %v1243
        %4726 = vmatprep.subr.bf16.mxu0 0
        %4727 = vmatpush1.bf16.msra.mxu0 %v1244
        %4728 = vmatprep.subr.bf16.mxu0 0
        %4729 = vmatpush1.bf16.msra.mxu0 %v1245
        %4730 = vmatprep.subr.bf16.mxu0 0
        %4731 = vmatpush1.bf16.msra.mxu0 %v1246
        %4732 = vmatprep.subr.bf16.mxu0 0
        %4733 = vmatpush1.bf16.msra.mxu0 %v1247
        %4734 = vmatprep.subr.bf16.mxu0 0
        %4735 = vmatpush1.bf16.msra.mxu0 %v1248
        %4736 = vmatprep.subr.bf16.mxu0 0
        %4737 = vmatpush1.bf16.msra.mxu0 %v1249
        %4738 = vmatprep.subr.bf16.mxu0 0
        %4739 = vmatpush1.bf16.msra.mxu0 %v1250
        %4740 = vmatprep.mubr.bf16.mxu0 %v3398
        %4741 = vmatmul.mubr.bf16.gmra.mrb[0].mxu0 %v3397
        %v4742 = vpop.f32.mrb[0].mxu0
        %v4743 = vadd.f32 %v4454, %v4742
        %v4744 = vpop.f32.mrb[0].mxu0
        %v4745 = vpop.f32.mrb[0].mxu0
        %v4746 = vadd.f32 %v4457, %v4745
        %v4747 = vpop.f32.mrb[0].mxu0
        %4748 = vmatprep.mubr.bf16.mxu0 %v3414
        %4749 = vmatmul.mubr.bf16.gmra.mrb[0].mxu0 %v3413
        %v4750 = vpop.f32.mrb[0].mxu0
        %v4751 = vadd.f32 %v4462, %v4750
        %v4752 = vpop.f32.mrb[0].mxu0
        %v4753 = vpop.f32.mrb[0].mxu0
        %v4754 = vadd.f32 %v4465, %v4753
        %v4755 = vpop.f32.mrb[0].mxu0
        %4756 = vmatprep.mubr.bf16.mxu0 %v3430
        %4757 = vmatmul.mubr.bf16.gmra.mrb[0].mxu0 %v3429
        %v4758 = vpop.f32.mrb[0].mxu0
        %v4759 = vadd.f32 %v4470, %v4758
        %v4760 = vpop.f32.mrb[0].mxu0
        %v4761 = vpop.f32.mrb[0].mxu0
        %v4762 = vadd.f32 %v4473, %v4761
        %v4763 = vpop.f32.mrb[0].mxu0
        %4764 = vmatprep.mubr.bf16.mxu0 %v3446
        %4765 = vmatmul.mubr.bf16.gmra.mrb[0].mxu0 %v3445
        %v4766 = vpop.f32.mrb[0].mxu0
        %v4767 = vadd.f32 %v4478, %v4766
        %v4768 = vpop.f32.mrb[0].mxu0
        %v4769 = vpop.f32.mrb[0].mxu0
        %v4770 = vadd.f32 %v4481, %v4769
        %v4771 = vpop.f32.mrb[0].mxu0
        %4772 = vmatprep.mubr.bf16.mxu0 %v3462
        %4773 = vmatmul.mubr.bf16.gmra.mrb[0].mxu0 %v3461
        %v4774 = vpop.f32.mrb[0].mxu0
        %v4775 = vadd.f32 %v4486, %v4774
        %v4776 = vpop.f32.mrb[0].mxu0
        %v4777 = vpop.f32.mrb[0].mxu0
        %v4778 = vadd.f32 %v4489, %v4777
        %v4779 = vpop.f32.mrb[0].mxu0
        %4780 = vmatprep.mubr.bf16.mxu0 %v3478
        %4781 = vmatmul.mubr.bf16.gmra.mrb[0].mxu0 %v3477
        %v4782 = vpop.f32.mrb[0].mxu0
        %v4783 = vadd.f32 %v4494, %v4782
        %v4784 = vpop.f32.mrb[0].mxu0
        %v4785 = vpop.f32.mrb[0].mxu0
        %v4786 = vadd.f32 %v4497, %v4785
        %v4787 = vpop.f32.mrb[0].mxu0
        %4788 = vmatprep.mubr.bf16.mxu0 %v3494
        %4789 = vmatmul.mubr.bf16.gmra.mrb[0].mxu0 %v3493
        %v4790 = vpop.f32.mrb[0].mxu0
        %v4791 = vadd.f32 %v4502, %v4790
        %v4792 = vpop.f32.mrb[0].mxu0
        %v4793 = vpop.f32.mrb[0].mxu0
        %v4794 = vadd.f32 %v4505, %v4793
        %v4795 = vpop.f32.mrb[0].mxu0
        %4796 = vmatprep.mubr.bf16.mxu0 %v3510
        %4797 = vmatmul.mubr.bf16.gmra.mrb[0].mxu0 %v3509
        %v4798 = vpop.f32.mrb[0].mxu0
        %v4799 = vadd.f32 %v4510, %v4798
        %v4800 = vpop.f32.mrb[0].mxu0
        %v4801 = vpop.f32.mrb[0].mxu0
        %v4802 = vadd.f32 %v4513, %v4801
        %v4803 = vpop.f32.mrb[0].mxu0
        %4804 = vmatprep.mubr.bf16.mxu0 %v3526
        %4805 = vmatmul.mubr.bf16.gmra.mrb[0].mxu0 %v3525
        %v4806 = vpop.f32.mrb[0].mxu0
        %v4807 = vadd.f32 %v4518, %v4806
        %v4808 = vpop.f32.mrb[0].mxu0
        %v4809 = vpop.f32.mrb[0].mxu0
        %v4810 = vadd.f32 %v4521, %v4809
        %v4811 = vpop.f32.mrb[0].mxu0
        %4812 = vmatprep.mubr.bf16.mxu0 %v3542
        %4813 = vmatmul.mubr.bf16.gmra.mrb[0].mxu0 %v3541
        %v4814 = vpop.f32.mrb[0].mxu0
        %v4815 = vadd.f32 %v4526, %v4814
        %v4816 = vpop.f32.mrb[0].mxu0
        %v4817 = vpop.f32.mrb[0].mxu0
        %v4818 = vadd.f32 %v4529, %v4817
        %v4819 = vpop.f32.mrb[0].mxu0
        %4820 = vmatprep.mubr.bf16.mxu0 %v3558
        %4821 = vmatmul.mubr.bf16.gmra.mrb[0].mxu0 %v3557
        %v4822 = vpop.f32.mrb[0].mxu0
        %v4823 = vadd.f32 %v4534, %v4822
        %v4824 = vpop.f32.mrb[0].mxu0
        %v4825 = vpop.f32.mrb[0].mxu0
        %v4826 = vadd.f32 %v4537, %v4825
        %v4827 = vpop.f32.mrb[0].mxu0
        %4828 = vmatprep.mubr.bf16.mxu0 %v3574
        %4829 = vmatmul.mubr.bf16.gmra.mrb[0].mxu0 %v3573
        %v4830 = vpop.f32.mrb[0].mxu0
        %v4831 = vadd.f32 %v4542, %v4830
        %v4832 = vpop.f32.mrb[0].mxu0
        %v4833 = vpop.f32.mrb[0].mxu0
        %v4834 = vadd.f32 %v4545, %v4833
        %v4835 = vpop.f32.mrb[0].mxu0
        %4836 = vmatprep.mubr.bf16.mxu0 %v3590
        %4837 = vmatmul.mubr.bf16.gmra.mrb[0].mxu0 %v3589
        %v4838 = vpop.f32.mrb[0].mxu0
        %v4839 = vadd.f32 %v4550, %v4838
        %v4840 = vpop.f32.mrb[0].mxu0
        %v4841 = vpop.f32.mrb[0].mxu0
        %v4842 = vadd.f32 %v4553, %v4841
        %v4843 = vpop.f32.mrb[0].mxu0
        %4844 = vmatprep.mubr.bf16.mxu0 %v3606
        %4845 = vmatmul.mubr.bf16.gmra.mrb[0].mxu0 %v3605
        %v4846 = vpop.f32.mrb[0].mxu0
        %v4847 = vadd.f32 %v4558, %v4846
        %v4848 = vpop.f32.mrb[0].mxu0
        %v4849 = vpop.f32.mrb[0].mxu0
        %v4850 = vadd.f32 %v4561, %v4849
        %v4851 = vpop.f32.mrb[0].mxu0
        %4852 = vmatprep.mubr.bf16.mxu0 %v3622
        %4853 = vmatmul.mubr.bf16.gmra.mrb[0].mxu0 %v3621
        %v4854 = vpop.f32.mrb[0].mxu0
        %v4855 = vadd.f32 %v4566, %v4854
        %v4856 = vpop.f32.mrb[0].mxu0
        %v4857 = vpop.f32.mrb[0].mxu0
        %v4858 = vadd.f32 %v4569, %v4857
        %v4859 = vpop.f32.mrb[0].mxu0
        %4860 = vmatprep.mubr.bf16.mxu0 %v3638
        %4861 = vmatmul.mubr.bf16.gmra.mrb[0].mxu0 %v3637
        %v4862 = vpop.f32.mrb[0].mxu0
        %v4863 = vadd.f32 %v4574, %v4862
        %v4864 = vpop.f32.mrb[0].mxu0
        %v4865 = vpop.f32.mrb[0].mxu0
        %v4866 = vadd.f32 %v4577, %v4865
        %v4867 = vpop.f32.mrb[0].mxu0
        %4868 = vmatprep.mubr.bf16.mxu0 %v3654
        %4869 = vmatmul.mubr.bf16.gmra.mrb[0].mxu0 %v3653
        %v4870 = vpop.f32.mrb[0].mxu0
        %v4871 = vadd.f32 %v4582, %v4870
        %v4872 = vpop.f32.mrb[0].mxu0
        %v4873 = vpop.f32.mrb[0].mxu0
        %v4874 = vadd.f32 %v4585, %v4873
        %v4875 = vpop.f32.mrb[0].mxu0
        %4876 = vmatprep.mubr.bf16.mxu0 %v3670
        %4877 = vmatmul.mubr.bf16.gmra.mrb[0].mxu0 %v3669
        %v4878 = vpop.f32.mrb[0].mxu0
        %v4879 = vadd.f32 %v4590, %v4878
        %v4880 = vpop.f32.mrb[0].mxu0
        %v4881 = vpop.f32.mrb[0].mxu0
        %v4882 = vadd.f32 %v4593, %v4881
        %v4883 = vpop.f32.mrb[0].mxu0
        %4884 = vmatprep.mubr.bf16.mxu0 %v3686
        %4885 = vmatmul.mubr.bf16.gmra.mrb[0].mxu0 %v3685
        %v4886 = vpop.f32.mrb[0].mxu0
        %v4887 = vadd.f32 %v4598, %v4886
        %v4888 = vpop.f32.mrb[0].mxu0
        %v4889 = vpop.f32.mrb[0].mxu0
        %v4890 = vadd.f32 %v4601, %v4889
        %v4891 = vpop.f32.mrb[0].mxu0
        %4892 = vmatprep.mubr.bf16.mxu0 %v3702
        %4893 = vmatmul.mubr.bf16.gmra.mrb[0].mxu0 %v3701
        %v4894 = vpop.f32.mrb[0].mxu0
        %v4895 = vadd.f32 %v4606, %v4894
        %v4896 = vpop.f32.mrb[0].mxu0
        %v4897 = vpop.f32.mrb[0].mxu0
        %v4898 = vadd.f32 %v4609, %v4897
        %v4899 = vpop.f32.mrb[0].mxu0
        %4900 = vmatprep.mubr.bf16.mxu0 %v3718
        %4901 = vmatmul.mubr.bf16.gmra.mrb[0].mxu0 %v3717
        %v4902 = vpop.f32.mrb[0].mxu0
        %v4903 = vadd.f32 %v4614, %v4902
        %v4904 = vpop.f32.mrb[0].mxu0
        %v4905 = vpop.f32.mrb[0].mxu0
        %v4906 = vadd.f32 %v4617, %v4905
        %v4907 = vpop.f32.mrb[0].mxu0
        %4908 = vmatprep.mubr.bf16.mxu0 %v3734
        %4909 = vmatmul.mubr.bf16.gmra.mrb[0].mxu0 %v3733
        %v4910 = vpop.f32.mrb[0].mxu0
        %v4911 = vadd.f32 %v4622, %v4910
        %v4912 = vpop.f32.mrb[0].mxu0
        %v4913 = vpop.f32.mrb[0].mxu0
        %v4914 = vadd.f32 %v4625, %v4913
        %v4915 = vpop.f32.mrb[0].mxu0
        %4916 = vmatprep.mubr.bf16.mxu0 %v3750
        %4917 = vmatmul.mubr.bf16.gmra.mrb[0].mxu0 %v3749
        %v4918 = vpop.f32.mrb[0].mxu0
        %v4919 = vadd.f32 %v4630, %v4918
        %v4920 = vpop.f32.mrb[0].mxu0
        %v4921 = vpop.f32.mrb[0].mxu0
        %v4922 = vadd.f32 %v4633, %v4921
        %v4923 = vpop.f32.mrb[0].mxu0
        %4924 = vmatprep.mubr.bf16.mxu0 %v3766
        %4925 = vmatmul.mubr.bf16.gmra.mrb[0].mxu0 %v3765
        %v4926 = vpop.f32.mrb[0].mxu0
        %v4927 = vadd.f32 %v4638, %v4926
        %v4928 = vpop.f32.mrb[0].mxu0
        %v4929 = vpop.f32.mrb[0].mxu0
        %v4930 = vadd.f32 %v4641, %v4929
        %v4931 = vpop.f32.mrb[0].mxu0
        %4932 = vmatprep.mubr.bf16.mxu0 %v3782
        %4933 = vmatmul.mubr.bf16.gmra.mrb[0].mxu0 %v3781
        %v4934 = vpop.f32.mrb[0].mxu0
        %v4935 = vadd.f32 %v4646, %v4934
        %v4936 = vpop.f32.mrb[0].mxu0
        %v4937 = vpop.f32.mrb[0].mxu0
        %v4938 = vadd.f32 %v4649, %v4937
        %v4939 = vpop.f32.mrb[0].mxu0
        %4940 = vmatprep.mubr.bf16.mxu0 %v3798
        %4941 = vmatmul.mubr.bf16.gmra.mrb[0].mxu0 %v3797
        %v4942 = vpop.f32.mrb[0].mxu0
        %v4943 = vadd.f32 %v4654, %v4942
        %v4944 = vpop.f32.mrb[0].mxu0
        %v4945 = vpop.f32.mrb[0].mxu0
        %v4946 = vadd.f32 %v4657, %v4945
        %v4947 = vpop.f32.mrb[0].mxu0
        %4948 = vmatprep.mubr.bf16.mxu0 %v3814
        %4949 = vmatmul.mubr.bf16.gmra.mrb[0].mxu0 %v3813
        %v4950 = vpop.f32.mrb[0].mxu0
        %v4951 = vadd.f32 %v4662, %v4950
        %v4952 = vpop.f32.mrb[0].mxu0
        %v4953 = vpop.f32.mrb[0].mxu0
        %v4954 = vadd.f32 %v4665, %v4953
        %v4955 = vpop.f32.mrb[0].mxu0
        %4956 = vmatprep.mubr.bf16.mxu0 %v3830
        %4957 = vmatmul.mubr.bf16.gmra.mrb[0].mxu0 %v3829
        %v4958 = vpop.f32.mrb[0].mxu0
        %v4959 = vadd.f32 %v4670, %v4958
        %v4960 = vpop.f32.mrb[0].mxu0
        %v4961 = vpop.f32.mrb[0].mxu0
        %v4962 = vadd.f32 %v4673, %v4961
        %v4963 = vpop.f32.mrb[0].mxu0
        %4964 = vmatprep.mubr.bf16.mxu0 %v3846
        %4965 = vmatmul.mubr.bf16.gmra.mrb[0].mxu0 %v3845
        %v4966 = vpop.f32.mrb[0].mxu0
        %v4967 = vadd.f32 %v4678, %v4966
        %v4968 = vpop.f32.mrb[0].mxu0
        %v4969 = vpop.f32.mrb[0].mxu0
        %v4970 = vadd.f32 %v4681, %v4969
        %v4971 = vpop.f32.mrb[0].mxu0
        %4972 = vmatprep.mubr.bf16.mxu0 %v3862
        %4973 = vmatmul.mubr.bf16.gmra.mrb[0].mxu0 %v3861
        %v4974 = vpop.f32.mrb[0].mxu0
        %v4975 = vadd.f32 %v4686, %v4974
        %v4976 = vpop.f32.mrb[0].mxu0
        %v4977 = vpop.f32.mrb[0].mxu0
        %v4978 = vadd.f32 %v4689, %v4977
        %v4979 = vpop.f32.mrb[0].mxu0
        %4980 = vmatprep.mubr.bf16.mxu0 %v3878
        %4981 = vmatmul.mubr.bf16.gmra.mrb[0].mxu0 %v3877
        %v4982 = vpop.f32.mrb[0].mxu0
        %v4983 = vadd.f32 %v4694, %v4982
        %v4984 = vpop.f32.mrb[0].mxu0
        %v4985 = vpop.f32.mrb[0].mxu0
        %v4986 = vadd.f32 %v4697, %v4985
        %v4987 = vpop.f32.mrb[0].mxu0
        %4988 = vmatprep.mubr.bf16.mxu0 %v3894
        %4989 = vmatmul.mubr.bf16.gmra.mrb[0].mxu0 %v3893
        %v4990 = vpop.f32.mrb[0].mxu0
        %v4991 = vadd.f32 %v4702, %v4990
        %v4992 = vpop.f32.mrb[0].mxu0
        %v4993 = vpop.f32.mrb[0].mxu0
        %v4994 = vadd.f32 %v4705, %v4993
        %v4995 = vpop.f32.mrb[0].mxu0
        %4996 = vdwg.mxu0
        %4997 = vmatprep.subr.bf16.mxu0 0
        %4998 = vmatpush1.bf16.msra.mxu0 %v1251
        %4999 = vmatprep.subr.bf16.mxu0 0
        %5000 = vmatpush1.bf16.msra.mxu0 %v1252
        %5001 = vmatprep.subr.bf16.mxu0 0
        %5002 = vmatpush1.bf16.msra.mxu0 %v1253
        %5003 = vmatprep.subr.bf16.mxu0 0
        %5004 = vmatpush1.bf16.msra.mxu0 %v1254
        %5005 = vmatprep.subr.bf16.mxu0 0
        %5006 = vmatpush1.bf16.msra.mxu0 %v1255
        %5007 = vmatprep.subr.bf16.mxu0 0
        %5008 = vmatpush1.bf16.msra.mxu0 %v1256
        %5009 = vmatprep.subr.bf16.mxu0 0
        %5010 = vmatpush1.bf16.msra.mxu0 %v1257
        %5011 = vmatprep.subr.bf16.mxu0 0
        %5012 = vmatpush1.bf16.msra.mxu0 %v1258
        %5013 = vmatprep.subr.bf16.mxu0 0
        %5014 = vmatpush1.bf16.msra.mxu0 %v1259
        %5015 = vmatprep.subr.bf16.mxu0 0
        %5016 = vmatpush1.bf16.msra.mxu0 %v1260
        %5017 = vmatprep.subr.bf16.mxu0 0
        %5018 = vmatpush1.bf16.msra.mxu0 %v1261
        %5019 = vmatprep.subr.bf16.mxu0 0
        %5020 = vmatpush1.bf16.msra.mxu0 %v1262
        %5021 = vmatprep.subr.bf16.mxu0 0
        %5022 = vmatpush1.bf16.msra.mxu0 %v1263
        %5023 = vmatprep.subr.bf16.mxu0 0
        %5024 = vmatpush1.bf16.msra.mxu0 %v1264
        %5025 = vmatprep.subr.bf16.mxu0 0
        %5026 = vmatpush1.bf16.msra.mxu0 %v1265
        %5027 = vmatprep.subr.bf16.mxu0 0
        %5028 = vmatpush1.bf16.msra.mxu0 %v1266
        %5029 = vmatprep.mubr.bf16.mxu0 %v3400
        %5030 = vmatmul.mubr.bf16.gmra.mrb[0].mxu0 %v3399
        %v5031 = vpop.f32.mrb[0].mxu0
        %v5032 = vadd.f32 %v4743, %v5031
        %v5033 = vpop.f32.mrb[0].mxu0
        %v5034 = vpop.f32.mrb[0].mxu0
        %v5035 = vadd.f32 %v4746, %v5034
        %v5036 = vpop.f32.mrb[0].mxu0
        %5037 = vmatprep.mubr.bf16.mxu0 %v3416
        %5038 = vmatmul.mubr.bf16.gmra.mrb[0].mxu0 %v3415
        %v5039 = vpop.f32.mrb[0].mxu0
        %v5040 = vadd.f32 %v4751, %v5039
        %v5041 = vpop.f32.mrb[0].mxu0
        %v5042 = vpop.f32.mrb[0].mxu0
        %v5043 = vadd.f32 %v4754, %v5042
        %v5044 = vpop.f32.mrb[0].mxu0
        %5045 = vmatprep.mubr.bf16.mxu0 %v3432
        %5046 = vmatmul.mubr.bf16.gmra.mrb[0].mxu0 %v3431
        %v5047 = vpop.f32.mrb[0].mxu0
        %v5048 = vadd.f32 %v4759, %v5047
        %v5049 = vpop.f32.mrb[0].mxu0
        %v5050 = vpop.f32.mrb[0].mxu0
        %v5051 = vadd.f32 %v4762, %v5050
        %v5052 = vpop.f32.mrb[0].mxu0
        %5053 = vmatprep.mubr.bf16.mxu0 %v3448
        %5054 = vmatmul.mubr.bf16.gmra.mrb[0].mxu0 %v3447
        %v5055 = vpop.f32.mrb[0].mxu0
        %v5056 = vadd.f32 %v4767, %v5055
        %v5057 = vpop.f32.mrb[0].mxu0
        %v5058 = vpop.f32.mrb[0].mxu0
        %v5059 = vadd.f32 %v4770, %v5058
        %v5060 = vpop.f32.mrb[0].mxu0
        %5061 = vmatprep.mubr.bf16.mxu0 %v3464
        %5062 = vmatmul.mubr.bf16.gmra.mrb[0].mxu0 %v3463
        %v5063 = vpop.f32.mrb[0].mxu0
        %v5064 = vadd.f32 %v4775, %v5063
        %v5065 = vpop.f32.mrb[0].mxu0
        %v5066 = vpop.f32.mrb[0].mxu0
        %v5067 = vadd.f32 %v4778, %v5066
        %v5068 = vpop.f32.mrb[0].mxu0
        %5069 = vmatprep.mubr.bf16.mxu0 %v3480
        %5070 = vmatmul.mubr.bf16.gmra.mrb[0].mxu0 %v3479
        %v5071 = vpop.f32.mrb[0].mxu0
        %v5072 = vadd.f32 %v4783, %v5071
        %v5073 = vpop.f32.mrb[0].mxu0
        %v5074 = vpop.f32.mrb[0].mxu0
        %v5075 = vadd.f32 %v4786, %v5074
        %v5076 = vpop.f32.mrb[0].mxu0
        %5077 = vmatprep.mubr.bf16.mxu0 %v3496
        %5078 = vmatmul.mubr.bf16.gmra.mrb[0].mxu0 %v3495
        %v5079 = vpop.f32.mrb[0].mxu0
        %v5080 = vadd.f32 %v4791, %v5079
        %v5081 = vpop.f32.mrb[0].mxu0
        %v5082 = vpop.f32.mrb[0].mxu0
        %v5083 = vadd.f32 %v4794, %v5082
        %v5084 = vpop.f32.mrb[0].mxu0
        %5085 = vmatprep.mubr.bf16.mxu0 %v3512
        %5086 = vmatmul.mubr.bf16.gmra.mrb[0].mxu0 %v3511
        %v5087 = vpop.f32.mrb[0].mxu0
        %v5088 = vadd.f32 %v4799, %v5087
        %v5089 = vpop.f32.mrb[0].mxu0
        %v5090 = vpop.f32.mrb[0].mxu0
        %v5091 = vadd.f32 %v4802, %v5090
        %v5092 = vpop.f32.mrb[0].mxu0
        %5093 = vmatprep.mubr.bf16.mxu0 %v3528
        %5094 = vmatmul.mubr.bf16.gmra.mrb[0].mxu0 %v3527
        %v5095 = vpop.f32.mrb[0].mxu0
        %v5096 = vadd.f32 %v4807, %v5095
        %v5097 = vpop.f32.mrb[0].mxu0
        %v5098 = vpop.f32.mrb[0].mxu0
        %v5099 = vadd.f32 %v4810, %v5098
        %v5100 = vpop.f32.mrb[0].mxu0
        %5101 = vmatprep.mubr.bf16.mxu0 %v3544
        %5102 = vmatmul.mubr.bf16.gmra.mrb[0].mxu0 %v3543
        %v5103 = vpop.f32.mrb[0].mxu0
        %v5104 = vadd.f32 %v4815, %v5103
        %v5105 = vpop.f32.mrb[0].mxu0
        %v5106 = vpop.f32.mrb[0].mxu0
        %v5107 = vadd.f32 %v4818, %v5106
        %v5108 = vpop.f32.mrb[0].mxu0
        %5109 = vmatprep.mubr.bf16.mxu0 %v3560
        %5110 = vmatmul.mubr.bf16.gmra.mrb[0].mxu0 %v3559
        %v5111 = vpop.f32.mrb[0].mxu0
        %v5112 = vadd.f32 %v4823, %v5111
        %v5113 = vpop.f32.mrb[0].mxu0
        %v5114 = vpop.f32.mrb[0].mxu0
        %v5115 = vadd.f32 %v4826, %v5114
        %v5116 = vpop.f32.mrb[0].mxu0
        %5117 = vmatprep.mubr.bf16.mxu0 %v3576
        %5118 = vmatmul.mubr.bf16.gmra.mrb[0].mxu0 %v3575
        %v5119 = vpop.f32.mrb[0].mxu0
        %v5120 = vadd.f32 %v4831, %v5119
        %v5121 = vpop.f32.mrb[0].mxu0
        %v5122 = vpop.f32.mrb[0].mxu0
        %v5123 = vadd.f32 %v4834, %v5122
        %v5124 = vpop.f32.mrb[0].mxu0
        %5125 = vmatprep.mubr.bf16.mxu0 %v3592
        %5126 = vmatmul.mubr.bf16.gmra.mrb[0].mxu0 %v3591
        %v5127 = vpop.f32.mrb[0].mxu0
        %v5128 = vadd.f32 %v4839, %v5127
        %v5129 = vpop.f32.mrb[0].mxu0
        %v5130 = vpop.f32.mrb[0].mxu0
        %v5131 = vadd.f32 %v4842, %v5130
        %v5132 = vpop.f32.mrb[0].mxu0
        %5133 = vmatprep.mubr.bf16.mxu0 %v3608
        %5134 = vmatmul.mubr.bf16.gmra.mrb[0].mxu0 %v3607
        %v5135 = vpop.f32.mrb[0].mxu0
        %v5136 = vadd.f32 %v4847, %v5135
        %v5137 = vpop.f32.mrb[0].mxu0
        %v5138 = vpop.f32.mrb[0].mxu0
        %v5139 = vadd.f32 %v4850, %v5138
        %v5140 = vpop.f32.mrb[0].mxu0
        %5141 = vmatprep.mubr.bf16.mxu0 %v3624
        %5142 = vmatmul.mubr.bf16.gmra.mrb[0].mxu0 %v3623
        %v5143 = vpop.f32.mrb[0].mxu0
        %v5144 = vadd.f32 %v4855, %v5143
        %v5145 = vpop.f32.mrb[0].mxu0
        %v5146 = vpop.f32.mrb[0].mxu0
        %v5147 = vadd.f32 %v4858, %v5146
        %v5148 = vpop.f32.mrb[0].mxu0
        %5149 = vmatprep.mubr.bf16.mxu0 %v3640
        %5150 = vmatmul.mubr.bf16.gmra.mrb[0].mxu0 %v3639
        %v5151 = vpop.f32.mrb[0].mxu0
        %v5152 = vadd.f32 %v4863, %v5151
        %v5153 = vpop.f32.mrb[0].mxu0
        %v5154 = vpop.f32.mrb[0].mxu0
        %v5155 = vadd.f32 %v4866, %v5154
        %v5156 = vpop.f32.mrb[0].mxu0
        %5157 = vmatprep.mubr.bf16.mxu0 %v3656
        %5158 = vmatmul.mubr.bf16.gmra.mrb[0].mxu0 %v3655
        %v5159 = vpop.f32.mrb[0].mxu0
        %v5160 = vadd.f32 %v4871, %v5159
        %v5161 = vpop.f32.mrb[0].mxu0
        %v5162 = vpop.f32.mrb[0].mxu0
        %v5163 = vadd.f32 %v4874, %v5162
        %v5164 = vpop.f32.mrb[0].mxu0
        %5165 = vmatprep.mubr.bf16.mxu0 %v3672
        %5166 = vmatmul.mubr.bf16.gmra.mrb[0].mxu0 %v3671
        %v5167 = vpop.f32.mrb[0].mxu0
        %v5168 = vadd.f32 %v4879, %v5167
        %v5169 = vpop.f32.mrb[0].mxu0
        %v5170 = vpop.f32.mrb[0].mxu0
        %v5171 = vadd.f32 %v4882, %v5170
        %v5172 = vpop.f32.mrb[0].mxu0
        %5173 = vmatprep.mubr.bf16.mxu0 %v3688
        %5174 = vmatmul.mubr.bf16.gmra.mrb[0].mxu0 %v3687
        %v5175 = vpop.f32.mrb[0].mxu0
        %v5176 = vadd.f32 %v4887, %v5175
        %v5177 = vpop.f32.mrb[0].mxu0
        %v5178 = vpop.f32.mrb[0].mxu0
        %v5179 = vadd.f32 %v4890, %v5178
        %v5180 = vpop.f32.mrb[0].mxu0
        %5181 = vmatprep.mubr.bf16.mxu0 %v3704
        %5182 = vmatmul.mubr.bf16.gmra.mrb[0].mxu0 %v3703
        %v5183 = vpop.f32.mrb[0].mxu0
        %v5184 = vadd.f32 %v4895, %v5183
        %v5185 = vpop.f32.mrb[0].mxu0
        %v5186 = vpop.f32.mrb[0].mxu0
        %v5187 = vadd.f32 %v4898, %v5186
        %v5188 = vpop.f32.mrb[0].mxu0
        %5189 = vmatprep.mubr.bf16.mxu0 %v3720
        %5190 = vmatmul.mubr.bf16.gmra.mrb[0].mxu0 %v3719
        %v5191 = vpop.f32.mrb[0].mxu0
        %v5192 = vadd.f32 %v4903, %v5191
        %v5193 = vpop.f32.mrb[0].mxu0
        %v5194 = vpop.f32.mrb[0].mxu0
        %v5195 = vadd.f32 %v4906, %v5194
        %v5196 = vpop.f32.mrb[0].mxu0
        %5197 = vmatprep.mubr.bf16.mxu0 %v3736
        %5198 = vmatmul.mubr.bf16.gmra.mrb[0].mxu0 %v3735
        %v5199 = vpop.f32.mrb[0].mxu0
        %v5200 = vadd.f32 %v4911, %v5199
        %v5201 = vpop.f32.mrb[0].mxu0
        %v5202 = vpop.f32.mrb[0].mxu0
        %v5203 = vadd.f32 %v4914, %v5202
        %v5204 = vpop.f32.mrb[0].mxu0
        %5205 = vmatprep.mubr.bf16.mxu0 %v3752
        %5206 = vmatmul.mubr.bf16.gmra.mrb[0].mxu0 %v3751
        %v5207 = vpop.f32.mrb[0].mxu0
        %v5208 = vadd.f32 %v4919, %v5207
        %v5209 = vpop.f32.mrb[0].mxu0
        %v5210 = vpop.f32.mrb[0].mxu0
        %v5211 = vadd.f32 %v4922, %v5210
        %v5212 = vpop.f32.mrb[0].mxu0
        %5213 = vmatprep.mubr.bf16.mxu0 %v3768
        %5214 = vmatmul.mubr.bf16.gmra.mrb[0].mxu0 %v3767
        %v5215 = vpop.f32.mrb[0].mxu0
        %v5216 = vadd.f32 %v4927, %v5215
        %v5217 = vpop.f32.mrb[0].mxu0
        %v5218 = vpop.f32.mrb[0].mxu0
        %v5219 = vadd.f32 %v4930, %v5218
        %v5220 = vpop.f32.mrb[0].mxu0
        %5221 = vmatprep.mubr.bf16.mxu0 %v3784
        %5222 = vmatmul.mubr.bf16.gmra.mrb[0].mxu0 %v3783
        %v5223 = vpop.f32.mrb[0].mxu0
        %v5224 = vadd.f32 %v4935, %v5223
        %v5225 = vpop.f32.mrb[0].mxu0
        %v5226 = vpop.f32.mrb[0].mxu0
        %v5227 = vadd.f32 %v4938, %v5226
        %v5228 = vpop.f32.mrb[0].mxu0
        %5229 = vmatprep.mubr.bf16.mxu0 %v3800
        %5230 = vmatmul.mubr.bf16.gmra.mrb[0].mxu0 %v3799
        %v5231 = vpop.f32.mrb[0].mxu0
        %v5232 = vadd.f32 %v4943, %v5231
        %v5233 = vpop.f32.mrb[0].mxu0
        %v5234 = vpop.f32.mrb[0].mxu0
        %v5235 = vadd.f32 %v4946, %v5234
        %v5236 = vpop.f32.mrb[0].mxu0
        %5237 = vmatprep.mubr.bf16.mxu0 %v3816
        %5238 = vmatmul.mubr.bf16.gmra.mrb[0].mxu0 %v3815
        %v5239 = vpop.f32.mrb[0].mxu0
        %v5240 = vadd.f32 %v4951, %v5239
        %v5241 = vpop.f32.mrb[0].mxu0
        %v5242 = vpop.f32.mrb[0].mxu0
        %v5243 = vadd.f32 %v4954, %v5242
        %v5244 = vpop.f32.mrb[0].mxu0
        %5245 = vmatprep.mubr.bf16.mxu0 %v3832
        %5246 = vmatmul.mubr.bf16.gmra.mrb[0].mxu0 %v3831
        %v5247 = vpop.f32.mrb[0].mxu0
        %v5248 = vadd.f32 %v4959, %v5247
        %v5249 = vpop.f32.mrb[0].mxu0
        %v5250 = vpop.f32.mrb[0].mxu0
        %v5251 = vadd.f32 %v4962, %v5250
        %v5252 = vpop.f32.mrb[0].mxu0
        %5253 = vmatprep.mubr.bf16.mxu0 %v3848
        %5254 = vmatmul.mubr.bf16.gmra.mrb[0].mxu0 %v3847
        %v5255 = vpop.f32.mrb[0].mxu0
        %v5256 = vadd.f32 %v4967, %v5255
        %v5257 = vpop.f32.mrb[0].mxu0
        %v5258 = vpop.f32.mrb[0].mxu0
        %v5259 = vadd.f32 %v4970, %v5258
        %v5260 = vpop.f32.mrb[0].mxu0
        %5261 = vmatprep.mubr.bf16.mxu0 %v3864
        %5262 = vmatmul.mubr.bf16.gmra.mrb[0].mxu0 %v3863
        %v5263 = vpop.f32.mrb[0].mxu0
        %v5264 = vadd.f32 %v4975, %v5263
        %v5265 = vpop.f32.mrb[0].mxu0
        %v5266 = vpop.f32.mrb[0].mxu0
        %v5267 = vadd.f32 %v4978, %v5266
        %v5268 = vpop.f32.mrb[0].mxu0
        %5269 = vmatprep.mubr.bf16.mxu0 %v3880
        %5270 = vmatmul.mubr.bf16.gmra.mrb[0].mxu0 %v3879
        %v5271 = vpop.f32.mrb[0].mxu0
        %v5272 = vadd.f32 %v4983, %v5271
        %v5273 = vpop.f32.mrb[0].mxu0
        %v5274 = vpop.f32.mrb[0].mxu0
        %v5275 = vadd.f32 %v4986, %v5274
        %v5276 = vpop.f32.mrb[0].mxu0
        %5277 = vmatprep.mubr.bf16.mxu0 %v3896
        %5278 = vmatmul.mubr.bf16.gmra.mrb[0].mxu0 %v3895
        %v5279 = vpop.f32.mrb[0].mxu0
        %v5280 = vadd.f32 %v4991, %v5279
        %v5281 = vpop.f32.mrb[0].mxu0
        %v5282 = vpop.f32.mrb[0].mxu0
        %v5283 = vadd.f32 %v4994, %v5282
        %v5284 = vpop.f32.mrb[0].mxu0
        %5285 = vdwg.mxu0
        %5286 = vmatprep.subr.bf16.mxu0 0
        %5287 = vmatpush1.bf16.msra.mxu0 %v1267
        %5288 = vmatprep.subr.bf16.mxu0 0
        %5289 = vmatpush1.bf16.msra.mxu0 %v1268
        %5290 = vmatprep.subr.bf16.mxu0 0
        %5291 = vmatpush1.bf16.msra.mxu0 %v1269
        %5292 = vmatprep.subr.bf16.mxu0 0
        %5293 = vmatpush1.bf16.msra.mxu0 %v1270
        %5294 = vmatprep.subr.bf16.mxu0 0
        %5295 = vmatpush1.bf16.msra.mxu0 %v1271
        %5296 = vmatprep.subr.bf16.mxu0 0
        %5297 = vmatpush1.bf16.msra.mxu0 %v1272
        %5298 = vmatprep.subr.bf16.mxu0 0
        %5299 = vmatpush1.bf16.msra.mxu0 %v1273
        %5300 = vmatprep.subr.bf16.mxu0 0
        %5301 = vmatpush1.bf16.msra.mxu0 %v1274
        %5302 = vmatprep.subr.bf16.mxu0 0
        %5303 = vmatpush1.bf16.msra.mxu0 %v1275
        %5304 = vmatprep.subr.bf16.mxu0 0
        %5305 = vmatpush1.bf16.msra.mxu0 %v1276
        %5306 = vmatprep.subr.bf16.mxu0 0
        %5307 = vmatpush1.bf16.msra.mxu0 %v1277
        %5308 = vmatprep.subr.bf16.mxu0 0
        %5309 = vmatpush1.bf16.msra.mxu0 %v1278
        %5310 = vmatprep.subr.bf16.mxu0 0
        %5311 = vmatpush1.bf16.msra.mxu0 %v1279
        %5312 = vmatprep.subr.bf16.mxu0 0
        %5313 = vmatpush1.bf16.msra.mxu0 %v1280
        %5314 = vmatprep.subr.bf16.mxu0 0
        %5315 = vmatpush1.bf16.msra.mxu0 %v1281
        %5316 = vmatprep.subr.bf16.mxu0 0
        %5317 = vmatpush1.bf16.msra.mxu0 %v1282
        %5318 = vmatprep.mubr.bf16.mxu0 %v3402
        %5319 = vmatmul.mubr.bf16.gmra.mrb[0].mxu0 %v3401
        %v5320 = vpop.f32.mrb[0].mxu0
        %v5321 = vadd.f32 %v5032, %v5320
        %v5322 = vpop.f32.mrb[0].mxu0
        %v5323 = vpop.f32.mrb[0].mxu0
        %v5324 = vadd.f32 %v5035, %v5323
        %v5325 = vpop.f32.mrb[0].mxu0
        %5326 = vmatprep.mubr.bf16.mxu0 %v3418
        %5327 = vmatmul.mubr.bf16.gmra.mrb[0].mxu0 %v3417
        %v5328 = vpop.f32.mrb[0].mxu0
        %v5329 = vadd.f32 %v5040, %v5328
        %v5330 = vpop.f32.mrb[0].mxu0
        %v5331 = vpop.f32.mrb[0].mxu0
        %v5332 = vadd.f32 %v5043, %v5331
        %v5333 = vpop.f32.mrb[0].mxu0
        %5334 = vmatprep.mubr.bf16.mxu0 %v3434
        %5335 = vmatmul.mubr.bf16.gmra.mrb[0].mxu0 %v3433
        %v5336 = vpop.f32.mrb[0].mxu0
        %v5337 = vadd.f32 %v5048, %v5336
        %v5338 = vpop.f32.mrb[0].mxu0
        %v5339 = vpop.f32.mrb[0].mxu0
        %v5340 = vadd.f32 %v5051, %v5339
        %v5341 = vpop.f32.mrb[0].mxu0
        %5342 = vmatprep.mubr.bf16.mxu0 %v3450
        %5343 = vmatmul.mubr.bf16.gmra.mrb[0].mxu0 %v3449
        %v5344 = vpop.f32.mrb[0].mxu0
        %v5345 = vadd.f32 %v5056, %v5344
        %v5346 = vpop.f32.mrb[0].mxu0
        %v5347 = vpop.f32.mrb[0].mxu0
        %v5348 = vadd.f32 %v5059, %v5347
        %v5349 = vpop.f32.mrb[0].mxu0
        %5350 = vmatprep.mubr.bf16.mxu0 %v3466
        %5351 = vmatmul.mubr.bf16.gmra.mrb[0].mxu0 %v3465
        %v5352 = vpop.f32.mrb[0].mxu0
        %v5353 = vadd.f32 %v5064, %v5352
        %v5354 = vpop.f32.mrb[0].mxu0
        %v5355 = vpop.f32.mrb[0].mxu0
        %v5356 = vadd.f32 %v5067, %v5355
        %v5357 = vpop.f32.mrb[0].mxu0
        %5358 = vmatprep.mubr.bf16.mxu0 %v3482
        %5359 = vmatmul.mubr.bf16.gmra.mrb[0].mxu0 %v3481
        %v5360 = vpop.f32.mrb[0].mxu0
        %v5361 = vadd.f32 %v5072, %v5360
        %v5362 = vpop.f32.mrb[0].mxu0
        %v5363 = vpop.f32.mrb[0].mxu0
        %v5364 = vadd.f32 %v5075, %v5363
        %v5365 = vpop.f32.mrb[0].mxu0
        %5366 = vmatprep.mubr.bf16.mxu0 %v3498
        %5367 = vmatmul.mubr.bf16.gmra.mrb[0].mxu0 %v3497
        %v5368 = vpop.f32.mrb[0].mxu0
        %v5369 = vadd.f32 %v5080, %v5368
        %v5370 = vpop.f32.mrb[0].mxu0
        %v5371 = vpop.f32.mrb[0].mxu0
        %v5372 = vadd.f32 %v5083, %v5371
        %v5373 = vpop.f32.mrb[0].mxu0
        %5374 = vmatprep.mubr.bf16.mxu0 %v3514
        %5375 = vmatmul.mubr.bf16.gmra.mrb[0].mxu0 %v3513
        %v5376 = vpop.f32.mrb[0].mxu0
        %v5377 = vadd.f32 %v5088, %v5376
        %v5378 = vpop.f32.mrb[0].mxu0
        %v5379 = vpop.f32.mrb[0].mxu0
        %v5380 = vadd.f32 %v5091, %v5379
        %v5381 = vpop.f32.mrb[0].mxu0
        %5382 = vmatprep.mubr.bf16.mxu0 %v3530
        %5383 = vmatmul.mubr.bf16.gmra.mrb[0].mxu0 %v3529
        %v5384 = vpop.f32.mrb[0].mxu0
        %v5385 = vadd.f32 %v5096, %v5384
        %v5386 = vpop.f32.mrb[0].mxu0
        %v5387 = vpop.f32.mrb[0].mxu0
        %v5388 = vadd.f32 %v5099, %v5387
        %v5389 = vpop.f32.mrb[0].mxu0
        %5390 = vmatprep.mubr.bf16.mxu0 %v3546
        %5391 = vmatmul.mubr.bf16.gmra.mrb[0].mxu0 %v3545
        %v5392 = vpop.f32.mrb[0].mxu0
        %v5393 = vadd.f32 %v5104, %v5392
        %v5394 = vpop.f32.mrb[0].mxu0
        %v5395 = vpop.f32.mrb[0].mxu0
        %v5396 = vadd.f32 %v5107, %v5395
        %v5397 = vpop.f32.mrb[0].mxu0
        %5398 = vmatprep.mubr.bf16.mxu0 %v3562
        %5399 = vmatmul.mubr.bf16.gmra.mrb[0].mxu0 %v3561
        %v5400 = vpop.f32.mrb[0].mxu0
        %v5401 = vadd.f32 %v5112, %v5400
        %v5402 = vpop.f32.mrb[0].mxu0
        %v5403 = vpop.f32.mrb[0].mxu0
        %v5404 = vadd.f32 %v5115, %v5403
        %v5405 = vpop.f32.mrb[0].mxu0
        %5406 = vmatprep.mubr.bf16.mxu0 %v3578
        %5407 = vmatmul.mubr.bf16.gmra.mrb[0].mxu0 %v3577
        %v5408 = vpop.f32.mrb[0].mxu0
        %v5409 = vadd.f32 %v5120, %v5408
        %v5410 = vpop.f32.mrb[0].mxu0
        %v5411 = vpop.f32.mrb[0].mxu0
        %v5412 = vadd.f32 %v5123, %v5411
        %v5413 = vpop.f32.mrb[0].mxu0
        %5414 = vmatprep.mubr.bf16.mxu0 %v3594
        %5415 = vmatmul.mubr.bf16.gmra.mrb[0].mxu0 %v3593
        %v5416 = vpop.f32.mrb[0].mxu0
        %v5417 = vadd.f32 %v5128, %v5416
        %v5418 = vpop.f32.mrb[0].mxu0
        %v5419 = vpop.f32.mrb[0].mxu0
        %v5420 = vadd.f32 %v5131, %v5419
        %v5421 = vpop.f32.mrb[0].mxu0
        %5422 = vmatprep.mubr.bf16.mxu0 %v3610
        %5423 = vmatmul.mubr.bf16.gmra.mrb[0].mxu0 %v3609
        %v5424 = vpop.f32.mrb[0].mxu0
        %v5425 = vadd.f32 %v5136, %v5424
        %v5426 = vpop.f32.mrb[0].mxu0
        %v5427 = vpop.f32.mrb[0].mxu0
        %v5428 = vadd.f32 %v5139, %v5427
        %v5429 = vpop.f32.mrb[0].mxu0
        %5430 = vmatprep.mubr.bf16.mxu0 %v3626
        %5431 = vmatmul.mubr.bf16.gmra.mrb[0].mxu0 %v3625
        %v5432 = vpop.f32.mrb[0].mxu0
        %v5433 = vadd.f32 %v5144, %v5432
        %v5434 = vpop.f32.mrb[0].mxu0
        %v5435 = vpop.f32.mrb[0].mxu0
        %v5436 = vadd.f32 %v5147, %v5435
        %v5437 = vpop.f32.mrb[0].mxu0
        %5438 = vmatprep.mubr.bf16.mxu0 %v3642
        %5439 = vmatmul.mubr.bf16.gmra.mrb[0].mxu0 %v3641
        %v5440 = vpop.f32.mrb[0].mxu0
        %v5441 = vadd.f32 %v5152, %v5440
        %v5442 = vpop.f32.mrb[0].mxu0
        %v5443 = vpop.f32.mrb[0].mxu0
        %v5444 = vadd.f32 %v5155, %v5443
        %v5445 = vpop.f32.mrb[0].mxu0
        %5446 = vmatprep.mubr.bf16.mxu0 %v3658
        %5447 = vmatmul.mubr.bf16.gmra.mrb[0].mxu0 %v3657
        %v5448 = vpop.f32.mrb[0].mxu0
        %v5449 = vadd.f32 %v5160, %v5448
        %v5450 = vpop.f32.mrb[0].mxu0
        %v5451 = vpop.f32.mrb[0].mxu0
        %v5452 = vadd.f32 %v5163, %v5451
        %v5453 = vpop.f32.mrb[0].mxu0
        %5454 = vmatprep.mubr.bf16.mxu0 %v3674
        %5455 = vmatmul.mubr.bf16.gmra.mrb[0].mxu0 %v3673
        %v5456 = vpop.f32.mrb[0].mxu0
        %v5457 = vadd.f32 %v5168, %v5456
        %v5458 = vpop.f32.mrb[0].mxu0
        %v5459 = vpop.f32.mrb[0].mxu0
        %v5460 = vadd.f32 %v5171, %v5459
        %v5461 = vpop.f32.mrb[0].mxu0
        %5462 = vmatprep.mubr.bf16.mxu0 %v3690
        %5463 = vmatmul.mubr.bf16.gmra.mrb[0].mxu0 %v3689
        %v5464 = vpop.f32.mrb[0].mxu0
        %v5465 = vadd.f32 %v5176, %v5464
        %v5466 = vpop.f32.mrb[0].mxu0
        %v5467 = vpop.f32.mrb[0].mxu0
        %v5468 = vadd.f32 %v5179, %v5467
        %v5469 = vpop.f32.mrb[0].mxu0
        %5470 = vmatprep.mubr.bf16.mxu0 %v3706
        %5471 = vmatmul.mubr.bf16.gmra.mrb[0].mxu0 %v3705
        %v5472 = vpop.f32.mrb[0].mxu0
        %v5473 = vadd.f32 %v5184, %v5472
        %v5474 = vpop.f32.mrb[0].mxu0
        %v5475 = vpop.f32.mrb[0].mxu0
        %v5476 = vadd.f32 %v5187, %v5475
        %v5477 = vpop.f32.mrb[0].mxu0
        %5478 = vmatprep.mubr.bf16.mxu0 %v3722
        %5479 = vmatmul.mubr.bf16.gmra.mrb[0].mxu0 %v3721
        %v5480 = vpop.f32.mrb[0].mxu0
        %v5481 = vadd.f32 %v5192, %v5480
        %v5482 = vpop.f32.mrb[0].mxu0
        %v5483 = vpop.f32.mrb[0].mxu0
        %v5484 = vadd.f32 %v5195, %v5483
        %v5485 = vpop.f32.mrb[0].mxu0
        %5486 = vmatprep.mubr.bf16.mxu0 %v3738
        %5487 = vmatmul.mubr.bf16.gmra.mrb[0].mxu0 %v3737
        %v5488 = vpop.f32.mrb[0].mxu0
        %v5489 = vadd.f32 %v5200, %v5488
        %v5490 = vpop.f32.mrb[0].mxu0
        %v5491 = vpop.f32.mrb[0].mxu0
        %v5492 = vadd.f32 %v5203, %v5491
        %v5493 = vpop.f32.mrb[0].mxu0
        %5494 = vmatprep.mubr.bf16.mxu0 %v3754
        %5495 = vmatmul.mubr.bf16.gmra.mrb[0].mxu0 %v3753
        %v5496 = vpop.f32.mrb[0].mxu0
        %v5497 = vadd.f32 %v5208, %v5496
        %v5498 = vpop.f32.mrb[0].mxu0
        %v5499 = vpop.f32.mrb[0].mxu0
        %v5500 = vadd.f32 %v5211, %v5499
        %v5501 = vpop.f32.mrb[0].mxu0
        %5502 = vmatprep.mubr.bf16.mxu0 %v3770
        %5503 = vmatmul.mubr.bf16.gmra.mrb[0].mxu0 %v3769
        %v5504 = vpop.f32.mrb[0].mxu0
        %v5505 = vadd.f32 %v5216, %v5504
        %v5506 = vpop.f32.mrb[0].mxu0
        %v5507 = vpop.f32.mrb[0].mxu0
        %v5508 = vadd.f32 %v5219, %v5507
        %v5509 = vpop.f32.mrb[0].mxu0
        %5510 = vmatprep.mubr.bf16.mxu0 %v3786
        %5511 = vmatmul.mubr.bf16.gmra.mrb[0].mxu0 %v3785
        %v5512 = vpop.f32.mrb[0].mxu0
        %v5513 = vadd.f32 %v5224, %v5512
        %v5514 = vpop.f32.mrb[0].mxu0
        %v5515 = vpop.f32.mrb[0].mxu0
        %v5516 = vadd.f32 %v5227, %v5515
        %v5517 = vpop.f32.mrb[0].mxu0
        %5518 = vmatprep.mubr.bf16.mxu0 %v3802
        %5519 = vmatmul.mubr.bf16.gmra.mrb[0].mxu0 %v3801
        %v5520 = vpop.f32.mrb[0].mxu0
        %v5521 = vadd.f32 %v5232, %v5520
        %v5522 = vpop.f32.mrb[0].mxu0
        %v5523 = vpop.f32.mrb[0].mxu0
        %v5524 = vadd.f32 %v5235, %v5523
        %v5525 = vpop.f32.mrb[0].mxu0
        %5526 = vmatprep.mubr.bf16.mxu0 %v3818
        %5527 = vmatmul.mubr.bf16.gmra.mrb[0].mxu0 %v3817
        %v5528 = vpop.f32.mrb[0].mxu0
        %v5529 = vadd.f32 %v5240, %v5528
        %v5530 = vpop.f32.mrb[0].mxu0
        %v5531 = vpop.f32.mrb[0].mxu0
        %v5532 = vadd.f32 %v5243, %v5531
        %v5533 = vpop.f32.mrb[0].mxu0
        %5534 = vmatprep.mubr.bf16.mxu0 %v3834
        %5535 = vmatmul.mubr.bf16.gmra.mrb[0].mxu0 %v3833
        %v5536 = vpop.f32.mrb[0].mxu0
        %v5537 = vadd.f32 %v5248, %v5536
        %v5538 = vpop.f32.mrb[0].mxu0
        %v5539 = vpop.f32.mrb[0].mxu0
        %v5540 = vadd.f32 %v5251, %v5539
        %v5541 = vpop.f32.mrb[0].mxu0
        %5542 = vmatprep.mubr.bf16.mxu0 %v3850
        %5543 = vmatmul.mubr.bf16.gmra.mrb[0].mxu0 %v3849
        %v5544 = vpop.f32.mrb[0].mxu0
        %v5545 = vadd.f32 %v5256, %v5544
        %v5546 = vpop.f32.mrb[0].mxu0
        %v5547 = vpop.f32.mrb[0].mxu0
        %v5548 = vadd.f32 %v5259, %v5547
        %v5549 = vpop.f32.mrb[0].mxu0
        %5550 = vmatprep.mubr.bf16.mxu0 %v3866
        %5551 = vmatmul.mubr.bf16.gmra.mrb[0].mxu0 %v3865
        %v5552 = vpop.f32.mrb[0].mxu0
        %v5553 = vadd.f32 %v5264, %v5552
        %v5554 = vpop.f32.mrb[0].mxu0
        %v5555 = vpop.f32.mrb[0].mxu0
        %v5556 = vadd.f32 %v5267, %v5555
        %v5557 = vpop.f32.mrb[0].mxu0
        %5558 = vmatprep.mubr.bf16.mxu0 %v3882
        %5559 = vmatmul.mubr.bf16.gmra.mrb[0].mxu0 %v3881
        %v5560 = vpop.f32.mrb[0].mxu0
        %v5561 = vadd.f32 %v5272, %v5560
        %v5562 = vpop.f32.mrb[0].mxu0
        %v5563 = vpop.f32.mrb[0].mxu0
        %v5564 = vadd.f32 %v5275, %v5563
        %v5565 = vpop.f32.mrb[0].mxu0
        %5566 = vmatprep.mubr.bf16.mxu0 %v3898
        %5567 = vmatmul.mubr.bf16.gmra.mrb[0].mxu0 %v3897
        %v5568 = vpop.f32.mrb[0].mxu0
        %v5569 = vadd.f32 %v5280, %v5568
        %v5570 = vpop.f32.mrb[0].mxu0
        %v5571 = vpop.f32.mrb[0].mxu0
        %v5572 = vadd.f32 %v5283, %v5571
        %v5573 = vpop.f32.mrb[0].mxu0
        %5574 = vdwg.mxu0
        %5575 = vmatprep.subr.bf16.mxu0 0
        %5576 = vmatpush1.bf16.msra.mxu0 %v1283
        %5577 = vmatprep.subr.bf16.mxu0 0
        %5578 = vmatpush1.bf16.msra.mxu0 %v1284
        %5579 = vmatprep.subr.bf16.mxu0 0
        %5580 = vmatpush1.bf16.msra.mxu0 %v1285
        %5581 = vmatprep.subr.bf16.mxu0 0
        %5582 = vmatpush1.bf16.msra.mxu0 %v1286
        %5583 = vmatprep.subr.bf16.mxu0 0
        %5584 = vmatpush1.bf16.msra.mxu0 %v1287
        %5585 = vmatprep.subr.bf16.mxu0 0
        %5586 = vmatpush1.bf16.msra.mxu0 %v1288
        %5587 = vmatprep.subr.bf16.mxu0 0
        %5588 = vmatpush1.bf16.msra.mxu0 %v1289
        %5589 = vmatprep.subr.bf16.mxu0 0
        %5590 = vmatpush1.bf16.msra.mxu0 %v1290
        %5591 = vmatprep.subr.bf16.mxu0 0
        %5592 = vmatpush1.bf16.msra.mxu0 %v1291
        %5593 = vmatprep.subr.bf16.mxu0 0
        %5594 = vmatpush1.bf16.msra.mxu0 %v1292
        %5595 = vmatprep.subr.bf16.mxu0 0
        %5596 = vmatpush1.bf16.msra.mxu0 %v1293
        %5597 = vmatprep.subr.bf16.mxu0 0
        %5598 = vmatpush1.bf16.msra.mxu0 %v1294
        %5599 = vmatprep.subr.bf16.mxu0 0
        %5600 = vmatpush1.bf16.msra.mxu0 %v1295
        %5601 = vmatprep.subr.bf16.mxu0 0
        %5602 = vmatpush1.bf16.msra.mxu0 %v1296
        %5603 = vmatprep.subr.bf16.mxu0 0
        %5604 = vmatpush1.bf16.msra.mxu0 %v1297
        %5605 = vmatprep.subr.bf16.mxu0 0
        %5606 = vmatpush1.bf16.msra.mxu0 %v1298
        %5607 = vmatprep.mubr.bf16.mxu0 %v3404
        %5608 = vmatmul.mubr.bf16.gmra.mrb[0].mxu0 %v3403
        %v5609 = vpop.f32.mrb[0].mxu0
        %v5610 = vadd.f32 %v5321, %v5609
        %v5611 = vpop.f32.mrb[0].mxu0
        %v5612 = vpop.f32.mrb[0].mxu0
        %v5613 = vadd.f32 %v5324, %v5612
        %v5614 = vpop.f32.mrb[0].mxu0
        %5615 = vmatprep.mubr.bf16.mxu0 %v3420
        %5616 = vmatmul.mubr.bf16.gmra.mrb[0].mxu0 %v3419
        %v5617 = vpop.f32.mrb[0].mxu0
        %v5618 = vadd.f32 %v5329, %v5617
        %v5619 = vpop.f32.mrb[0].mxu0
        %v5620 = vpop.f32.mrb[0].mxu0
        %v5621 = vadd.f32 %v5332, %v5620
        %v5622 = vpop.f32.mrb[0].mxu0
        %5623 = vmatprep.mubr.bf16.mxu0 %v3436
        %5624 = vmatmul.mubr.bf16.gmra.mrb[0].mxu0 %v3435
        %v5625 = vpop.f32.mrb[0].mxu0
        %v5626 = vadd.f32 %v5337, %v5625
        %v5627 = vpop.f32.mrb[0].mxu0
        %v5628 = vpop.f32.mrb[0].mxu0
        %v5629 = vadd.f32 %v5340, %v5628
        %v5630 = vpop.f32.mrb[0].mxu0
        %5631 = vmatprep.mubr.bf16.mxu0 %v3452
        %5632 = vmatmul.mubr.bf16.gmra.mrb[0].mxu0 %v3451
        %v5633 = vpop.f32.mrb[0].mxu0
        %v5634 = vadd.f32 %v5345, %v5633
        %v5635 = vpop.f32.mrb[0].mxu0
        %v5636 = vpop.f32.mrb[0].mxu0
        %v5637 = vadd.f32 %v5348, %v5636
        %v5638 = vpop.f32.mrb[0].mxu0
        %5639 = vmatprep.mubr.bf16.mxu0 %v3468
        %5640 = vmatmul.mubr.bf16.gmra.mrb[0].mxu0 %v3467
        %v5641 = vpop.f32.mrb[0].mxu0
        %v5642 = vadd.f32 %v5353, %v5641
        %v5643 = vpop.f32.mrb[0].mxu0
        %v5644 = vpop.f32.mrb[0].mxu0
        %v5645 = vadd.f32 %v5356, %v5644
        %v5646 = vpop.f32.mrb[0].mxu0
        %5647 = vmatprep.mubr.bf16.mxu0 %v3484
        %5648 = vmatmul.mubr.bf16.gmra.mrb[0].mxu0 %v3483
        %v5649 = vpop.f32.mrb[0].mxu0
        %v5650 = vadd.f32 %v5361, %v5649
        %v5651 = vpop.f32.mrb[0].mxu0
        %v5652 = vpop.f32.mrb[0].mxu0
        %v5653 = vadd.f32 %v5364, %v5652
        %v5654 = vpop.f32.mrb[0].mxu0
        %5655 = vmatprep.mubr.bf16.mxu0 %v3500
        %5656 = vmatmul.mubr.bf16.gmra.mrb[0].mxu0 %v3499
        %v5657 = vpop.f32.mrb[0].mxu0
        %v5658 = vadd.f32 %v5369, %v5657
        %v5659 = vpop.f32.mrb[0].mxu0
        %v5660 = vpop.f32.mrb[0].mxu0
        %v5661 = vadd.f32 %v5372, %v5660
        %v5662 = vpop.f32.mrb[0].mxu0
        %5663 = vmatprep.mubr.bf16.mxu0 %v3516
        %5664 = vmatmul.mubr.bf16.gmra.mrb[0].mxu0 %v3515
        %v5665 = vpop.f32.mrb[0].mxu0
        %v5666 = vadd.f32 %v5377, %v5665
        %v5667 = vpop.f32.mrb[0].mxu0
        %v5668 = vpop.f32.mrb[0].mxu0
        %v5669 = vadd.f32 %v5380, %v5668
        %v5670 = vpop.f32.mrb[0].mxu0
        %5671 = vmatprep.mubr.bf16.mxu0 %v3532
        %5672 = vmatmul.mubr.bf16.gmra.mrb[0].mxu0 %v3531
        %v5673 = vpop.f32.mrb[0].mxu0
        %v5674 = vadd.f32 %v5385, %v5673
        %v5675 = vpop.f32.mrb[0].mxu0
        %v5676 = vpop.f32.mrb[0].mxu0
        %v5677 = vadd.f32 %v5388, %v5676
        %v5678 = vpop.f32.mrb[0].mxu0
        %5679 = vmatprep.mubr.bf16.mxu0 %v3548
        %5680 = vmatmul.mubr.bf16.gmra.mrb[0].mxu0 %v3547
        %v5681 = vpop.f32.mrb[0].mxu0
        %v5682 = vadd.f32 %v5393, %v5681
        %v5683 = vpop.f32.mrb[0].mxu0
        %v5684 = vpop.f32.mrb[0].mxu0
        %v5685 = vadd.f32 %v5396, %v5684
        %v5686 = vpop.f32.mrb[0].mxu0
        %5687 = vmatprep.mubr.bf16.mxu0 %v3564
        %5688 = vmatmul.mubr.bf16.gmra.mrb[0].mxu0 %v3563
        %v5689 = vpop.f32.mrb[0].mxu0
        %v5690 = vadd.f32 %v5401, %v5689
        %v5691 = vpop.f32.mrb[0].mxu0
        %v5692 = vpop.f32.mrb[0].mxu0
        %v5693 = vadd.f32 %v5404, %v5692
        %v5694 = vpop.f32.mrb[0].mxu0
        %5695 = vmatprep.mubr.bf16.mxu0 %v3580
        %5696 = vmatmul.mubr.bf16.gmra.mrb[0].mxu0 %v3579
        %v5697 = vpop.f32.mrb[0].mxu0
        %v5698 = vadd.f32 %v5409, %v5697
        %v5699 = vpop.f32.mrb[0].mxu0
        %v5700 = vpop.f32.mrb[0].mxu0
        %v5701 = vadd.f32 %v5412, %v5700
        %v5702 = vpop.f32.mrb[0].mxu0
        %5703 = vmatprep.mubr.bf16.mxu0 %v3596
        %5704 = vmatmul.mubr.bf16.gmra.mrb[0].mxu0 %v3595
        %v5705 = vpop.f32.mrb[0].mxu0
        %v5706 = vadd.f32 %v5417, %v5705
        %v5707 = vpop.f32.mrb[0].mxu0
        %v5708 = vpop.f32.mrb[0].mxu0
        %v5709 = vadd.f32 %v5420, %v5708
        %v5710 = vpop.f32.mrb[0].mxu0
        %5711 = vmatprep.mubr.bf16.mxu0 %v3612
        %5712 = vmatmul.mubr.bf16.gmra.mrb[0].mxu0 %v3611
        %v5713 = vpop.f32.mrb[0].mxu0
        %v5714 = vadd.f32 %v5425, %v5713
        %v5715 = vpop.f32.mrb[0].mxu0
        %v5716 = vpop.f32.mrb[0].mxu0
        %v5717 = vadd.f32 %v5428, %v5716
        %v5718 = vpop.f32.mrb[0].mxu0
        %5719 = vmatprep.mubr.bf16.mxu0 %v3628
        %5720 = vmatmul.mubr.bf16.gmra.mrb[0].mxu0 %v3627
        %v5721 = vpop.f32.mrb[0].mxu0
        %v5722 = vadd.f32 %v5433, %v5721
        %v5723 = vpop.f32.mrb[0].mxu0
        %v5724 = vpop.f32.mrb[0].mxu0
        %v5725 = vadd.f32 %v5436, %v5724
        %v5726 = vpop.f32.mrb[0].mxu0
        %5727 = vmatprep.mubr.bf16.mxu0 %v3644
        %5728 = vmatmul.mubr.bf16.gmra.mrb[0].mxu0 %v3643
        %v5729 = vpop.f32.mrb[0].mxu0
        %v5730 = vadd.f32 %v5441, %v5729
        %v5731 = vpop.f32.mrb[0].mxu0
        %v5732 = vpop.f32.mrb[0].mxu0
        %v5733 = vadd.f32 %v5444, %v5732
        %v5734 = vpop.f32.mrb[0].mxu0
        %5735 = vmatprep.mubr.bf16.mxu0 %v3660
        %5736 = vmatmul.mubr.bf16.gmra.mrb[0].mxu0 %v3659
        %v5737 = vpop.f32.mrb[0].mxu0
        %v5738 = vadd.f32 %v5449, %v5737
        %v5739 = vpop.f32.mrb[0].mxu0
        %v5740 = vpop.f32.mrb[0].mxu0
        %v5741 = vadd.f32 %v5452, %v5740
        %v5742 = vpop.f32.mrb[0].mxu0
        %5743 = vmatprep.mubr.bf16.mxu0 %v3676
        %5744 = vmatmul.mubr.bf16.gmra.mrb[0].mxu0 %v3675
        %v5745 = vpop.f32.mrb[0].mxu0
        %v5746 = vadd.f32 %v5457, %v5745
        %v5747 = vpop.f32.mrb[0].mxu0
        %v5748 = vpop.f32.mrb[0].mxu0
        %v5749 = vadd.f32 %v5460, %v5748
        %v5750 = vpop.f32.mrb[0].mxu0
        %5751 = vmatprep.mubr.bf16.mxu0 %v3692
        %5752 = vmatmul.mubr.bf16.gmra.mrb[0].mxu0 %v3691
        %v5753 = vpop.f32.mrb[0].mxu0
        %v5754 = vadd.f32 %v5465, %v5753
        %v5755 = vpop.f32.mrb[0].mxu0
        %v5756 = vpop.f32.mrb[0].mxu0
        %v5757 = vadd.f32 %v5468, %v5756
        %v5758 = vpop.f32.mrb[0].mxu0
        %5759 = vmatprep.mubr.bf16.mxu0 %v3708
        %5760 = vmatmul.mubr.bf16.gmra.mrb[0].mxu0 %v3707
        %v5761 = vpop.f32.mrb[0].mxu0
        %v5762 = vadd.f32 %v5473, %v5761
        %v5763 = vpop.f32.mrb[0].mxu0
        %v5764 = vpop.f32.mrb[0].mxu0
        %v5765 = vadd.f32 %v5476, %v5764
        %v5766 = vpop.f32.mrb[0].mxu0
        %5767 = vmatprep.mubr.bf16.mxu0 %v3724
        %5768 = vmatmul.mubr.bf16.gmra.mrb[0].mxu0 %v3723
        %v5769 = vpop.f32.mrb[0].mxu0
        %v5770 = vadd.f32 %v5481, %v5769
        %v5771 = vpop.f32.mrb[0].mxu0
        %v5772 = vpop.f32.mrb[0].mxu0
        %v5773 = vadd.f32 %v5484, %v5772
        %v5774 = vpop.f32.mrb[0].mxu0
        %5775 = vmatprep.mubr.bf16.mxu0 %v3740
        %5776 = vmatmul.mubr.bf16.gmra.mrb[0].mxu0 %v3739
        %v5777 = vpop.f32.mrb[0].mxu0
        %v5778 = vadd.f32 %v5489, %v5777
        %v5779 = vpop.f32.mrb[0].mxu0
        %v5780 = vpop.f32.mrb[0].mxu0
        %v5781 = vadd.f32 %v5492, %v5780
        %v5782 = vpop.f32.mrb[0].mxu0
        %5783 = vmatprep.mubr.bf16.mxu0 %v3756
        %5784 = vmatmul.mubr.bf16.gmra.mrb[0].mxu0 %v3755
        %v5785 = vpop.f32.mrb[0].mxu0
        %v5786 = vadd.f32 %v5497, %v5785
        %v5787 = vpop.f32.mrb[0].mxu0
        %v5788 = vpop.f32.mrb[0].mxu0
        %v5789 = vadd.f32 %v5500, %v5788
        %v5790 = vpop.f32.mrb[0].mxu0
        %5791 = vmatprep.mubr.bf16.mxu0 %v3772
        %5792 = vmatmul.mubr.bf16.gmra.mrb[0].mxu0 %v3771
        %v5793 = vpop.f32.mrb[0].mxu0
        %v5794 = vadd.f32 %v5505, %v5793
        %v5795 = vpop.f32.mrb[0].mxu0
        %v5796 = vpop.f32.mrb[0].mxu0
        %v5797 = vadd.f32 %v5508, %v5796
        %v5798 = vpop.f32.mrb[0].mxu0
        %5799 = vmatprep.mubr.bf16.mxu0 %v3788
        %5800 = vmatmul.mubr.bf16.gmra.mrb[0].mxu0 %v3787
        %v5801 = vpop.f32.mrb[0].mxu0
        %v5802 = vadd.f32 %v5513, %v5801
        %v5803 = vpop.f32.mrb[0].mxu0
        %v5804 = vpop.f32.mrb[0].mxu0
        %v5805 = vadd.f32 %v5516, %v5804
        %v5806 = vpop.f32.mrb[0].mxu0
        %5807 = vmatprep.mubr.bf16.mxu0 %v3804
        %5808 = vmatmul.mubr.bf16.gmra.mrb[0].mxu0 %v3803
        %v5809 = vpop.f32.mrb[0].mxu0
        %v5810 = vadd.f32 %v5521, %v5809
        %v5811 = vpop.f32.mrb[0].mxu0
        %v5812 = vpop.f32.mrb[0].mxu0
        %v5813 = vadd.f32 %v5524, %v5812
        %v5814 = vpop.f32.mrb[0].mxu0
        %5815 = vmatprep.mubr.bf16.mxu0 %v3820
        %5816 = vmatmul.mubr.bf16.gmra.mrb[0].mxu0 %v3819
        %v5817 = vpop.f32.mrb[0].mxu0
        %v5818 = vadd.f32 %v5529, %v5817
        %v5819 = vpop.f32.mrb[0].mxu0
        %v5820 = vpop.f32.mrb[0].mxu0
        %v5821 = vadd.f32 %v5532, %v5820
        %v5822 = vpop.f32.mrb[0].mxu0
        %5823 = vmatprep.mubr.bf16.mxu0 %v3836
        %5824 = vmatmul.mubr.bf16.gmra.mrb[0].mxu0 %v3835
        %v5825 = vpop.f32.mrb[0].mxu0
        %v5826 = vadd.f32 %v5537, %v5825
        %v5827 = vpop.f32.mrb[0].mxu0
        %v5828 = vpop.f32.mrb[0].mxu0
        %v5829 = vadd.f32 %v5540, %v5828
        %v5830 = vpop.f32.mrb[0].mxu0
        %5831 = vmatprep.mubr.bf16.mxu0 %v3852
        %5832 = vmatmul.mubr.bf16.gmra.mrb[0].mxu0 %v3851
        %v5833 = vpop.f32.mrb[0].mxu0
        %v5834 = vadd.f32 %v5545, %v5833
        %v5835 = vpop.f32.mrb[0].mxu0
        %v5836 = vpop.f32.mrb[0].mxu0
        %v5837 = vadd.f32 %v5548, %v5836
        %v5838 = vpop.f32.mrb[0].mxu0
        %5839 = vmatprep.mubr.bf16.mxu0 %v3868
        %5840 = vmatmul.mubr.bf16.gmra.mrb[0].mxu0 %v3867
        %v5841 = vpop.f32.mrb[0].mxu0
        %v5842 = vadd.f32 %v5553, %v5841
        %v5843 = vpop.f32.mrb[0].mxu0
        %v5844 = vpop.f32.mrb[0].mxu0
        %v5845 = vadd.f32 %v5556, %v5844
        %v5846 = vpop.f32.mrb[0].mxu0
        %5847 = vmatprep.mubr.bf16.mxu0 %v3884
        %5848 = vmatmul.mubr.bf16.gmra.mrb[0].mxu0 %v3883
        %v5849 = vpop.f32.mrb[0].mxu0
        %v5850 = vadd.f32 %v5561, %v5849
        %v5851 = vpop.f32.mrb[0].mxu0
        %v5852 = vpop.f32.mrb[0].mxu0
        %v5853 = vadd.f32 %v5564, %v5852
        %v5854 = vpop.f32.mrb[0].mxu0
        %5855 = vmatprep.mubr.bf16.mxu0 %v3900
        %5856 = vmatmul.mubr.bf16.gmra.mrb[0].mxu0 %v3899
        %v5857 = vpop.f32.mrb[0].mxu0
        %v5858 = vadd.f32 %v5569, %v5857
        %v5859 = vpop.f32.mrb[0].mxu0
        %v5860 = vpop.f32.mrb[0].mxu0
        %v5861 = vadd.f32 %v5572, %v5860
        %v5862 = vpop.f32.mrb[0].mxu0
        %5863 = vdwg.mxu0
        %5864 = vmatprep.subr.bf16.mxu0 0
        %5865 = vmatpush1.bf16.msra.mxu0 %v1299
        %5866 = vmatprep.subr.bf16.mxu0 0
        %5867 = vmatpush1.bf16.msra.mxu0 %v1300
        %5868 = vmatprep.subr.bf16.mxu0 0
        %5869 = vmatpush1.bf16.msra.mxu0 %v1301
        %5870 = vmatprep.subr.bf16.mxu0 0
        %5871 = vmatpush1.bf16.msra.mxu0 %v1302
        %5872 = vmatprep.subr.bf16.mxu0 0
        %5873 = vmatpush1.bf16.msra.mxu0 %v1303
        %5874 = vmatprep.subr.bf16.mxu0 0
        %5875 = vmatpush1.bf16.msra.mxu0 %v1304
        %5876 = vmatprep.subr.bf16.mxu0 0
        %5877 = vmatpush1.bf16.msra.mxu0 %v1305
        %5878 = vmatprep.subr.bf16.mxu0 0
        %5879 = vmatpush1.bf16.msra.mxu0 %v1306
        %5880 = vmatprep.subr.bf16.mxu0 0
        %5881 = vmatpush1.bf16.msra.mxu0 %v1307
        %5882 = vmatprep.subr.bf16.mxu0 0
        %5883 = vmatpush1.bf16.msra.mxu0 %v1308
        %5884 = vmatprep.subr.bf16.mxu0 0
        %5885 = vmatpush1.bf16.msra.mxu0 %v1309
        %5886 = vmatprep.subr.bf16.mxu0 0
        %5887 = vmatpush1.bf16.msra.mxu0 %v1310
        %5888 = vmatprep.subr.bf16.mxu0 0
        %5889 = vmatpush1.bf16.msra.mxu0 %v1311
        %5890 = vmatprep.subr.bf16.mxu0 0
        %5891 = vmatpush1.bf16.msra.mxu0 %v1312
        %5892 = vmatprep.subr.bf16.mxu0 0
        %5893 = vmatpush1.bf16.msra.mxu0 %v1313
        %5894 = vmatprep.subr.bf16.mxu0 0
        %5895 = vmatpush1.bf16.msra.mxu0 %v1314
        %5896 = vmatprep.mubr.bf16.mxu0 %v3406
        %5897 = vmatmul.mubr.bf16.gmra.mrb[0].mxu0 %v3405
        %v5898 = vpop.f32.mrb[0].mxu0
        %v5899 = vadd.f32 %v5610, %v5898
        %v5900 = vpop.f32.mrb[0].mxu0
        %v5901 = vpop.f32.mrb[0].mxu0
        %v5902 = vadd.f32 %v5613, %v5901
        %v5903 = vpop.f32.mrb[0].mxu0
        %5904 = vmatprep.mubr.bf16.mxu0 %v3422
        %5905 = vmatmul.mubr.bf16.gmra.mrb[0].mxu0 %v3421
        %v5906 = vpop.f32.mrb[0].mxu0
        %v5907 = vadd.f32 %v5618, %v5906
        %v5908 = vpop.f32.mrb[0].mxu0
        %v5909 = vpop.f32.mrb[0].mxu0
        %v5910 = vadd.f32 %v5621, %v5909
        %v5911 = vpop.f32.mrb[0].mxu0
        %5912 = vmatprep.mubr.bf16.mxu0 %v3438
        %5913 = vmatmul.mubr.bf16.gmra.mrb[0].mxu0 %v3437
        %v5914 = vpop.f32.mrb[0].mxu0
        %v5915 = vadd.f32 %v5626, %v5914
        %v5916 = vpop.f32.mrb[0].mxu0
        %v5917 = vpop.f32.mrb[0].mxu0
        %v5918 = vadd.f32 %v5629, %v5917
        %v5919 = vpop.f32.mrb[0].mxu0
        %5920 = vmatprep.mubr.bf16.mxu0 %v3454
        %5921 = vmatmul.mubr.bf16.gmra.mrb[0].mxu0 %v3453
        %v5922 = vpop.f32.mrb[0].mxu0
        %v5923 = vadd.f32 %v5634, %v5922
        %v5924 = vpop.f32.mrb[0].mxu0
        %v5925 = vpop.f32.mrb[0].mxu0
        %v5926 = vadd.f32 %v5637, %v5925
        %v5927 = vpop.f32.mrb[0].mxu0
        %5928 = vmatprep.mubr.bf16.mxu0 %v3470
        %5929 = vmatmul.mubr.bf16.gmra.mrb[0].mxu0 %v3469
        %v5930 = vpop.f32.mrb[0].mxu0
        %v5931 = vadd.f32 %v5642, %v5930
        %v5932 = vpop.f32.mrb[0].mxu0
        %v5933 = vpop.f32.mrb[0].mxu0
        %v5934 = vadd.f32 %v5645, %v5933
        %v5935 = vpop.f32.mrb[0].mxu0
        %5936 = vmatprep.mubr.bf16.mxu0 %v3486
        %5937 = vmatmul.mubr.bf16.gmra.mrb[0].mxu0 %v3485
        %v5938 = vpop.f32.mrb[0].mxu0
        %v5939 = vadd.f32 %v5650, %v5938
        %v5940 = vpop.f32.mrb[0].mxu0
        %v5941 = vpop.f32.mrb[0].mxu0
        %v5942 = vadd.f32 %v5653, %v5941
        %v5943 = vpop.f32.mrb[0].mxu0
        %5944 = vmatprep.mubr.bf16.mxu0 %v3502
        %5945 = vmatmul.mubr.bf16.gmra.mrb[0].mxu0 %v3501
        %v5946 = vpop.f32.mrb[0].mxu0
        %v5947 = vadd.f32 %v5658, %v5946
        %v5948 = vpop.f32.mrb[0].mxu0
        %v5949 = vpop.f32.mrb[0].mxu0
        %v5950 = vadd.f32 %v5661, %v5949
        %v5951 = vpop.f32.mrb[0].mxu0
        %5952 = vmatprep.mubr.bf16.mxu0 %v3518
        %5953 = vmatmul.mubr.bf16.gmra.mrb[0].mxu0 %v3517
        %v5954 = vpop.f32.mrb[0].mxu0
        %v5955 = vadd.f32 %v5666, %v5954
        %v5956 = vpop.f32.mrb[0].mxu0
        %v5957 = vpop.f32.mrb[0].mxu0
        %v5958 = vadd.f32 %v5669, %v5957
        %v5959 = vpop.f32.mrb[0].mxu0
        %5960 = vmatprep.mubr.bf16.mxu0 %v3534
        %5961 = vmatmul.mubr.bf16.gmra.mrb[0].mxu0 %v3533
        %v5962 = vpop.f32.mrb[0].mxu0
        %v5963 = vadd.f32 %v5674, %v5962
        %v5964 = vpop.f32.mrb[0].mxu0
        %v5965 = vpop.f32.mrb[0].mxu0
        %v5966 = vadd.f32 %v5677, %v5965
        %v5967 = vpop.f32.mrb[0].mxu0
        %5968 = vmatprep.mubr.bf16.mxu0 %v3550
        %5969 = vmatmul.mubr.bf16.gmra.mrb[0].mxu0 %v3549
        %v5970 = vpop.f32.mrb[0].mxu0
        %v5971 = vadd.f32 %v5682, %v5970
        %v5972 = vpop.f32.mrb[0].mxu0
        %v5973 = vpop.f32.mrb[0].mxu0
        %v5974 = vadd.f32 %v5685, %v5973
        %v5975 = vpop.f32.mrb[0].mxu0
        %5976 = vmatprep.mubr.bf16.mxu0 %v3566
        %5977 = vmatmul.mubr.bf16.gmra.mrb[0].mxu0 %v3565
        %v5978 = vpop.f32.mrb[0].mxu0
        %v5979 = vadd.f32 %v5690, %v5978
        %v5980 = vpop.f32.mrb[0].mxu0
        %v5981 = vpop.f32.mrb[0].mxu0
        %v5982 = vadd.f32 %v5693, %v5981
        %v5983 = vpop.f32.mrb[0].mxu0
        %5984 = vmatprep.mubr.bf16.mxu0 %v3582
        %5985 = vmatmul.mubr.bf16.gmra.mrb[0].mxu0 %v3581
        %v5986 = vpop.f32.mrb[0].mxu0
        %v5987 = vadd.f32 %v5698, %v5986
        %v5988 = vpop.f32.mrb[0].mxu0
        %v5989 = vpop.f32.mrb[0].mxu0
        %v5990 = vadd.f32 %v5701, %v5989
        %v5991 = vpop.f32.mrb[0].mxu0
        %5992 = vmatprep.mubr.bf16.mxu0 %v3598
        %5993 = vmatmul.mubr.bf16.gmra.mrb[0].mxu0 %v3597
        %v5994 = vpop.f32.mrb[0].mxu0
        %v5995 = vadd.f32 %v5706, %v5994
        %v5996 = vpop.f32.mrb[0].mxu0
        %v5997 = vpop.f32.mrb[0].mxu0
        %v5998 = vadd.f32 %v5709, %v5997
        %v5999 = vpop.f32.mrb[0].mxu0
        %6000 = vmatprep.mubr.bf16.mxu0 %v3614
        %6001 = vmatmul.mubr.bf16.gmra.mrb[0].mxu0 %v3613
        %v6002 = vpop.f32.mrb[0].mxu0
        %v6003 = vadd.f32 %v5714, %v6002
        %v6004 = vpop.f32.mrb[0].mxu0
        %v6005 = vpop.f32.mrb[0].mxu0
        %v6006 = vadd.f32 %v5717, %v6005
        %v6007 = vpop.f32.mrb[0].mxu0
        %6008 = vmatprep.mubr.bf16.mxu0 %v3630
        %6009 = vmatmul.mubr.bf16.gmra.mrb[0].mxu0 %v3629
        %v6010 = vpop.f32.mrb[0].mxu0
        %v6011 = vadd.f32 %v5722, %v6010
        %v6012 = vpop.f32.mrb[0].mxu0
        %v6013 = vpop.f32.mrb[0].mxu0
        %v6014 = vadd.f32 %v5725, %v6013
        %v6015 = vpop.f32.mrb[0].mxu0
        %6016 = vmatprep.mubr.bf16.mxu0 %v3646
        %6017 = vmatmul.mubr.bf16.gmra.mrb[0].mxu0 %v3645
        %v6018 = vpop.f32.mrb[0].mxu0
        %v6019 = vadd.f32 %v5730, %v6018
        %v6020 = vpop.f32.mrb[0].mxu0
        %v6021 = vpop.f32.mrb[0].mxu0
        %v6022 = vadd.f32 %v5733, %v6021
        %v6023 = vpop.f32.mrb[0].mxu0
        %6024 = vmatprep.mubr.bf16.mxu0 %v3662
        %6025 = vmatmul.mubr.bf16.gmra.mrb[0].mxu0 %v3661
        %v6026 = vpop.f32.mrb[0].mxu0
        %v6027 = vadd.f32 %v5738, %v6026
        %v6028 = vpop.f32.mrb[0].mxu0
        %v6029 = vpop.f32.mrb[0].mxu0
        %v6030 = vadd.f32 %v5741, %v6029
        %v6031 = vpop.f32.mrb[0].mxu0
        %6032 = vmatprep.mubr.bf16.mxu0 %v3678
        %6033 = vmatmul.mubr.bf16.gmra.mrb[0].mxu0 %v3677
        %v6034 = vpop.f32.mrb[0].mxu0
        %v6035 = vadd.f32 %v5746, %v6034
        %v6036 = vpop.f32.mrb[0].mxu0
        %v6037 = vpop.f32.mrb[0].mxu0
        %v6038 = vadd.f32 %v5749, %v6037
        %v6039 = vpop.f32.mrb[0].mxu0
        %6040 = vmatprep.mubr.bf16.mxu0 %v3694
        %6041 = vmatmul.mubr.bf16.gmra.mrb[0].mxu0 %v3693
        %v6042 = vpop.f32.mrb[0].mxu0
        %v6043 = vadd.f32 %v5754, %v6042
        %v6044 = vpop.f32.mrb[0].mxu0
        %v6045 = vpop.f32.mrb[0].mxu0
        %v6046 = vadd.f32 %v5757, %v6045
        %v6047 = vpop.f32.mrb[0].mxu0
        %6048 = vmatprep.mubr.bf16.mxu0 %v3710
        %6049 = vmatmul.mubr.bf16.gmra.mrb[0].mxu0 %v3709
        %v6050 = vpop.f32.mrb[0].mxu0
        %v6051 = vadd.f32 %v5762, %v6050
        %v6052 = vpop.f32.mrb[0].mxu0
        %v6053 = vpop.f32.mrb[0].mxu0
        %v6054 = vadd.f32 %v5765, %v6053
        %v6055 = vpop.f32.mrb[0].mxu0
        %6056 = vmatprep.mubr.bf16.mxu0 %v3726
        %6057 = vmatmul.mubr.bf16.gmra.mrb[0].mxu0 %v3725
        %v6058 = vpop.f32.mrb[0].mxu0
        %v6059 = vadd.f32 %v5770, %v6058
        %v6060 = vpop.f32.mrb[0].mxu0
        %v6061 = vpop.f32.mrb[0].mxu0
        %v6062 = vadd.f32 %v5773, %v6061
        %v6063 = vpop.f32.mrb[0].mxu0
        %6064 = vmatprep.mubr.bf16.mxu0 %v3742
        %6065 = vmatmul.mubr.bf16.gmra.mrb[0].mxu0 %v3741
        %v6066 = vpop.f32.mrb[0].mxu0
        %v6067 = vadd.f32 %v5778, %v6066
        %v6068 = vpop.f32.mrb[0].mxu0
        %v6069 = vpop.f32.mrb[0].mxu0
        %v6070 = vadd.f32 %v5781, %v6069
        %v6071 = vpop.f32.mrb[0].mxu0
        %6072 = vmatprep.mubr.bf16.mxu0 %v3758
        %6073 = vmatmul.mubr.bf16.gmra.mrb[0].mxu0 %v3757
        %v6074 = vpop.f32.mrb[0].mxu0
        %v6075 = vadd.f32 %v5786, %v6074
        %v6076 = vpop.f32.mrb[0].mxu0
        %v6077 = vpop.f32.mrb[0].mxu0
        %v6078 = vadd.f32 %v5789, %v6077
        %v6079 = vpop.f32.mrb[0].mxu0
        %6080 = vmatprep.mubr.bf16.mxu0 %v3774
        %6081 = vmatmul.mubr.bf16.gmra.mrb[0].mxu0 %v3773
        %v6082 = vpop.f32.mrb[0].mxu0
        %v6083 = vadd.f32 %v5794, %v6082
        %v6084 = vpop.f32.mrb[0].mxu0
        %v6085 = vpop.f32.mrb[0].mxu0
        %v6086 = vadd.f32 %v5797, %v6085
        %v6087 = vpop.f32.mrb[0].mxu0
        %6088 = vmatprep.mubr.bf16.mxu0 %v3790
        %6089 = vmatmul.mubr.bf16.gmra.mrb[0].mxu0 %v3789
        %v6090 = vpop.f32.mrb[0].mxu0
        %v6091 = vadd.f32 %v5802, %v6090
        %v6092 = vpop.f32.mrb[0].mxu0
        %v6093 = vpop.f32.mrb[0].mxu0
        %v6094 = vadd.f32 %v5805, %v6093
        %v6095 = vpop.f32.mrb[0].mxu0
        %6096 = vmatprep.mubr.bf16.mxu0 %v3806
        %6097 = vmatmul.mubr.bf16.gmra.mrb[0].mxu0 %v3805
        %v6098 = vpop.f32.mrb[0].mxu0
        %v6099 = vadd.f32 %v5810, %v6098
        %v6100 = vpop.f32.mrb[0].mxu0
        %v6101 = vpop.f32.mrb[0].mxu0
        %v6102 = vadd.f32 %v5813, %v6101
        %v6103 = vpop.f32.mrb[0].mxu0
        %6104 = vmatprep.mubr.bf16.mxu0 %v3822
        %6105 = vmatmul.mubr.bf16.gmra.mrb[0].mxu0 %v3821
        %v6106 = vpop.f32.mrb[0].mxu0
        %v6107 = vadd.f32 %v5818, %v6106
        %v6108 = vpop.f32.mrb[0].mxu0
        %v6109 = vpop.f32.mrb[0].mxu0
        %v6110 = vadd.f32 %v5821, %v6109
        %v6111 = vpop.f32.mrb[0].mxu0
        %6112 = vmatprep.mubr.bf16.mxu0 %v3838
        %6113 = vmatmul.mubr.bf16.gmra.mrb[0].mxu0 %v3837
        %v6114 = vpop.f32.mrb[0].mxu0
        %v6115 = vadd.f32 %v5826, %v6114
        %v6116 = vpop.f32.mrb[0].mxu0
        %v6117 = vpop.f32.mrb[0].mxu0
        %v6118 = vadd.f32 %v5829, %v6117
        %v6119 = vpop.f32.mrb[0].mxu0
        %6120 = vmatprep.mubr.bf16.mxu0 %v3854
        %6121 = vmatmul.mubr.bf16.gmra.mrb[0].mxu0 %v3853
        %v6122 = vpop.f32.mrb[0].mxu0
        %v6123 = vadd.f32 %v5834, %v6122
        %v6124 = vpop.f32.mrb[0].mxu0
        %v6125 = vpop.f32.mrb[0].mxu0
        %v6126 = vadd.f32 %v5837, %v6125
        %v6127 = vpop.f32.mrb[0].mxu0
        %6128 = vmatprep.mubr.bf16.mxu0 %v3870
        %6129 = vmatmul.mubr.bf16.gmra.mrb[0].mxu0 %v3869
        %v6130 = vpop.f32.mrb[0].mxu0
        %v6131 = vadd.f32 %v5842, %v6130
        %v6132 = vpop.f32.mrb[0].mxu0
        %v6133 = vpop.f32.mrb[0].mxu0
        %v6134 = vadd.f32 %v5845, %v6133
        %v6135 = vpop.f32.mrb[0].mxu0
        %6136 = vmatprep.mubr.bf16.mxu0 %v3886
        %6137 = vmatmul.mubr.bf16.gmra.mrb[0].mxu0 %v3885
        %v6138 = vpop.f32.mrb[0].mxu0
        %v6139 = vadd.f32 %v5850, %v6138
        %v6140 = vpop.f32.mrb[0].mxu0
        %v6141 = vpop.f32.mrb[0].mxu0
        %v6142 = vadd.f32 %v5853, %v6141
        %v6143 = vpop.f32.mrb[0].mxu0
        %6144 = vmatprep.mubr.bf16.mxu0 %v3902
        %6145 = vmatmul.mubr.bf16.gmra.mrb[0].mxu0 %v3901
        %v6146 = vpop.f32.mrb[0].mxu0
        %v6147 = vadd.f32 %v5858, %v6146
        %v6148 = vpop.f32.mrb[0].mxu0
        %v6149 = vpop.f32.mrb[0].mxu0
        %v6150 = vadd.f32 %v5861, %v6149
        %v6151 = vpop.f32.mrb[0].mxu0
        %6152 = vdwg.mxu0
        %6153 = vmatprep.subr.bf16.mxu0 0
        %6154 = vmatpush1.bf16.msra.mxu0 %v1315
        %6155 = vmatprep.subr.bf16.mxu0 0
        %6156 = vmatpush1.bf16.msra.mxu0 %v1316
        %6157 = vmatprep.subr.bf16.mxu0 0
        %6158 = vmatpush1.bf16.msra.mxu0 %v1317
        %6159 = vmatprep.subr.bf16.mxu0 0
        %6160 = vmatpush1.bf16.msra.mxu0 %v1318
        %6161 = vmatprep.subr.bf16.mxu0 0
        %6162 = vmatpush1.bf16.msra.mxu0 %v1319
        %6163 = vmatprep.subr.bf16.mxu0 0
        %6164 = vmatpush1.bf16.msra.mxu0 %v1320
        %6165 = vmatprep.subr.bf16.mxu0 0
        %6166 = vmatpush1.bf16.msra.mxu0 %v1321
        %6167 = vmatprep.subr.bf16.mxu0 0
        %6168 = vmatpush1.bf16.msra.mxu0 %v1322
        %6169 = vmatprep.subr.bf16.mxu0 0
        %6170 = vmatpush1.bf16.msra.mxu0 %v1323
        %6171 = vmatprep.subr.bf16.mxu0 0
        %6172 = vmatpush1.bf16.msra.mxu0 %v1324
        %6173 = vmatprep.subr.bf16.mxu0 0
        %6174 = vmatpush1.bf16.msra.mxu0 %v1325
        %6175 = vmatprep.subr.bf16.mxu0 0
        %6176 = vmatpush1.bf16.msra.mxu0 %v1326
        %6177 = vmatprep.subr.bf16.mxu0 0
        %6178 = vmatpush1.bf16.msra.mxu0 %v1327
        %6179 = vmatprep.subr.bf16.mxu0 0
        %6180 = vmatpush1.bf16.msra.mxu0 %v1328
        %6181 = vmatprep.subr.bf16.mxu0 0
        %6182 = vmatpush1.bf16.msra.mxu0 %v1329
        %6183 = vmatprep.subr.bf16.mxu0 0
        %6184 = vmatpush1.bf16.msra.mxu0 %v1330
        %6185 = vmatprep.mubr.bf16.mxu0 %v3408
        %6186 = vmatmul.mubr.bf16.gmra.mrb[0].mxu0 %v3407
        %v6187 = vpop.f32.mrb[0].mxu0
        %v6188 = vadd.f32 %v5899, %v6187
        %v6189 = vpop.f32.mrb[0].mxu0
        %v6190 = vpop.f32.mrb[0].mxu0
        %v6191 = vadd.f32 %v5902, %v6190
        %v6192 = vpop.f32.mrb[0].mxu0
        %6193 = vmatprep.mubr.bf16.mxu0 %v3424
        %6194 = vmatmul.mubr.bf16.gmra.mrb[0].mxu0 %v3423
        %v6195 = vpop.f32.mrb[0].mxu0
        %v6196 = vadd.f32 %v5907, %v6195
        %v6197 = vpop.f32.mrb[0].mxu0
        %v6198 = vpop.f32.mrb[0].mxu0
        %v6199 = vadd.f32 %v5910, %v6198
        %v6200 = vpop.f32.mrb[0].mxu0
        %6201 = vmatprep.mubr.bf16.mxu0 %v3440
        %6202 = vmatmul.mubr.bf16.gmra.mrb[0].mxu0 %v3439
        %v6203 = vpop.f32.mrb[0].mxu0
        %v6204 = vadd.f32 %v5915, %v6203
        %v6205 = vpop.f32.mrb[0].mxu0
        %v6206 = vpop.f32.mrb[0].mxu0
        %v6207 = vadd.f32 %v5918, %v6206
        %v6208 = vpop.f32.mrb[0].mxu0
        %6209 = vmatprep.mubr.bf16.mxu0 %v3456
        %6210 = vmatmul.mubr.bf16.gmra.mrb[0].mxu0 %v3455
        %v6211 = vpop.f32.mrb[0].mxu0
        %v6212 = vadd.f32 %v5923, %v6211
        %v6213 = vpop.f32.mrb[0].mxu0
        %v6214 = vpop.f32.mrb[0].mxu0
        %v6215 = vadd.f32 %v5926, %v6214
        %v6216 = vpop.f32.mrb[0].mxu0
        %6217 = vmatprep.mubr.bf16.mxu0 %v3472
        %6218 = vmatmul.mubr.bf16.gmra.mrb[0].mxu0 %v3471
        %v6219 = vpop.f32.mrb[0].mxu0
        %v6220 = vadd.f32 %v5931, %v6219
        %v6221 = vpop.f32.mrb[0].mxu0
        %v6222 = vpop.f32.mrb[0].mxu0
        %v6223 = vadd.f32 %v5934, %v6222
        %v6224 = vpop.f32.mrb[0].mxu0
        %6225 = vmatprep.mubr.bf16.mxu0 %v3488
        %6226 = vmatmul.mubr.bf16.gmra.mrb[0].mxu0 %v3487
        %v6227 = vpop.f32.mrb[0].mxu0
        %v6228 = vadd.f32 %v5939, %v6227
        %v6229 = vpop.f32.mrb[0].mxu0
        %v6230 = vpop.f32.mrb[0].mxu0
        %v6231 = vadd.f32 %v5942, %v6230
        %v6232 = vpop.f32.mrb[0].mxu0
        %6233 = vmatprep.mubr.bf16.mxu0 %v3504
        %6234 = vmatmul.mubr.bf16.gmra.mrb[0].mxu0 %v3503
        %v6235 = vpop.f32.mrb[0].mxu0
        %v6236 = vadd.f32 %v5947, %v6235
        %v6237 = vpop.f32.mrb[0].mxu0
        %v6238 = vpop.f32.mrb[0].mxu0
        %v6239 = vadd.f32 %v5950, %v6238
        %v6240 = vpop.f32.mrb[0].mxu0
        %6241 = vmatprep.mubr.bf16.mxu0 %v3520
        %6242 = vmatmul.mubr.bf16.gmra.mrb[0].mxu0 %v3519
        %v6243 = vpop.f32.mrb[0].mxu0
        %v6244 = vadd.f32 %v5955, %v6243
        %v6245 = vpop.f32.mrb[0].mxu0
        %v6246 = vpop.f32.mrb[0].mxu0
        %v6247 = vadd.f32 %v5958, %v6246
        %v6248 = vpop.f32.mrb[0].mxu0
        %6249 = vmatprep.mubr.bf16.mxu0 %v3536
        %6250 = vmatmul.mubr.bf16.gmra.mrb[0].mxu0 %v3535
        %v6251 = vpop.f32.mrb[0].mxu0
        %v6252 = vadd.f32 %v5963, %v6251
        %v6253 = vpop.f32.mrb[0].mxu0
        %v6254 = vpop.f32.mrb[0].mxu0
        %v6255 = vadd.f32 %v5966, %v6254
        %v6256 = vpop.f32.mrb[0].mxu0
        %6257 = vmatprep.mubr.bf16.mxu0 %v3552
        %6258 = vmatmul.mubr.bf16.gmra.mrb[0].mxu0 %v3551
        %v6259 = vpop.f32.mrb[0].mxu0
        %v6260 = vadd.f32 %v5971, %v6259
        %v6261 = vpop.f32.mrb[0].mxu0
        %v6262 = vpop.f32.mrb[0].mxu0
        %v6263 = vadd.f32 %v5974, %v6262
        %v6264 = vpop.f32.mrb[0].mxu0
        %6265 = vmatprep.mubr.bf16.mxu0 %v3568
        %6266 = vmatmul.mubr.bf16.gmra.mrb[0].mxu0 %v3567
        %v6267 = vpop.f32.mrb[0].mxu0
        %v6268 = vadd.f32 %v5979, %v6267
        %v6269 = vpop.f32.mrb[0].mxu0
        %v6270 = vpop.f32.mrb[0].mxu0
        %v6271 = vadd.f32 %v5982, %v6270
        %v6272 = vpop.f32.mrb[0].mxu0
        %6273 = vmatprep.mubr.bf16.mxu0 %v3584
        %6274 = vmatmul.mubr.bf16.gmra.mrb[0].mxu0 %v3583
        %v6275 = vpop.f32.mrb[0].mxu0
        %v6276 = vadd.f32 %v5987, %v6275
        %v6277 = vpop.f32.mrb[0].mxu0
        %v6278 = vpop.f32.mrb[0].mxu0
        %v6279 = vadd.f32 %v5990, %v6278
        %v6280 = vpop.f32.mrb[0].mxu0
        %6281 = vmatprep.mubr.bf16.mxu0 %v3600
        %6282 = vmatmul.mubr.bf16.gmra.mrb[0].mxu0 %v3599
        %v6283 = vpop.f32.mrb[0].mxu0
        %v6284 = vadd.f32 %v5995, %v6283
        %v6285 = vpop.f32.mrb[0].mxu0
        %v6286 = vpop.f32.mrb[0].mxu0
        %v6287 = vadd.f32 %v5998, %v6286
        %v6288 = vpop.f32.mrb[0].mxu0
        %6289 = vmatprep.mubr.bf16.mxu0 %v3616
        %6290 = vmatmul.mubr.bf16.gmra.mrb[0].mxu0 %v3615
        %v6291 = vpop.f32.mrb[0].mxu0
        %v6292 = vadd.f32 %v6003, %v6291
        %v6293 = vpop.f32.mrb[0].mxu0
        %v6294 = vpop.f32.mrb[0].mxu0
        %v6295 = vadd.f32 %v6006, %v6294
        %v6296 = vpop.f32.mrb[0].mxu0
        %6297 = vmatprep.mubr.bf16.mxu0 %v3632
        %6298 = vmatmul.mubr.bf16.gmra.mrb[0].mxu0 %v3631
        %v6299 = vpop.f32.mrb[0].mxu0
        %v6300 = vadd.f32 %v6011, %v6299
        %v6301 = vpop.f32.mrb[0].mxu0
        %v6302 = vpop.f32.mrb[0].mxu0
        %v6303 = vadd.f32 %v6014, %v6302
        %v6304 = vpop.f32.mrb[0].mxu0
        %6305 = vmatprep.mubr.bf16.mxu0 %v3648
        %6306 = vmatmul.mubr.bf16.gmra.mrb[0].mxu0 %v3647
        %v6307 = vpop.f32.mrb[0].mxu0
        %v6308 = vadd.f32 %v6019, %v6307
        %v6309 = vpop.f32.mrb[0].mxu0
        %v6310 = vpop.f32.mrb[0].mxu0
        %v6311 = vadd.f32 %v6022, %v6310
        %v6312 = vpop.f32.mrb[0].mxu0
        %6313 = vmatprep.mubr.bf16.mxu0 %v3664
        %6314 = vmatmul.mubr.bf16.gmra.mrb[0].mxu0 %v3663
        %v6315 = vpop.f32.mrb[0].mxu0
        %v6316 = vadd.f32 %v6027, %v6315
        %v6317 = vpop.f32.mrb[0].mxu0
        %v6318 = vpop.f32.mrb[0].mxu0
        %v6319 = vadd.f32 %v6030, %v6318
        %v6320 = vpop.f32.mrb[0].mxu0
        %6321 = vmatprep.mubr.bf16.mxu0 %v3680
        %6322 = vmatmul.mubr.bf16.gmra.mrb[0].mxu0 %v3679
        %v6323 = vpop.f32.mrb[0].mxu0
        %v6324 = vadd.f32 %v6035, %v6323
        %v6325 = vpop.f32.mrb[0].mxu0
        %v6326 = vpop.f32.mrb[0].mxu0
        %v6327 = vadd.f32 %v6038, %v6326
        %v6328 = vpop.f32.mrb[0].mxu0
        %6329 = vmatprep.mubr.bf16.mxu0 %v3696
        %6330 = vmatmul.mubr.bf16.gmra.mrb[0].mxu0 %v3695
        %v6331 = vpop.f32.mrb[0].mxu0
        %v6332 = vadd.f32 %v6043, %v6331
        %v6333 = vpop.f32.mrb[0].mxu0
        %v6334 = vpop.f32.mrb[0].mxu0
        %v6335 = vadd.f32 %v6046, %v6334
        %v6336 = vpop.f32.mrb[0].mxu0
        %6337 = vmatprep.mubr.bf16.mxu0 %v3712
        %6338 = vmatmul.mubr.bf16.gmra.mrb[0].mxu0 %v3711
        %v6339 = vpop.f32.mrb[0].mxu0
        %v6340 = vadd.f32 %v6051, %v6339
        %v6341 = vpop.f32.mrb[0].mxu0
        %v6342 = vpop.f32.mrb[0].mxu0
        %v6343 = vadd.f32 %v6054, %v6342
        %v6344 = vpop.f32.mrb[0].mxu0
        %6345 = vmatprep.mubr.bf16.mxu0 %v3728
        %6346 = vmatmul.mubr.bf16.gmra.mrb[0].mxu0 %v3727
        %v6347 = vpop.f32.mrb[0].mxu0
        %v6348 = vadd.f32 %v6059, %v6347
        %v6349 = vpop.f32.mrb[0].mxu0
        %v6350 = vpop.f32.mrb[0].mxu0
        %v6351 = vadd.f32 %v6062, %v6350
        %v6352 = vpop.f32.mrb[0].mxu0
        %6353 = vmatprep.mubr.bf16.mxu0 %v3744
        %6354 = vmatmul.mubr.bf16.gmra.mrb[0].mxu0 %v3743
        %v6355 = vpop.f32.mrb[0].mxu0
        %v6356 = vadd.f32 %v6067, %v6355
        %v6357 = vpop.f32.mrb[0].mxu0
        %v6358 = vpop.f32.mrb[0].mxu0
        %v6359 = vadd.f32 %v6070, %v6358
        %v6360 = vpop.f32.mrb[0].mxu0
        %6361 = vmatprep.mubr.bf16.mxu0 %v3760
        %6362 = vmatmul.mubr.bf16.gmra.mrb[0].mxu0 %v3759
        %v6363 = vpop.f32.mrb[0].mxu0
        %v6364 = vadd.f32 %v6075, %v6363
        %v6365 = vpop.f32.mrb[0].mxu0
        %v6366 = vpop.f32.mrb[0].mxu0
        %v6367 = vadd.f32 %v6078, %v6366
        %v6368 = vpop.f32.mrb[0].mxu0
        %6369 = vmatprep.mubr.bf16.mxu0 %v3776
        %6370 = vmatmul.mubr.bf16.gmra.mrb[0].mxu0 %v3775
        %v6371 = vpop.f32.mrb[0].mxu0
        %v6372 = vadd.f32 %v6083, %v6371
        %v6373 = vpop.f32.mrb[0].mxu0
        %v6374 = vpop.f32.mrb[0].mxu0
        %v6375 = vadd.f32 %v6086, %v6374
        %v6376 = vpop.f32.mrb[0].mxu0
        %6377 = vmatprep.mubr.bf16.mxu0 %v3792
        %6378 = vmatmul.mubr.bf16.gmra.mrb[0].mxu0 %v3791
        %v6379 = vpop.f32.mrb[0].mxu0
        %v6380 = vadd.f32 %v6091, %v6379
        %v6381 = vpop.f32.mrb[0].mxu0
        %v6382 = vpop.f32.mrb[0].mxu0
        %v6383 = vadd.f32 %v6094, %v6382
        %v6384 = vpop.f32.mrb[0].mxu0
        %6385 = vmatprep.mubr.bf16.mxu0 %v3808
        %6386 = vmatmul.mubr.bf16.gmra.mrb[0].mxu0 %v3807
        %v6387 = vpop.f32.mrb[0].mxu0
        %v6388 = vadd.f32 %v6099, %v6387
        %v6389 = vpop.f32.mrb[0].mxu0
        %v6390 = vpop.f32.mrb[0].mxu0
        %v6391 = vadd.f32 %v6102, %v6390
        %v6392 = vpop.f32.mrb[0].mxu0
        %6393 = vmatprep.mubr.bf16.mxu0 %v3824
        %6394 = vmatmul.mubr.bf16.gmra.mrb[0].mxu0 %v3823
        %v6395 = vpop.f32.mrb[0].mxu0
        %v6396 = vadd.f32 %v6107, %v6395
        %v6397 = vpop.f32.mrb[0].mxu0
        %v6398 = vpop.f32.mrb[0].mxu0
        %v6399 = vadd.f32 %v6110, %v6398
        %v6400 = vpop.f32.mrb[0].mxu0
        %6401 = vmatprep.mubr.bf16.mxu0 %v3840
        %6402 = vmatmul.mubr.bf16.gmra.mrb[0].mxu0 %v3839
        %v6403 = vpop.f32.mrb[0].mxu0
        %v6404 = vadd.f32 %v6115, %v6403
        %v6405 = vpop.f32.mrb[0].mxu0
        %v6406 = vpop.f32.mrb[0].mxu0
        %v6407 = vadd.f32 %v6118, %v6406
        %v6408 = vpop.f32.mrb[0].mxu0
        %6409 = vmatprep.mubr.bf16.mxu0 %v3856
        %6410 = vmatmul.mubr.bf16.gmra.mrb[0].mxu0 %v3855
        %v6411 = vpop.f32.mrb[0].mxu0
        %v6412 = vadd.f32 %v6123, %v6411
        %v6413 = vpop.f32.mrb[0].mxu0
        %v6414 = vpop.f32.mrb[0].mxu0
        %v6415 = vadd.f32 %v6126, %v6414
        %v6416 = vpop.f32.mrb[0].mxu0
        %6417 = vmatprep.mubr.bf16.mxu0 %v3872
        %6418 = vmatmul.mubr.bf16.gmra.mrb[0].mxu0 %v3871
        %v6419 = vpop.f32.mrb[0].mxu0
        %v6420 = vadd.f32 %v6131, %v6419
        %v6421 = vpop.f32.mrb[0].mxu0
        %v6422 = vpop.f32.mrb[0].mxu0
        %v6423 = vadd.f32 %v6134, %v6422
        %v6424 = vpop.f32.mrb[0].mxu0
        %6425 = vmatprep.mubr.bf16.mxu0 %v3888
        %6426 = vmatmul.mubr.bf16.gmra.mrb[0].mxu0 %v3887
        %v6427 = vpop.f32.mrb[0].mxu0
        %v6428 = vadd.f32 %v6139, %v6427
        %v6429 = vpop.f32.mrb[0].mxu0
        %v6430 = vpop.f32.mrb[0].mxu0
        %v6431 = vadd.f32 %v6142, %v6430
        %v6432 = vpop.f32.mrb[0].mxu0
        %6433 = vmatprep.mubr.bf16.mxu0 %v3904
        %6434 = vmatmul.mubr.bf16.gmra.mrb[0].mxu0 %v3903
        %v6435 = vpop.f32.mrb[0].mxu0
        %v6436 = vadd.f32 %v6147, %v6435
        %v6437 = vpop.f32.mrb[0].mxu0
        %v6438 = vpop.f32.mrb[0].mxu0
        %v6439 = vadd.f32 %v6150, %v6438
        %v6440 = vpop.f32.mrb[0].mxu0
        %6441 = vdwg.mxu0
        %6442 = vmatprep.subr.bf16.mxu0 0
        %6443 = vmatpush1.bf16.msra.mxu0 %v1331
        %6444 = vmatprep.subr.bf16.mxu0 0
        %6445 = vmatpush1.bf16.msra.mxu0 %v1332
        %6446 = vmatprep.subr.bf16.mxu0 0
        %6447 = vmatpush1.bf16.msra.mxu0 %v1333
        %6448 = vmatprep.subr.bf16.mxu0 0
        %6449 = vmatpush1.bf16.msra.mxu0 %v1334
        %6450 = vmatprep.subr.bf16.mxu0 0
        %6451 = vmatpush1.bf16.msra.mxu0 %v1335
        %6452 = vmatprep.subr.bf16.mxu0 0
        %6453 = vmatpush1.bf16.msra.mxu0 %v1336
        %6454 = vmatprep.subr.bf16.mxu0 0
        %6455 = vmatpush1.bf16.msra.mxu0 %v1337
        %6456 = vmatprep.subr.bf16.mxu0 0
        %6457 = vmatpush1.bf16.msra.mxu0 %v1338
        %6458 = vmatprep.subr.bf16.mxu0 0
        %6459 = vmatpush1.bf16.msra.mxu0 %v1339
        %6460 = vmatprep.subr.bf16.mxu0 0
        %6461 = vmatpush1.bf16.msra.mxu0 %v1340
        %6462 = vmatprep.subr.bf16.mxu0 0
        %6463 = vmatpush1.bf16.msra.mxu0 %v1341
        %6464 = vmatprep.subr.bf16.mxu0 0
        %6465 = vmatpush1.bf16.msra.mxu0 %v1342
        %6466 = vmatprep.subr.bf16.mxu0 0
        %6467 = vmatpush1.bf16.msra.mxu0 %v1343
        %6468 = vmatprep.subr.bf16.mxu0 0
        %6469 = vmatpush1.bf16.msra.mxu0 %v1344
        %6470 = vmatprep.subr.bf16.mxu0 0
        %6471 = vmatpush1.bf16.msra.mxu0 %v1345
        %6472 = vmatprep.subr.bf16.mxu0 0
        %6473 = vmatpush1.bf16.msra.mxu0 %v1346
        %6474 = vmatprep.mubr.bf16.mxu0 %v3410
        %6475 = vmatmul.mubr.bf16.gmra.mrb[0].mxu0 %v3409
        %v6476 = vpop.f32.mrb[0].mxu0
        %v6477 = vadd.f32 %v6188, %v6476
        %v6478 = vpop.f32.mrb[0].mxu0
        %v6479 = vpop.f32.mrb[0].mxu0
        %v6480 = vadd.f32 %v6191, %v6479
        %v6481 = vpop.f32.mrb[0].mxu0
        %6482 = vmatprep.mubr.bf16.mxu0 %v3426
        %6483 = vmatmul.mubr.bf16.gmra.mrb[0].mxu0 %v3425
        %v6484 = vpop.f32.mrb[0].mxu0
        %v6485 = vadd.f32 %v6196, %v6484
        %v6486 = vpop.f32.mrb[0].mxu0
        %v6487 = vpop.f32.mrb[0].mxu0
        %v6488 = vadd.f32 %v6199, %v6487
        %v6489 = vpop.f32.mrb[0].mxu0
        %6490 = vmatprep.mubr.bf16.mxu0 %v3442
        %6491 = vmatmul.mubr.bf16.gmra.mrb[0].mxu0 %v3441
        %v6492 = vpop.f32.mrb[0].mxu0
        %v6493 = vadd.f32 %v6204, %v6492
        %v6494 = vpop.f32.mrb[0].mxu0
        %v6495 = vpop.f32.mrb[0].mxu0
        %v6496 = vadd.f32 %v6207, %v6495
        %v6497 = vpop.f32.mrb[0].mxu0
        %6498 = vmatprep.mubr.bf16.mxu0 %v3458
        %6499 = vmatmul.mubr.bf16.gmra.mrb[0].mxu0 %v3457
        %v6500 = vpop.f32.mrb[0].mxu0
        %v6501 = vadd.f32 %v6212, %v6500
        %v6502 = vpop.f32.mrb[0].mxu0
        %v6503 = vpop.f32.mrb[0].mxu0
        %v6504 = vadd.f32 %v6215, %v6503
        %v6505 = vpop.f32.mrb[0].mxu0
        %6506 = vmatprep.mubr.bf16.mxu0 %v3474
        %6507 = vmatmul.mubr.bf16.gmra.mrb[0].mxu0 %v3473
        %v6508 = vpop.f32.mrb[0].mxu0
        %v6509 = vadd.f32 %v6220, %v6508
        %v6510 = vpop.f32.mrb[0].mxu0
        %v6511 = vpop.f32.mrb[0].mxu0
        %v6512 = vadd.f32 %v6223, %v6511
        %v6513 = vpop.f32.mrb[0].mxu0
        %6514 = vmatprep.mubr.bf16.mxu0 %v3490
        %6515 = vmatmul.mubr.bf16.gmra.mrb[0].mxu0 %v3489
        %v6516 = vpop.f32.mrb[0].mxu0
        %v6517 = vadd.f32 %v6228, %v6516
        %v6518 = vpop.f32.mrb[0].mxu0
        %v6519 = vpop.f32.mrb[0].mxu0
        %v6520 = vadd.f32 %v6231, %v6519
        %v6521 = vpop.f32.mrb[0].mxu0
        %6522 = vmatprep.mubr.bf16.mxu0 %v3506
        %6523 = vmatmul.mubr.bf16.gmra.mrb[0].mxu0 %v3505
        %v6524 = vpop.f32.mrb[0].mxu0
        %v6525 = vadd.f32 %v6236, %v6524
        %v6526 = vpop.f32.mrb[0].mxu0
        %v6527 = vpop.f32.mrb[0].mxu0
        %v6528 = vadd.f32 %v6239, %v6527
        %v6529 = vpop.f32.mrb[0].mxu0
        %6530 = vmatprep.mubr.bf16.mxu0 %v3522
        %6531 = vmatmul.mubr.bf16.gmra.mrb[0].mxu0 %v3521
        %v6532 = vpop.f32.mrb[0].mxu0
        %v6533 = vadd.f32 %v6244, %v6532
        %v6534 = vpop.f32.mrb[0].mxu0
        %v6535 = vpop.f32.mrb[0].mxu0
        %v6536 = vadd.f32 %v6247, %v6535
        %v6537 = vpop.f32.mrb[0].mxu0
        %6538 = vmatprep.mubr.bf16.mxu0 %v3538
        %6539 = vmatmul.mubr.bf16.gmra.mrb[0].mxu0 %v3537
        %v6540 = vpop.f32.mrb[0].mxu0
        %v6541 = vadd.f32 %v6252, %v6540
        %v6542 = vpop.f32.mrb[0].mxu0
        %v6543 = vpop.f32.mrb[0].mxu0
        %v6544 = vadd.f32 %v6255, %v6543
        %v6545 = vpop.f32.mrb[0].mxu0
        %6546 = vmatprep.mubr.bf16.mxu0 %v3554
        %6547 = vmatmul.mubr.bf16.gmra.mrb[0].mxu0 %v3553
        %v6548 = vpop.f32.mrb[0].mxu0
        %v6549 = vadd.f32 %v6260, %v6548
        %v6550 = vpop.f32.mrb[0].mxu0
        %v6551 = vpop.f32.mrb[0].mxu0
        %v6552 = vadd.f32 %v6263, %v6551
        %v6553 = vpop.f32.mrb[0].mxu0
        %6554 = vmatprep.mubr.bf16.mxu0 %v3570
        %6555 = vmatmul.mubr.bf16.gmra.mrb[0].mxu0 %v3569
        %v6556 = vpop.f32.mrb[0].mxu0
        %v6557 = vadd.f32 %v6268, %v6556
        %v6558 = vpop.f32.mrb[0].mxu0
        %v6559 = vpop.f32.mrb[0].mxu0
        %v6560 = vadd.f32 %v6271, %v6559
        %v6561 = vpop.f32.mrb[0].mxu0
        %6562 = vmatprep.mubr.bf16.mxu0 %v3586
        %6563 = vmatmul.mubr.bf16.gmra.mrb[0].mxu0 %v3585
        %v6564 = vpop.f32.mrb[0].mxu0
        %v6565 = vadd.f32 %v6276, %v6564
        %v6566 = vpop.f32.mrb[0].mxu0
        %v6567 = vpop.f32.mrb[0].mxu0
        %v6568 = vadd.f32 %v6279, %v6567
        %v6569 = vpop.f32.mrb[0].mxu0
        %6570 = vmatprep.mubr.bf16.mxu0 %v3602
        %6571 = vmatmul.mubr.bf16.gmra.mrb[0].mxu0 %v3601
        %v6572 = vpop.f32.mrb[0].mxu0
        %v6573 = vadd.f32 %v6284, %v6572
        %v6574 = vpop.f32.mrb[0].mxu0
        %v6575 = vpop.f32.mrb[0].mxu0
        %v6576 = vadd.f32 %v6287, %v6575
        %v6577 = vpop.f32.mrb[0].mxu0
        %6578 = vmatprep.mubr.bf16.mxu0 %v3618
        %6579 = vmatmul.mubr.bf16.gmra.mrb[0].mxu0 %v3617
        %v6580 = vpop.f32.mrb[0].mxu0
        %v6581 = vadd.f32 %v6292, %v6580
        %v6582 = vpop.f32.mrb[0].mxu0
        %v6583 = vpop.f32.mrb[0].mxu0
        %v6584 = vadd.f32 %v6295, %v6583
        %v6585 = vpop.f32.mrb[0].mxu0
        %6586 = vmatprep.mubr.bf16.mxu0 %v3634
        %6587 = vmatmul.mubr.bf16.gmra.mrb[0].mxu0 %v3633
        %v6588 = vpop.f32.mrb[0].mxu0
        %v6589 = vadd.f32 %v6300, %v6588
        %v6590 = vpop.f32.mrb[0].mxu0
        %v6591 = vpop.f32.mrb[0].mxu0
        %v6592 = vadd.f32 %v6303, %v6591
        %v6593 = vpop.f32.mrb[0].mxu0
        %6594 = vmatprep.mubr.bf16.mxu0 %v3650
        %6595 = vmatmul.mubr.bf16.gmra.mrb[0].mxu0 %v3649
        %v6596 = vpop.f32.mrb[0].mxu0
        %v6597 = vadd.f32 %v6308, %v6596
        %v6598 = vpop.f32.mrb[0].mxu0
        %v6599 = vpop.f32.mrb[0].mxu0
        %v6600 = vadd.f32 %v6311, %v6599
        %v6601 = vpop.f32.mrb[0].mxu0
        %6602 = vmatprep.mubr.bf16.mxu0 %v3666
        %6603 = vmatmul.mubr.bf16.gmra.mrb[0].mxu0 %v3665
        %v6604 = vpop.f32.mrb[0].mxu0
        %v6605 = vadd.f32 %v6316, %v6604
        %v6606 = vpop.f32.mrb[0].mxu0
        %v6607 = vpop.f32.mrb[0].mxu0
        %v6608 = vadd.f32 %v6319, %v6607
        %v6609 = vpop.f32.mrb[0].mxu0
        %6610 = vmatprep.mubr.bf16.mxu0 %v3682
        %6611 = vmatmul.mubr.bf16.gmra.mrb[0].mxu0 %v3681
        %v6612 = vpop.f32.mrb[0].mxu0
        %v6613 = vadd.f32 %v6324, %v6612
        %v6614 = vpop.f32.mrb[0].mxu0
        %v6615 = vpop.f32.mrb[0].mxu0
        %v6616 = vadd.f32 %v6327, %v6615
        %v6617 = vpop.f32.mrb[0].mxu0
        %6618 = vmatprep.mubr.bf16.mxu0 %v3698
        %6619 = vmatmul.mubr.bf16.gmra.mrb[0].mxu0 %v3697
        %v6620 = vpop.f32.mrb[0].mxu0
        %v6621 = vadd.f32 %v6332, %v6620
        %v6622 = vpop.f32.mrb[0].mxu0
        %v6623 = vpop.f32.mrb[0].mxu0
        %v6624 = vadd.f32 %v6335, %v6623
        %v6625 = vpop.f32.mrb[0].mxu0
        %6626 = vmatprep.mubr.bf16.mxu0 %v3714
        %6627 = vmatmul.mubr.bf16.gmra.mrb[0].mxu0 %v3713
        %v6628 = vpop.f32.mrb[0].mxu0
        %v6629 = vadd.f32 %v6340, %v6628
        %v6630 = vpop.f32.mrb[0].mxu0
        %v6631 = vpop.f32.mrb[0].mxu0
        %v6632 = vadd.f32 %v6343, %v6631
        %v6633 = vpop.f32.mrb[0].mxu0
        %6634 = vmatprep.mubr.bf16.mxu0 %v3730
        %6635 = vmatmul.mubr.bf16.gmra.mrb[0].mxu0 %v3729
        %v6636 = vpop.f32.mrb[0].mxu0
        %v6637 = vadd.f32 %v6348, %v6636
        %v6638 = vpop.f32.mrb[0].mxu0
        %v6639 = vpop.f32.mrb[0].mxu0
        %v6640 = vadd.f32 %v6351, %v6639
        %v6641 = vpop.f32.mrb[0].mxu0
        %6642 = vmatprep.mubr.bf16.mxu0 %v3746
        %6643 = vmatmul.mubr.bf16.gmra.mrb[0].mxu0 %v3745
        %v6644 = vpop.f32.mrb[0].mxu0
        %v6645 = vadd.f32 %v6356, %v6644
        %v6646 = vpop.f32.mrb[0].mxu0
        %v6647 = vpop.f32.mrb[0].mxu0
        %v6648 = vadd.f32 %v6359, %v6647
        %v6649 = vpop.f32.mrb[0].mxu0
        %6650 = vmatprep.mubr.bf16.mxu0 %v3762
        %6651 = vmatmul.mubr.bf16.gmra.mrb[0].mxu0 %v3761
        %v6652 = vpop.f32.mrb[0].mxu0
        %v6653 = vadd.f32 %v6364, %v6652
        %v6654 = vpop.f32.mrb[0].mxu0
        %v6655 = vpop.f32.mrb[0].mxu0
        %v6656 = vadd.f32 %v6367, %v6655
        %v6657 = vpop.f32.mrb[0].mxu0
        %6658 = vmatprep.mubr.bf16.mxu0 %v3778
        %6659 = vmatmul.mubr.bf16.gmra.mrb[0].mxu0 %v3777
        %v6660 = vpop.f32.mrb[0].mxu0
        %v6661 = vadd.f32 %v6372, %v6660
        %v6662 = vpop.f32.mrb[0].mxu0
        %v6663 = vpop.f32.mrb[0].mxu0
        %v6664 = vadd.f32 %v6375, %v6663
        %v6665 = vpop.f32.mrb[0].mxu0
        %6666 = vmatprep.mubr.bf16.mxu0 %v3794
        %6667 = vmatmul.mubr.bf16.gmra.mrb[0].mxu0 %v3793
        %v6668 = vpop.f32.mrb[0].mxu0
        %v6669 = vadd.f32 %v6380, %v6668
        %v6670 = vpop.f32.mrb[0].mxu0
        %v6671 = vpop.f32.mrb[0].mxu0
        %v6672 = vadd.f32 %v6383, %v6671
        %v6673 = vpop.f32.mrb[0].mxu0
        %6674 = vmatprep.mubr.bf16.mxu0 %v3810
        %6675 = vmatmul.mubr.bf16.gmra.mrb[0].mxu0 %v3809
        %v6676 = vpop.f32.mrb[0].mxu0
        %v6677 = vadd.f32 %v6388, %v6676
        %v6678 = vpop.f32.mrb[0].mxu0
        %v6679 = vpop.f32.mrb[0].mxu0
        %v6680 = vadd.f32 %v6391, %v6679
        %v6681 = vpop.f32.mrb[0].mxu0
        %6682 = vmatprep.mubr.bf16.mxu0 %v3826
        %6683 = vmatmul.mubr.bf16.gmra.mrb[0].mxu0 %v3825
        %v6684 = vpop.f32.mrb[0].mxu0
        %v6685 = vadd.f32 %v6396, %v6684
        %v6686 = vpop.f32.mrb[0].mxu0
        %v6687 = vpop.f32.mrb[0].mxu0
        %v6688 = vadd.f32 %v6399, %v6687
        %v6689 = vpop.f32.mrb[0].mxu0
        %6690 = vmatprep.mubr.bf16.mxu0 %v3842
        %6691 = vmatmul.mubr.bf16.gmra.mrb[0].mxu0 %v3841
        %v6692 = vpop.f32.mrb[0].mxu0
        %v6693 = vadd.f32 %v6404, %v6692
        %v6694 = vpop.f32.mrb[0].mxu0
        %v6695 = vpop.f32.mrb[0].mxu0
        %v6696 = vadd.f32 %v6407, %v6695
        %v6697 = vpop.f32.mrb[0].mxu0
        %6698 = vmatprep.mubr.bf16.mxu0 %v3858
        %6699 = vmatmul.mubr.bf16.gmra.mrb[0].mxu0 %v3857
        %v6700 = vpop.f32.mrb[0].mxu0
        %v6701 = vadd.f32 %v6412, %v6700
        %v6702 = vpop.f32.mrb[0].mxu0
        %v6703 = vpop.f32.mrb[0].mxu0
        %v6704 = vadd.f32 %v6415, %v6703
        %v6705 = vpop.f32.mrb[0].mxu0
        %6706 = vmatprep.mubr.bf16.mxu0 %v3874
        %6707 = vmatmul.mubr.bf16.gmra.mrb[0].mxu0 %v3873
        %v6708 = vpop.f32.mrb[0].mxu0
        %v6709 = vadd.f32 %v6420, %v6708
        %v6710 = vpop.f32.mrb[0].mxu0
        %v6711 = vpop.f32.mrb[0].mxu0
        %v6712 = vadd.f32 %v6423, %v6711
        %v6713 = vpop.f32.mrb[0].mxu0
        %6714 = vmatprep.mubr.bf16.mxu0 %v3890
        %6715 = vmatmul.mubr.bf16.gmra.mrb[0].mxu0 %v3889
        %v6716 = vpop.f32.mrb[0].mxu0
        %v6717 = vadd.f32 %v6428, %v6716
        %v6718 = vpop.f32.mrb[0].mxu0
        %v6719 = vpop.f32.mrb[0].mxu0
        %v6720 = vadd.f32 %v6431, %v6719
        %v6721 = vpop.f32.mrb[0].mxu0
        %6722 = vmatprep.mubr.bf16.mxu0 %v3906
        %6723 = vmatmul.mubr.bf16.gmra.mrb[0].mxu0 %v3905
        %v6724 = vpop.f32.mrb[0].mxu0
        %v6725 = vadd.f32 %v6436, %v6724
        %v6726 = vpop.f32.mrb[0].mxu0
        %v6727 = vpop.f32.mrb[0].mxu0
        %v6728 = vadd.f32 %v6439, %v6727
        %v6729 = vpop.f32.mrb[0].mxu0
        %6730 = vdwg.mxu0
        %vm6731 = vcmask 400384
        %6732 = vst.msk [vmem:[%s192] sm:$0xff] %vm6731, %v6477
        %6733 = vst.msk [vmem:[%s192 + $0x8] sm:$0xff] %vm6731, %v6480
        %6734 = vst.msk [vmem:[%s192 + $0x10] sm:$0xff] %vm6731, %v6485
        %6735 = vst.msk [vmem:[%s192 + $0x18] sm:$0xff] %vm6731, %v6488
        %6736 = vst.msk [vmem:[%s192 + $0x20] sm:$0xff] %vm6731, %v6493
        %6737 = vst.msk [vmem:[%s192 + $0x28] sm:$0xff] %vm6731, %v6496
        %6738 = vst.msk [vmem:[%s192 + $0x30] sm:$0xff] %vm6731, %v6501
        %6739 = vst.msk [vmem:[%s192 + $0x38] sm:$0xff] %vm6731, %v6504
        %6740 = vst.msk [vmem:[%s192 + $0x40] sm:$0xff] %vm6731, %v6509
        %6741 = vst.msk [vmem:[%s192 + $0x48] sm:$0xff] %vm6731, %v6512
        %6742 = vst.msk [vmem:[%s192 + $0x50] sm:$0xff] %vm6731, %v6517
        %6743 = vst.msk [vmem:[%s192 + $0x58] sm:$0xff] %vm6731, %v6520
        %6744 = vst.msk [vmem:[%s192 + $0x60] sm:$0xff] %vm6731, %v6525
        %6745 = vst.msk [vmem:[%s192 + $0x68] sm:$0xff] %vm6731, %v6528
        %6746 = vst.msk [vmem:[%s192 + $0x70] sm:$0xff] %vm6731, %v6533
        %6747 = vst.msk [vmem:[%s192 + $0x78] sm:$0xff] %vm6731, %v6536
        %6748 = vst.msk [vmem:[%s192 + $0x80] sm:$0xff] %vm6731, %v6541
        %6749 = vst.msk [vmem:[%s192 + $0x88] sm:$0xff] %vm6731, %v6544
        %6750 = vst.msk [vmem:[%s192 + $0x90] sm:$0xff] %vm6731, %v6549
        %6751 = vst.msk [vmem:[%s192 + $0x98] sm:$0xff] %vm6731, %v6552
        %6752 = vst.msk [vmem:[%s192 + $0xa0] sm:$0xff] %vm6731, %v6557
        %6753 = vst.msk [vmem:[%s192 + $0xa8] sm:$0xff] %vm6731, %v6560
        %6754 = vst.msk [vmem:[%s192 + $0xb0] sm:$0xff] %vm6731, %v6565
        %6755 = vst.msk [vmem:[%s192 + $0xb8] sm:$0xff] %vm6731, %v6568
        %6756 = vst.msk [vmem:[%s192 + $0xc0] sm:$0xff] %vm6731, %v6573
        %6757 = vst.msk [vmem:[%s192 + $0xc8] sm:$0xff] %vm6731, %v6576
        %6758 = vst.msk [vmem:[%s192 + $0xd0] sm:$0xff] %vm6731, %v6581
        %6759 = vst.msk [vmem:[%s192 + $0xd8] sm:$0xff] %vm6731, %v6584
        %6760 = vst.msk [vmem:[%s192 + $0xe0] sm:$0xff] %vm6731, %v6589
        %6761 = vst.msk [vmem:[%s192 + $0xe8] sm:$0xff] %vm6731, %v6592
        %6762 = vst.msk [vmem:[%s192 + $0xf0] sm:$0xff] %vm6731, %v6597
        %6763 = vst.msk [vmem:[%s192 + $0xf8] sm:$0xff] %vm6731, %v6600
        %6764 = vst.msk [vmem:[%s192 + $0x100] sm:$0xff] %vm6731, %v6605
        %6765 = vst.msk [vmem:[%s192 + $0x108] sm:$0xff] %vm6731, %v6608
        %6766 = vst.msk [vmem:[%s192 + $0x110] sm:$0xff] %vm6731, %v6613
        %6767 = vst.msk [vmem:[%s192 + $0x118] sm:$0xff] %vm6731, %v6616
        %6768 = vst.msk [vmem:[%s192 + $0x120] sm:$0xff] %vm6731, %v6621
        %6769 = vst.msk [vmem:[%s192 + $0x128] sm:$0xff] %vm6731, %v6624
        %6770 = vst.msk [vmem:[%s192 + $0x130] sm:$0xff] %vm6731, %v6629
        %6771 = vst.msk [vmem:[%s192 + $0x138] sm:$0xff] %vm6731, %v6632
        %6772 = vst.msk [vmem:[%s192 + $0x140] sm:$0xff] %vm6731, %v6637
        %6773 = vst.msk [vmem:[%s192 + $0x148] sm:$0xff] %vm6731, %v6640
        %6774 = vst.msk [vmem:[%s192 + $0x150] sm:$0xff] %vm6731, %v6645
        %6775 = vst.msk [vmem:[%s192 + $0x158] sm:$0xff] %vm6731, %v6648
        %6776 = vst.msk [vmem:[%s192 + $0x160] sm:$0xff] %vm6731, %v6653
        %6777 = vst.msk [vmem:[%s192 + $0x168] sm:$0xff] %vm6731, %v6656
        %6778 = vst.msk [vmem:[%s192 + $0x170] sm:$0xff] %vm6731, %v6661
        %6779 = vst.msk [vmem:[%s192 + $0x178] sm:$0xff] %vm6731, %v6664
        %6780 = vst.msk [vmem:[%s192 + $0x180] sm:$0xff] %vm6731, %v6669
        %6781 = vst.msk [vmem:[%s192 + $0x188] sm:$0xff] %vm6731, %v6672
        %6782 = vst.msk [vmem:[%s192 + $0x190] sm:$0xff] %vm6731, %v6677
        %6783 = vst.msk [vmem:[%s192 + $0x198] sm:$0xff] %vm6731, %v6680
        %6784 = vst.msk [vmem:[%s192 + $0x1a0] sm:$0xff] %vm6731, %v6685
        %6785 = vst.msk [vmem:[%s192 + $0x1a8] sm:$0xff] %vm6731, %v6688
        %6786 = vst.msk [vmem:[%s192 + $0x1b0] sm:$0xff] %vm6731, %v6693
        %6787 = vst.msk [vmem:[%s192 + $0x1b8] sm:$0xff] %vm6731, %v6696
        %6788 = vst.msk [vmem:[%s192 + $0x1c0] sm:$0xff] %vm6731, %v6701
        %6789 = vst.msk [vmem:[%s192 + $0x1c8] sm:$0xff] %vm6731, %v6704
        %6790 = vst.msk [vmem:[%s192 + $0x1d0] sm:$0xff] %vm6731, %v6709
        %6791 = vst.msk [vmem:[%s192 + $0x1d8] sm:$0xff] %vm6731, %v6712
        %6792 = vst.msk [vmem:[%s192 + $0x1e0] sm:$0xff] %vm6731, %v6717
        %6793 = vst.msk [vmem:[%s192 + $0x1e8] sm:$0xff] %vm6731, %v6720
        %6794 = vst.msk [vmem:[%s192 + $0x1f0] sm:$0xff] %vm6731, %v6725
        %6795 = vst.msk [vmem:[%s192 + $0x1f8] sm:$0xff] %vm6731, %v6728
        %s6796 = smul.u32 64, %s17
        %p6797 = scmp.lt.s32.totalorder %s6796, 255
        %s6798 = scalar_select %p6797, %s6796, 255
        %s6799 = smul.addr %s6798, 8
        %s6800 = scalar_lea.vmem %s3, %s6799
        // Predicated region
        $region37: #{tpu_custom_call.1} parent=31 // pred_check
          %p6801 = pneg %p103
        $region38: #{tpu_custom_call.1} parent=31 // pred_check_branch
          %6803 = sbr.rel (%p6801) target = $region40
        $region39: #{tpu_custom_call.1} parent=31 // pred_region
          %s6804 = smul.u32 64, %s17
        $region40: #{tpu_custom_call.1} parent=31 // pred_fallthru
          _
      $region32: #{tpu_custom_call.1} parent=5 // pred_fallthru
        _
      %p6805 = scmp.le.s32.totalorder 2, %s12
      // Predicated region
      $region41: #{tpu_custom_call.1} parent=5 // pred_check
        %p6806 = pneg %p6805
      $region42: #{tpu_custom_call.1} parent=5 // pred_check_branch
        %6808 = sbr.rel (%p6806) target = $region44
      $region43: #{tpu_custom_call.1} parent=5 // pred_region
        %s6809 = ssub.s32 %s12, 2
        // Predicated region
        $region45: #{tpu_custom_call.1} parent=43 // pred_check
          %p6810 = pneg %p109
        $region46: #{tpu_custom_call.1} parent=43 // pred_check_branch
          %6812 = sbr.rel (%p6810) target = $region48
        $region47: #{tpu_custom_call.1} parent=43 // pred_region
          %s6813 = smul.u32 64, %s18
          %p6814 = scmp.lt.s32.totalorder %s6813, 255
          %s6815 = scalar_select %p6814, %s6813, 255
          %s6816 = smul.addr %s6815, 8
          %s6817 = scalar_lea.vmem %s3, %s6816
        $region48: #{tpu_custom_call.1} parent=43 // pred_fallthru
          _
      $region44: #{tpu_custom_call.1} parent=5 // pred_fallthru
        _
    $region6: #{tpu_custom_call.1} parent=1 // loop_footer
      %s16 = sadd.s32 1, %s12
    $region7: #{tpu_custom_call.1} parent=1 // loop_footer_branch
      %11 = sbr.rel target = $region3
    $region8: #{tpu_custom_call.1} parent=1 // loop_exit
      _
    %6818 = vsyncpa [#allocation3], 1
    %s6819 = scalar_lea.sflag [#allocation3], 1
    %6820 = vsyncpa %s6819, 1

</llo_original>
